<compile_context>
chip_gen: v7x
topology: tpu7x:2x2x1
jax: 0.10.0
libtpu: 0.0.40
codegen_flags: <defaults>
</compile_context>

<pallas_src>
import functools

import jax
import jax.numpy as jnp
from jax import lax
from jax.experimental import pallas as pl
from jax.experimental.pallas import tpu as pltpu


NUM_BLOCKS = 6
OUT_PAD = 128  # lane-dense padding for the 2-wide final output


# ----------------------------- kernel ----------------------------------------


def _gelu(x):
    # Exact GELU (erf form), same as torch.nn.GELU(approximate='none').
    return 0.5 * x * (1.0 + lax.erf(x * 0.7071067811865476))


def fused_network_kernel(*refs, num_blocks):
    # refs = (x_ref,
    #         [w1sc, b1sc, ln_g, ln_b, w2f, b2f] * num_blocks,
    #         w_out_pad, b_out_pad,
    #         o_ref)
    x_ref = refs[0]
    o_ref = refs[-1]
    params = refs[1:-1]

    h = x_ref[...]
    idx = 0
    for _ in range(num_blocks):
        w1sc, b1sc, ln_g, ln_b, w2f, b2f = params[idx : idx + 6]
        idx += 6
        out_f = w2f.shape[1]

        # --- Linear(in, out) and shortcut Linear(in, out) fused in one GEMM ---
        cat = (
            jnp.dot(h, w1sc[...], preferred_element_type=jnp.float32)
            + b1sc[...]
        )
        y = cat[:, :out_f]
        sc = cat[:, out_f:]

        # --- LayerNorm (biased variance, eps=1e-5) + affine ---
        mu = jnp.mean(y, axis=-1, keepdims=True)
        var = jnp.mean(jnp.square(y - mu), axis=-1, keepdims=True)
        y = (y - mu) * lax.rsqrt(var + 1e-5)
        y = y * ln_g[...] + ln_b[...]

        # --- GELU -> Dropout(0.3) identity ---
        y = _gelu(y)

        # --- Linear(out, out) with BatchNorm1d(eval) pre-folded into w2f/b2f ---
        y = jnp.dot(y, w2f[...], preferred_element_type=jnp.float32) + b2f[...]

        # --- residual add + GELU ---
        h = _gelu(y + sc)

    # --- Dropout(0.4) identity -> final Linear(64, 2) padded to 128 lanes ---
    w_out, b_out = params[idx], params[idx + 1]
    o_ref[...] = (
        jnp.dot(h, w_out[...], preferred_element_type=jnp.float32) + b_out[...]
    )


# ----------------------------- wrapper ----------------------------------------

_VMEM_SPEC = pl.BlockSpec(memory_space=pltpu.MemorySpace.VMEM)


@jax.jit
def neural_network_forward(x, flat_params):
    batch = x.shape[0]
    n_in = 1 + len(flat_params)
    out_padded = pl.pallas_call(
        functools.partial(fused_network_kernel, num_blocks=NUM_BLOCKS),
        out_shape=jax.ShapeDtypeStruct((batch, OUT_PAD), jnp.float32),
        in_specs=[_VMEM_SPEC] * n_in,
        out_specs=_VMEM_SPEC,
        compiler_params=pltpu.CompilerParams(
            vmem_limit_bytes=32 * 1024 * 1024,  # ~4.5 MiB weights resident; safe on v7x
        ),
    )(x, *flat_params)
    return out_padded[:, :2]


# ----------------------------- parameter init / prep --------------------------


def _linear_init(key, in_f, out_f):
    # PyTorch nn.Linear default: U(-1/sqrt(in_f), 1/sqrt(in_f)) for W and b.
    kw, kb = jax.random.split(key)
    bound = 1.0 / jnp.sqrt(jnp.float32(in_f))
    w = jax.random.uniform(kw, (in_f, out_f), jnp.float32, -bound, bound)
    b = jax.random.uniform(kb, (1, out_f), jnp.float32, -bound, bound)
    return w, b


def init_residual_block(key, in_f, out_f):
    k1, k2, k3 = jax.random.split(key, 3)
    w1, b1 = _linear_init(k1, in_f, out_f)
    w2, b2 = _linear_init(k2, out_f, out_f)
    wsc, bsc = _linear_init(k3, in_f, out_f)
    ones = jnp.ones((1, out_f), jnp.float32)
    zeros = jnp.zeros((1, out_f), jnp.float32)
    return dict(
        w1=w1, b1=b1,
        ln_g=ones, ln_b=zeros,
        w2=w2, b2=b2,
        bn_g=ones, bn_b=zeros, bn_mean=zeros, bn_var=ones,
        wsc=wsc, bsc=bsc,
    )


def init_network(key, input_dim):
    dims = [input_dim, 128, 256, 512, 256, 128, 64]
    keys = jax.random.split(key, len(dims))
    blocks = [
        init_residual_block(keys[i], dims[i], dims[i + 1])
        for i in range(len(dims) - 1)
    ]
    w_out, b_out = _linear_init(keys[-1], 64, 2)
    return blocks, w_out, b_out


def prepare_params(blocks, w_out, b_out):
    """Fold BatchNorm into the second Linear, concat w1||wsc, pad final Linear."""
    flat = []
    for p in blocks:
        # BN (eval) fold: z = ((h@w2 + b2) - mean) * g*rsqrt(var+eps) + beta
        scale = p["bn_g"] * lax.rsqrt(p["bn_var"] + 1e-5)          # (1, out_f)
        w2f = p["w2"] * scale                                      # per-column scale
        b2f = (p["b2"] - p["bn_mean"]) * scale + p["bn_b"]
        # Shared-LHS fusion of main and shortcut Linears.
        w1sc = jnp.concatenate([p["w1"], p["wsc"]], axis=1)        # (in, 2*out)
        b1sc = jnp.concatenate([p["b1"], p["bsc"]], axis=1)        # (1, 2*out)
        flat += [w1sc, b1sc, p["ln_g"], p["ln_b"], w2f, b2f]

    # Pad (64, 2) -> (64, 128) so the final store is lane-dense; slice outside.
    out_f = w_out.shape[1]
    w_out_p = jnp.pad(w_out, ((0, 0), (0, OUT_PAD - out_f)))
    b_out_p = jnp.pad(b_out, ((0, 0), (0, OUT_PAD - out_f)))
    flat += [w_out_p, b_out_p]
    return flat


# ----------------------------- main -------------------------------------------

if __name__ == "__main__":
    key = jax.random.PRNGKey(0)
    k_params, k_x = jax.random.split(key)

    batch, input_dim = 8, 32
    x = jax.random.normal(k_x, (batch, input_dim), jnp.float32)

    blocks, w_out, b_out = init_network(k_params, input_dim)
    flat_params = prepare_params(blocks, w_out, b_out)

    out = neural_network_forward(x, flat_params)
    out = jax.block_until_ready(out)

    assert out.shape == (batch, 2), out.shape
    assert out.dtype == jnp.float32
    assert bool(jnp.all(jnp.isfinite(out)))
    print("KERNEL_OK")
</pallas_src>

<mosaic_0001>
module attributes {stable_mosaic.version = 11 : i64} {
  func.func @fused_network_kernel(%arg0: memref<8x32xf32, #tpu.memory_space<vmem>>, %arg1: memref<32x256xf32, #tpu.memory_space<vmem>>, %arg2: memref<1x256xf32, #tpu.memory_space<vmem>>, %arg3: memref<1x128xf32, #tpu.memory_space<vmem>>, %arg4: memref<1x128xf32, #tpu.memory_space<vmem>>, %arg5: memref<128x128xf32, #tpu.memory_space<vmem>>, %arg6: memref<1x128xf32, #tpu.memory_space<vmem>>, %arg7: memref<128x512xf32, #tpu.memory_space<vmem>>, %arg8: memref<1x512xf32, #tpu.memory_space<vmem>>, %arg9: memref<1x256xf32, #tpu.memory_space<vmem>>, %arg10: memref<1x256xf32, #tpu.memory_space<vmem>>, %arg11: memref<256x256xf32, #tpu.memory_space<vmem>>, %arg12: memref<1x256xf32, #tpu.memory_space<vmem>>, %arg13: memref<256x1024xf32, #tpu.memory_space<vmem>>, %arg14: memref<1x1024xf32, #tpu.memory_space<vmem>>, %arg15: memref<1x512xf32, #tpu.memory_space<vmem>>, %arg16: memref<1x512xf32, #tpu.memory_space<vmem>>, %arg17: memref<512x512xf32, #tpu.memory_space<vmem>>, %arg18: memref<1x512xf32, #tpu.memory_space<vmem>>, %arg19: memref<512x512xf32, #tpu.memory_space<vmem>>, %arg20: memref<1x512xf32, #tpu.memory_space<vmem>>, %arg21: memref<1x256xf32, #tpu.memory_space<vmem>>, %arg22: memref<1x256xf32, #tpu.memory_space<vmem>>, %arg23: memref<256x256xf32, #tpu.memory_space<vmem>>, %arg24: memref<1x256xf32, #tpu.memory_space<vmem>>, %arg25: memref<256x256xf32, #tpu.memory_space<vmem>>, %arg26: memref<1x256xf32, #tpu.memory_space<vmem>>, %arg27: memref<1x128xf32, #tpu.memory_space<vmem>>, %arg28: memref<1x128xf32, #tpu.memory_space<vmem>>, %arg29: memref<128x128xf32, #tpu.memory_space<vmem>>, %arg30: memref<1x128xf32, #tpu.memory_space<vmem>>, %arg31: memref<128x128xf32, #tpu.memory_space<vmem>>, %arg32: memref<1x128xf32, #tpu.memory_space<vmem>>, %arg33: memref<1x64xf32, #tpu.memory_space<vmem>>, %arg34: memref<1x64xf32, #tpu.memory_space<vmem>>, %arg35: memref<64x64xf32, #tpu.memory_space<vmem>>, %arg36: memref<1x64xf32, #tpu.memory_space<vmem>>, %arg37: memref<64x128xf32, #tpu.memory_space<vmem>>, %arg38: memref<1x128xf32, #tpu.memory_space<vmem>>, %arg39: memref<8x128xf32, #tpu.memory_space<vmem>>) attributes {dimension_semantics = [], scalar_prefetch = 0 : i64, scratch_operands = 0 : i64, tpu.core_type = #tpu.core_type<tc>} {
    %c0 = arith.constant 0 : index
    %c0_0 = arith.constant 0 : index
    %0 = vector.load %arg0[%c0, %c0_0] : memref<8x32xf32, #tpu.memory_space<vmem>>, vector<8x32xf32>
    %c0_1 = arith.constant 0 : index
    %c0_2 = arith.constant 0 : index
    %1 = vector.load %arg1[%c0_1, %c0_2] : memref<32x256xf32, #tpu.memory_space<vmem>>, vector<32x256xf32>
    %cst = arith.constant dense<0.000000e+00> : vector<8x256xf32>
    %2 = tpu.matmul %0, %1, %cst {dimension_numbers = #tpu.dot_dimension_numbers<[1], [0], [0], [1], [0, 0, 1, 1], [], []>} : vector<8x32xf32>, vector<32x256xf32>, vector<8x256xf32> -> vector<8x256xf32>
    %c0_3 = arith.constant 0 : index
    %c0_4 = arith.constant 0 : index
    %3 = vector.load %arg2[%c0_3, %c0_4] : memref<1x256xf32, #tpu.memory_space<vmem>>, vector<1x256xf32>
    %4 = vector.broadcast %3 : vector<1x256xf32> to vector<8x256xf32>
    %5 = arith.addf %2, %4 : vector<8x256xf32>
    %6 = vector.extract_strided_slice %5 {offsets = [0, 0], sizes = [8, 128], strides = [1, 1]} : vector<8x256xf32> to vector<8x128xf32>
    %7 = vector.extract_strided_slice %5 {offsets = [0, 128], sizes = [8, 128], strides = [1, 1]} : vector<8x256xf32> to vector<8x128xf32>
    %cst_5 = arith.constant dense<0.000000e+00> : vector<8xf32>
    %8 = vector.multi_reduction <add>, %6, %cst_5 [1] : vector<8x128xf32> to vector<8xf32>
    %9 = vector.shape_cast %8 : vector<8xf32> to vector<8x1xf32>
    %cst_6 = arith.constant 1.280000e+02 : f32
    %10 = vector.broadcast %cst_6 : f32 to vector<8x1xf32>
    %11 = arith.divf %9, %10 : vector<8x1xf32>
    %12 = vector.broadcast %11 : vector<8x1xf32> to vector<8x128xf32>
    %13 = arith.subf %6, %12 : vector<8x128xf32>
    %14 = arith.mulf %13, %13 : vector<8x128xf32>
    %cst_7 = arith.constant dense<0.000000e+00> : vector<8xf32>
    %15 = vector.multi_reduction <add>, %14, %cst_7 [1] : vector<8x128xf32> to vector<8xf32>
    %16 = vector.shape_cast %15 : vector<8xf32> to vector<8x1xf32>
    %cst_8 = arith.constant 1.280000e+02 : f32
    %17 = vector.broadcast %cst_8 : f32 to vector<8x1xf32>
    %18 = arith.divf %16, %17 : vector<8x1xf32>
    %19 = vector.broadcast %11 : vector<8x1xf32> to vector<8x128xf32>
    %20 = arith.subf %6, %19 : vector<8x128xf32>
    %cst_9 = arith.constant 9.99999974E-6 : f32
    %21 = vector.broadcast %cst_9 : f32 to vector<8x1xf32>
    %22 = arith.addf %18, %21 : vector<8x1xf32>
    %23 = math.rsqrt %22 : vector<8x1xf32>
    %24 = vector.broadcast %23 : vector<8x1xf32> to vector<8x128xf32>
    %25 = arith.mulf %20, %24 : vector<8x128xf32>
    %c0_10 = arith.constant 0 : index
    %c0_11 = arith.constant 0 : index
    %26 = vector.load %arg3[%c0_10, %c0_11] : memref<1x128xf32, #tpu.memory_space<vmem>>, vector<1x128xf32>
    %27 = vector.broadcast %26 : vector<1x128xf32> to vector<8x128xf32>
    %28 = arith.mulf %25, %27 : vector<8x128xf32>
    %c0_12 = arith.constant 0 : index
    %c0_13 = arith.constant 0 : index
    %29 = vector.load %arg4[%c0_12, %c0_13] : memref<1x128xf32, #tpu.memory_space<vmem>>, vector<1x128xf32>
    %30 = vector.broadcast %29 : vector<1x128xf32> to vector<8x128xf32>
    %31 = arith.addf %28, %30 : vector<8x128xf32>
    %cst_14 = arith.constant 5.000000e-01 : f32
    %32 = vector.broadcast %cst_14 : f32 to vector<8x128xf32>
    %33 = arith.mulf %32, %31 : vector<8x128xf32>
    %cst_15 = arith.constant 0.707106769 : f32
    %34 = vector.broadcast %cst_15 : f32 to vector<8x128xf32>
    %35 = arith.mulf %31, %34 : vector<8x128xf32>
    %36 = math.erf %35 : vector<8x128xf32>
    %cst_16 = arith.constant 1.000000e+00 : f32
    %37 = vector.broadcast %cst_16 : f32 to vector<8x128xf32>
    %38 = arith.addf %37, %36 : vector<8x128xf32>
    %39 = arith.mulf %33, %38 : vector<8x128xf32>
    %c0_17 = arith.constant 0 : index
    %c0_18 = arith.constant 0 : index
    %40 = vector.load %arg5[%c0_17, %c0_18] : memref<128x128xf32, #tpu.memory_space<vmem>>, vector<128x128xf32>
    %cst_19 = arith.constant dense<0.000000e+00> : vector<8x128xf32>
    %41 = tpu.matmul %39, %40, %cst_19 {dimension_numbers = #tpu.dot_dimension_numbers<[1], [0], [0], [1], [0, 0, 1, 1], [], []>} : vector<8x128xf32>, vector<128x128xf32>, vector<8x128xf32> -> vector<8x128xf32>
    %c0_20 = arith.constant 0 : index
    %c0_21 = arith.constant 0 : index
    %42 = vector.load %arg6[%c0_20, %c0_21] : memref<1x128xf32, #tpu.memory_space<vmem>>, vector<1x128xf32>
    %43 = vector.broadcast %42 : vector<1x128xf32> to vector<8x128xf32>
    %44 = arith.addf %41, %43 : vector<8x128xf32>
    %45 = arith.addf %44, %7 : vector<8x128xf32>
    %cst_22 = arith.constant 5.000000e-01 : f32
    %46 = vector.broadcast %cst_22 : f32 to vector<8x128xf32>
    %47 = arith.mulf %46, %45 : vector<8x128xf32>
    %cst_23 = arith.constant 0.707106769 : f32
    %48 = vector.broadcast %cst_23 : f32 to vector<8x128xf32>
    %49 = arith.mulf %45, %48 : vector<8x128xf32>
    %50 = math.erf %49 : vector<8x128xf32>
    %cst_24 = arith.constant 1.000000e+00 : f32
    %51 = vector.broadcast %cst_24 : f32 to vector<8x128xf32>
    %52 = arith.addf %51, %50 : vector<8x128xf32>
    %53 = arith.mulf %47, %52 : vector<8x128xf32>
    %c0_25 = arith.constant 0 : index
    %c0_26 = arith.constant 0 : index
    %54 = vector.load %arg7[%c0_25, %c0_26] : memref<128x512xf32, #tpu.memory_space<vmem>>, vector<128x512xf32>
    %cst_27 = arith.constant dense<0.000000e+00> : vector<8x512xf32>
    %55 = tpu.matmul %53, %54, %cst_27 {dimension_numbers = #tpu.dot_dimension_numbers<[1], [0], [0], [1], [0, 0, 1, 1], [], []>} : vector<8x128xf32>, vector<128x512xf32>, vector<8x512xf32> -> vector<8x512xf32>
    %c0_28 = arith.constant 0 : index
    %c0_29 = arith.constant 0 : index
    %56 = vector.load %arg8[%c0_28, %c0_29] : memref<1x512xf32, #tpu.memory_space<vmem>>, vector<1x512xf32>
    %57 = vector.broadcast %56 : vector<1x512xf32> to vector<8x512xf32>
    %58 = arith.addf %55, %57 : vector<8x512xf32>
    %59 = vector.extract_strided_slice %58 {offsets = [0, 0], sizes = [8, 256], strides = [1, 1]} : vector<8x512xf32> to vector<8x256xf32>
    %60 = vector.extract_strided_slice %58 {offsets = [0, 256], sizes = [8, 256], strides = [1, 1]} : vector<8x512xf32> to vector<8x256xf32>
    %cst_30 = arith.constant dense<0.000000e+00> : vector<8xf32>
    %61 = vector.multi_reduction <add>, %59, %cst_30 [1] : vector<8x256xf32> to vector<8xf32>
    %62 = vector.shape_cast %61 : vector<8xf32> to vector<8x1xf32>
    %cst_31 = arith.constant 2.560000e+02 : f32
    %63 = vector.broadcast %cst_31 : f32 to vector<8x1xf32>
    %64 = arith.divf %62, %63 : vector<8x1xf32>
    %65 = vector.broadcast %64 : vector<8x1xf32> to vector<8x256xf32>
    %66 = arith.subf %59, %65 : vector<8x256xf32>
    %67 = arith.mulf %66, %66 : vector<8x256xf32>
    %cst_32 = arith.constant dense<0.000000e+00> : vector<8xf32>
    %68 = vector.multi_reduction <add>, %67, %cst_32 [1] : vector<8x256xf32> to vector<8xf32>
    %69 = vector.shape_cast %68 : vector<8xf32> to vector<8x1xf32>
    %cst_33 = arith.constant 2.560000e+02 : f32
    %70 = vector.broadcast %cst_33 : f32 to vector<8x1xf32>
    %71 = arith.divf %69, %70 : vector<8x1xf32>
    %72 = vector.broadcast %64 : vector<8x1xf32> to vector<8x256xf32>
    %73 = arith.subf %59, %72 : vector<8x256xf32>
    %cst_34 = arith.constant 9.99999974E-6 : f32
    %74 = vector.broadcast %cst_34 : f32 to vector<8x1xf32>
    %75 = arith.addf %71, %74 : vector<8x1xf32>
    %76 = math.rsqrt %75 : vector<8x1xf32>
    %77 = vector.broadcast %76 : vector<8x1xf32> to vector<8x256xf32>
    %78 = arith.mulf %73, %77 : vector<8x256xf32>
    %c0_35 = arith.constant 0 : index
    %c0_36 = arith.constant 0 : index
    %79 = vector.load %arg9[%c0_35, %c0_36] : memref<1x256xf32, #tpu.memory_space<vmem>>, vector<1x256xf32>
    %80 = vector.broadcast %79 : vector<1x256xf32> to vector<8x256xf32>
    %81 = arith.mulf %78, %80 : vector<8x256xf32>
    %c0_37 = arith.constant 0 : index
    %c0_38 = arith.constant 0 : index
    %82 = vector.load %arg10[%c0_37, %c0_38] : memref<1x256xf32, #tpu.memory_space<vmem>>, vector<1x256xf32>
    %83 = vector.broadcast %82 : vector<1x256xf32> to vector<8x256xf32>
    %84 = arith.addf %81, %83 : vector<8x256xf32>
    %cst_39 = arith.constant 5.000000e-01 : f32
    %85 = vector.broadcast %cst_39 : f32 to vector<8x256xf32>
    %86 = arith.mulf %85, %84 : vector<8x256xf32>
    %cst_40 = arith.constant 0.707106769 : f32
    %87 = vector.broadcast %cst_40 : f32 to vector<8x256xf32>
    %88 = arith.mulf %84, %87 : vector<8x256xf32>
    %89 = math.erf %88 : vector<8x256xf32>
    %cst_41 = arith.constant 1.000000e+00 : f32
    %90 = vector.broadcast %cst_41 : f32 to vector<8x256xf32>
    %91 = arith.addf %90, %89 : vector<8x256xf32>
    %92 = arith.mulf %86, %91 : vector<8x256xf32>
    %c0_42 = arith.constant 0 : index
    %c0_43 = arith.constant 0 : index
    %93 = vector.load %arg11[%c0_42, %c0_43] : memref<256x256xf32, #tpu.memory_space<vmem>>, vector<256x256xf32>
    %cst_44 = arith.constant dense<0.000000e+00> : vector<8x256xf32>
    %94 = tpu.matmul %92, %93, %cst_44 {dimension_numbers = #tpu.dot_dimension_numbers<[1], [0], [0], [1], [0, 0, 1, 1], [], []>} : vector<8x256xf32>, vector<256x256xf32>, vector<8x256xf32> -> vector<8x256xf32>
    %c0_45 = arith.constant 0 : index
    %c0_46 = arith.constant 0 : index
    %95 = vector.load %arg12[%c0_45, %c0_46] : memref<1x256xf32, #tpu.memory_space<vmem>>, vector<1x256xf32>
    %96 = vector.broadcast %95 : vector<1x256xf32> to vector<8x256xf32>
    %97 = arith.addf %94, %96 : vector<8x256xf32>
    %98 = arith.addf %97, %60 : vector<8x256xf32>
    %cst_47 = arith.constant 5.000000e-01 : f32
    %99 = vector.broadcast %cst_47 : f32 to vector<8x256xf32>
    %100 = arith.mulf %99, %98 : vector<8x256xf32>
    %cst_48 = arith.constant 0.707106769 : f32
    %101 = vector.broadcast %cst_48 : f32 to vector<8x256xf32>
    %102 = arith.mulf %98, %101 : vector<8x256xf32>
    %103 = math.erf %102 : vector<8x256xf32>
    %cst_49 = arith.constant 1.000000e+00 : f32
    %104 = vector.broadcast %cst_49 : f32 to vector<8x256xf32>
    %105 = arith.addf %104, %103 : vector<8x256xf32>
    %106 = arith.mulf %100, %105 : vector<8x256xf32>
    %c0_50 = arith.constant 0 : index
    %c0_51 = arith.constant 0 : index
    %107 = vector.load %arg13[%c0_50, %c0_51] : memref<256x1024xf32, #tpu.memory_space<vmem>>, vector<256x1024xf32>
    %cst_52 = arith.constant dense<0.000000e+00> : vector<8x1024xf32>
    %108 = tpu.matmul %106, %107, %cst_52 {dimension_numbers = #tpu.dot_dimension_numbers<[1], [0], [0], [1], [0, 0, 1, 1], [], []>} : vector<8x256xf32>, vector<256x1024xf32>, vector<8x1024xf32> -> vector<8x1024xf32>
    %c0_53 = arith.constant 0 : index
    %c0_54 = arith.constant 0 : index
    %109 = vector.load %arg14[%c0_53, %c0_54] : memref<1x1024xf32, #tpu.memory_space<vmem>>, vector<1x1024xf32>
    %110 = vector.broadcast %109 : vector<1x1024xf32> to vector<8x1024xf32>
    %111 = arith.addf %108, %110 : vector<8x1024xf32>
    %112 = vector.extract_strided_slice %111 {offsets = [0, 0], sizes = [8, 512], strides = [1, 1]} : vector<8x1024xf32> to vector<8x512xf32>
    %113 = vector.extract_strided_slice %111 {offsets = [0, 512], sizes = [8, 512], strides = [1, 1]} : vector<8x1024xf32> to vector<8x512xf32>
    %cst_55 = arith.constant dense<0.000000e+00> : vector<8xf32>
    %114 = vector.multi_reduction <add>, %112, %cst_55 [1] : vector<8x512xf32> to vector<8xf32>
    %115 = vector.shape_cast %114 : vector<8xf32> to vector<8x1xf32>
    %cst_56 = arith.constant 5.120000e+02 : f32
    %116 = vector.broadcast %cst_56 : f32 to vector<8x1xf32>
    %117 = arith.divf %115, %116 : vector<8x1xf32>
    %118 = vector.broadcast %117 : vector<8x1xf32> to vector<8x512xf32>
    %119 = arith.subf %112, %118 : vector<8x512xf32>
    %120 = arith.mulf %119, %119 : vector<8x512xf32>
    %cst_57 = arith.constant dense<0.000000e+00> : vector<8xf32>
    %121 = vector.multi_reduction <add>, %120, %cst_57 [1] : vector<8x512xf32> to vector<8xf32>
    %122 = vector.shape_cast %121 : vector<8xf32> to vector<8x1xf32>
    %cst_58 = arith.constant 5.120000e+02 : f32
    %123 = vector.broadcast %cst_58 : f32 to vector<8x1xf32>
    %124 = arith.divf %122, %123 : vector<8x1xf32>
    %125 = vector.broadcast %117 : vector<8x1xf32> to vector<8x512xf32>
    %126 = arith.subf %112, %125 : vector<8x512xf32>
    %cst_59 = arith.constant 9.99999974E-6 : f32
    %127 = vector.broadcast %cst_59 : f32 to vector<8x1xf32>
    %128 = arith.addf %124, %127 : vector<8x1xf32>
    %129 = math.rsqrt %128 : vector<8x1xf32>
    %130 = vector.broadcast %129 : vector<8x1xf32> to vector<8x512xf32>
    %131 = arith.mulf %126, %130 : vector<8x512xf32>
    %c0_60 = arith.constant 0 : index
    %c0_61 = arith.constant 0 : index
    %132 = vector.load %arg15[%c0_60, %c0_61] : memref<1x512xf32, #tpu.memory_space<vmem>>, vector<1x512xf32>
    %133 = vector.broadcast %132 : vector<1x512xf32> to vector<8x512xf32>
    %134 = arith.mulf %131, %133 : vector<8x512xf32>
    %c0_62 = arith.constant 0 : index
    %c0_63 = arith.constant 0 : index
    %135 = vector.load %arg16[%c0_62, %c0_63] : memref<1x512xf32, #tpu.memory_space<vmem>>, vector<1x512xf32>
    %136 = vector.broadcast %135 : vector<1x512xf32> to vector<8x512xf32>
    %137 = arith.addf %134, %136 : vector<8x512xf32>
    %cst_64 = arith.constant 5.000000e-01 : f32
    %138 = vector.broadcast %cst_64 : f32 to vector<8x512xf32>
    %139 = arith.mulf %138, %137 : vector<8x512xf32>
    %cst_65 = arith.constant 0.707106769 : f32
    %140 = vector.broadcast %cst_65 : f32 to vector<8x512xf32>
    %141 = arith.mulf %137, %140 : vector<8x512xf32>
    %142 = math.erf %141 : vector<8x512xf32>
    %cst_66 = arith.constant 1.000000e+00 : f32
    %143 = vector.broadcast %cst_66 : f32 to vector<8x512xf32>
    %144 = arith.addf %143, %142 : vector<8x512xf32>
    %145 = arith.mulf %139, %144 : vector<8x512xf32>
    %c0_67 = arith.constant 0 : index
    %c0_68 = arith.constant 0 : index
    %146 = vector.load %arg17[%c0_67, %c0_68] : memref<512x512xf32, #tpu.memory_space<vmem>>, vector<512x512xf32>
    %cst_69 = arith.constant dense<0.000000e+00> : vector<8x512xf32>
    %147 = tpu.matmul %145, %146, %cst_69 {dimension_numbers = #tpu.dot_dimension_numbers<[1], [0], [0], [1], [0, 0, 1, 1], [], []>} : vector<8x512xf32>, vector<512x512xf32>, vector<8x512xf32> -> vector<8x512xf32>
    %c0_70 = arith.constant 0 : index
    %c0_71 = arith.constant 0 : index
    %148 = vector.load %arg18[%c0_70, %c0_71] : memref<1x512xf32, #tpu.memory_space<vmem>>, vector<1x512xf32>
    %149 = vector.broadcast %148 : vector<1x512xf32> to vector<8x512xf32>
    %150 = arith.addf %147, %149 : vector<8x512xf32>
    %151 = arith.addf %150, %113 : vector<8x512xf32>
    %cst_72 = arith.constant 5.000000e-01 : f32
    %152 = vector.broadcast %cst_72 : f32 to vector<8x512xf32>
    %153 = arith.mulf %152, %151 : vector<8x512xf32>
    %cst_73 = arith.constant 0.707106769 : f32
    %154 = vector.broadcast %cst_73 : f32 to vector<8x512xf32>
    %155 = arith.mulf %151, %154 : vector<8x512xf32>
    %156 = math.erf %155 : vector<8x512xf32>
    %cst_74 = arith.constant 1.000000e+00 : f32
    %157 = vector.broadcast %cst_74 : f32 to vector<8x512xf32>
    %158 = arith.addf %157, %156 : vector<8x512xf32>
    %159 = arith.mulf %153, %158 : vector<8x512xf32>
    %c0_75 = arith.constant 0 : index
    %c0_76 = arith.constant 0 : index
    %160 = vector.load %arg19[%c0_75, %c0_76] : memref<512x512xf32, #tpu.memory_space<vmem>>, vector<512x512xf32>
    %cst_77 = arith.constant dense<0.000000e+00> : vector<8x512xf32>
    %161 = tpu.matmul %159, %160, %cst_77 {dimension_numbers = #tpu.dot_dimension_numbers<[1], [0], [0], [1], [0, 0, 1, 1], [], []>} : vector<8x512xf32>, vector<512x512xf32>, vector<8x512xf32> -> vector<8x512xf32>
    %c0_78 = arith.constant 0 : index
    %c0_79 = arith.constant 0 : index
    %162 = vector.load %arg20[%c0_78, %c0_79] : memref<1x512xf32, #tpu.memory_space<vmem>>, vector<1x512xf32>
    %163 = vector.broadcast %162 : vector<1x512xf32> to vector<8x512xf32>
    %164 = arith.addf %161, %163 : vector<8x512xf32>
    %165 = vector.extract_strided_slice %164 {offsets = [0, 0], sizes = [8, 256], strides = [1, 1]} : vector<8x512xf32> to vector<8x256xf32>
    %166 = vector.extract_strided_slice %164 {offsets = [0, 256], sizes = [8, 256], strides = [1, 1]} : vector<8x512xf32> to vector<8x256xf32>
    %cst_80 = arith.constant dense<0.000000e+00> : vector<8xf32>
    %167 = vector.multi_reduction <add>, %165, %cst_80 [1] : vector<8x256xf32> to vector<8xf32>
    %168 = vector.shape_cast %167 : vector<8xf32> to vector<8x1xf32>
    %cst_81 = arith.constant 2.560000e+02 : f32
    %169 = vector.broadcast %cst_81 : f32 to vector<8x1xf32>
    %170 = arith.divf %168, %169 : vector<8x1xf32>
    %171 = vector.broadcast %170 : vector<8x1xf32> to vector<8x256xf32>
    %172 = arith.subf %165, %171 : vector<8x256xf32>
    %173 = arith.mulf %172, %172 : vector<8x256xf32>
    %cst_82 = arith.constant dense<0.000000e+00> : vector<8xf32>
    %174 = vector.multi_reduction <add>, %173, %cst_82 [1] : vector<8x256xf32> to vector<8xf32>
    %175 = vector.shape_cast %174 : vector<8xf32> to vector<8x1xf32>
    %cst_83 = arith.constant 2.560000e+02 : f32
    %176 = vector.broadcast %cst_83 : f32 to vector<8x1xf32>
    %177 = arith.divf %175, %176 : vector<8x1xf32>
    %178 = vector.broadcast %170 : vector<8x1xf32> to vector<8x256xf32>
    %179 = arith.subf %165, %178 : vector<8x256xf32>
    %cst_84 = arith.constant 9.99999974E-6 : f32
    %180 = vector.broadcast %cst_84 : f32 to vector<8x1xf32>
    %181 = arith.addf %177, %180 : vector<8x1xf32>
    %182 = math.rsqrt %181 : vector<8x1xf32>
    %183 = vector.broadcast %182 : vector<8x1xf32> to vector<8x256xf32>
    %184 = arith.mulf %179, %183 : vector<8x256xf32>
    %c0_85 = arith.constant 0 : index
    %c0_86 = arith.constant 0 : index
    %185 = vector.load %arg21[%c0_85, %c0_86] : memref<1x256xf32, #tpu.memory_space<vmem>>, vector<1x256xf32>
    %186 = vector.broadcast %185 : vector<1x256xf32> to vector<8x256xf32>
    %187 = arith.mulf %184, %186 : vector<8x256xf32>
    %c0_87 = arith.constant 0 : index
    %c0_88 = arith.constant 0 : index
    %188 = vector.load %arg22[%c0_87, %c0_88] : memref<1x256xf32, #tpu.memory_space<vmem>>, vector<1x256xf32>
    %189 = vector.broadcast %188 : vector<1x256xf32> to vector<8x256xf32>
    %190 = arith.addf %187, %189 : vector<8x256xf32>
    %cst_89 = arith.constant 5.000000e-01 : f32
    %191 = vector.broadcast %cst_89 : f32 to vector<8x256xf32>
    %192 = arith.mulf %191, %190 : vector<8x256xf32>
    %cst_90 = arith.constant 0.707106769 : f32
    %193 = vector.broadcast %cst_90 : f32 to vector<8x256xf32>
    %194 = arith.mulf %190, %193 : vector<8x256xf32>
    %195 = math.erf %194 : vector<8x256xf32>
    %cst_91 = arith.constant 1.000000e+00 : f32
    %196 = vector.broadcast %cst_91 : f32 to vector<8x256xf32>
    %197 = arith.addf %196, %195 : vector<8x256xf32>
    %198 = arith.mulf %192, %197 : vector<8x256xf32>
    %c0_92 = arith.constant 0 : index
    %c0_93 = arith.constant 0 : index
    %199 = vector.load %arg23[%c0_92, %c0_93] : memref<256x256xf32, #tpu.memory_space<vmem>>, vector<256x256xf32>
    %cst_94 = arith.constant dense<0.000000e+00> : vector<8x256xf32>
    %200 = tpu.matmul %198, %199, %cst_94 {dimension_numbers = #tpu.dot_dimension_numbers<[1], [0], [0], [1], [0, 0, 1, 1], [], []>} : vector<8x256xf32>, vector<256x256xf32>, vector<8x256xf32> -> vector<8x256xf32>
    %c0_95 = arith.constant 0 : index
    %c0_96 = arith.constant 0 : index
    %201 = vector.load %arg24[%c0_95, %c0_96] : memref<1x256xf32, #tpu.memory_space<vmem>>, vector<1x256xf32>
    %202 = vector.broadcast %201 : vector<1x256xf32> to vector<8x256xf32>
    %203 = arith.addf %200, %202 : vector<8x256xf32>
    %204 = arith.addf %203, %166 : vector<8x256xf32>
    %cst_97 = arith.constant 5.000000e-01 : f32
    %205 = vector.broadcast %cst_97 : f32 to vector<8x256xf32>
    %206 = arith.mulf %205, %204 : vector<8x256xf32>
    %cst_98 = arith.constant 0.707106769 : f32
    %207 = vector.broadcast %cst_98 : f32 to vector<8x256xf32>
    %208 = arith.mulf %204, %207 : vector<8x256xf32>
    %209 = math.erf %208 : vector<8x256xf32>
    %cst_99 = arith.constant 1.000000e+00 : f32
    %210 = vector.broadcast %cst_99 : f32 to vector<8x256xf32>
    %211 = arith.addf %210, %209 : vector<8x256xf32>
    %212 = arith.mulf %206, %211 : vector<8x256xf32>
    %c0_100 = arith.constant 0 : index
    %c0_101 = arith.constant 0 : index
    %213 = vector.load %arg25[%c0_100, %c0_101] : memref<256x256xf32, #tpu.memory_space<vmem>>, vector<256x256xf32>
    %cst_102 = arith.constant dense<0.000000e+00> : vector<8x256xf32>
    %214 = tpu.matmul %212, %213, %cst_102 {dimension_numbers = #tpu.dot_dimension_numbers<[1], [0], [0], [1], [0, 0, 1, 1], [], []>} : vector<8x256xf32>, vector<256x256xf32>, vector<8x256xf32> -> vector<8x256xf32>
    %c0_103 = arith.constant 0 : index
    %c0_104 = arith.constant 0 : index
    %215 = vector.load %arg26[%c0_103, %c0_104] : memref<1x256xf32, #tpu.memory_space<vmem>>, vector<1x256xf32>
    %216 = vector.broadcast %215 : vector<1x256xf32> to vector<8x256xf32>
    %217 = arith.addf %214, %216 : vector<8x256xf32>
    %218 = vector.extract_strided_slice %217 {offsets = [0, 0], sizes = [8, 128], strides = [1, 1]} : vector<8x256xf32> to vector<8x128xf32>
    %219 = vector.extract_strided_slice %217 {offsets = [0, 128], sizes = [8, 128], strides = [1, 1]} : vector<8x256xf32> to vector<8x128xf32>
    %cst_105 = arith.constant dense<0.000000e+00> : vector<8xf32>
    %220 = vector.multi_reduction <add>, %218, %cst_105 [1] : vector<8x128xf32> to vector<8xf32>
    %221 = vector.shape_cast %220 : vector<8xf32> to vector<8x1xf32>
    %cst_106 = arith.constant 1.280000e+02 : f32
    %222 = vector.broadcast %cst_106 : f32 to vector<8x1xf32>
    %223 = arith.divf %221, %222 : vector<8x1xf32>
    %224 = vector.broadcast %223 : vector<8x1xf32> to vector<8x128xf32>
    %225 = arith.subf %218, %224 : vector<8x128xf32>
    %226 = arith.mulf %225, %225 : vector<8x128xf32>
    %cst_107 = arith.constant dense<0.000000e+00> : vector<8xf32>
    %227 = vector.multi_reduction <add>, %226, %cst_107 [1] : vector<8x128xf32> to vector<8xf32>
    %228 = vector.shape_cast %227 : vector<8xf32> to vector<8x1xf32>
    %cst_108 = arith.constant 1.280000e+02 : f32
    %229 = vector.broadcast %cst_108 : f32 to vector<8x1xf32>
    %230 = arith.divf %228, %229 : vector<8x1xf32>
    %231 = vector.broadcast %223 : vector<8x1xf32> to vector<8x128xf32>
    %232 = arith.subf %218, %231 : vector<8x128xf32>
    %cst_109 = arith.constant 9.99999974E-6 : f32
    %233 = vector.broadcast %cst_109 : f32 to vector<8x1xf32>
    %234 = arith.addf %230, %233 : vector<8x1xf32>
    %235 = math.rsqrt %234 : vector<8x1xf32>
    %236 = vector.broadcast %235 : vector<8x1xf32> to vector<8x128xf32>
    %237 = arith.mulf %232, %236 : vector<8x128xf32>
    %c0_110 = arith.constant 0 : index
    %c0_111 = arith.constant 0 : index
    %238 = vector.load %arg27[%c0_110, %c0_111] : memref<1x128xf32, #tpu.memory_space<vmem>>, vector<1x128xf32>
    %239 = vector.broadcast %238 : vector<1x128xf32> to vector<8x128xf32>
    %240 = arith.mulf %237, %239 : vector<8x128xf32>
    %c0_112 = arith.constant 0 : index
    %c0_113 = arith.constant 0 : index
    %241 = vector.load %arg28[%c0_112, %c0_113] : memref<1x128xf32, #tpu.memory_space<vmem>>, vector<1x128xf32>
    %242 = vector.broadcast %241 : vector<1x128xf32> to vector<8x128xf32>
    %243 = arith.addf %240, %242 : vector<8x128xf32>
    %cst_114 = arith.constant 5.000000e-01 : f32
    %244 = vector.broadcast %cst_114 : f32 to vector<8x128xf32>
    %245 = arith.mulf %244, %243 : vector<8x128xf32>
    %cst_115 = arith.constant 0.707106769 : f32
    %246 = vector.broadcast %cst_115 : f32 to vector<8x128xf32>
    %247 = arith.mulf %243, %246 : vector<8x128xf32>
    %248 = math.erf %247 : vector<8x128xf32>
    %cst_116 = arith.constant 1.000000e+00 : f32
    %249 = vector.broadcast %cst_116 : f32 to vector<8x128xf32>
    %250 = arith.addf %249, %248 : vector<8x128xf32>
    %251 = arith.mulf %245, %250 : vector<8x128xf32>
    %c0_117 = arith.constant 0 : index
    %c0_118 = arith.constant 0 : index
    %252 = vector.load %arg29[%c0_117, %c0_118] : memref<128x128xf32, #tpu.memory_space<vmem>>, vector<128x128xf32>
    %cst_119 = arith.constant dense<0.000000e+00> : vector<8x128xf32>
    %253 = tpu.matmul %251, %252, %cst_119 {dimension_numbers = #tpu.dot_dimension_numbers<[1], [0], [0], [1], [0, 0, 1, 1], [], []>} : vector<8x128xf32>, vector<128x128xf32>, vector<8x128xf32> -> vector<8x128xf32>
    %c0_120 = arith.constant 0 : index
    %c0_121 = arith.constant 0 : index
    %254 = vector.load %arg30[%c0_120, %c0_121] : memref<1x128xf32, #tpu.memory_space<vmem>>, vector<1x128xf32>
    %255 = vector.broadcast %254 : vector<1x128xf32> to vector<8x128xf32>
    %256 = arith.addf %253, %255 : vector<8x128xf32>
    %257 = arith.addf %256, %219 : vector<8x128xf32>
    %cst_122 = arith.constant 5.000000e-01 : f32
    %258 = vector.broadcast %cst_122 : f32 to vector<8x128xf32>
    %259 = arith.mulf %258, %257 : vector<8x128xf32>
    %cst_123 = arith.constant 0.707106769 : f32
    %260 = vector.broadcast %cst_123 : f32 to vector<8x128xf32>
    %261 = arith.mulf %257, %260 : vector<8x128xf32>
    %262 = math.erf %261 : vector<8x128xf32>
    %cst_124 = arith.constant 1.000000e+00 : f32
    %263 = vector.broadcast %cst_124 : f32 to vector<8x128xf32>
    %264 = arith.addf %263, %262 : vector<8x128xf32>
    %265 = arith.mulf %259, %264 : vector<8x128xf32>
    %c0_125 = arith.constant 0 : index
    %c0_126 = arith.constant 0 : index
    %266 = vector.load %arg31[%c0_125, %c0_126] : memref<128x128xf32, #tpu.memory_space<vmem>>, vector<128x128xf32>
    %cst_127 = arith.constant dense<0.000000e+00> : vector<8x128xf32>
    %267 = tpu.matmul %265, %266, %cst_127 {dimension_numbers = #tpu.dot_dimension_numbers<[1], [0], [0], [1], [0, 0, 1, 1], [], []>} : vector<8x128xf32>, vector<128x128xf32>, vector<8x128xf32> -> vector<8x128xf32>
    %c0_128 = arith.constant 0 : index
    %c0_129 = arith.constant 0 : index
    %268 = vector.load %arg32[%c0_128, %c0_129] : memref<1x128xf32, #tpu.memory_space<vmem>>, vector<1x128xf32>
    %269 = vector.broadcast %268 : vector<1x128xf32> to vector<8x128xf32>
    %270 = arith.addf %267, %269 : vector<8x128xf32>
    %271 = vector.extract_strided_slice %270 {offsets = [0, 0], sizes = [8, 64], strides = [1, 1]} : vector<8x128xf32> to vector<8x64xf32>
    %272 = vector.extract_strided_slice %270 {offsets = [0, 64], sizes = [8, 64], strides = [1, 1]} : vector<8x128xf32> to vector<8x64xf32>
    %cst_130 = arith.constant dense<0.000000e+00> : vector<8xf32>
    %273 = vector.multi_reduction <add>, %271, %cst_130 [1] : vector<8x64xf32> to vector<8xf32>
    %274 = vector.shape_cast %273 : vector<8xf32> to vector<8x1xf32>
    %cst_131 = arith.constant 6.400000e+01 : f32
    %275 = vector.broadcast %cst_131 : f32 to vector<8x1xf32>
    %276 = arith.divf %274, %275 : vector<8x1xf32>
    %277 = vector.broadcast %276 : vector<8x1xf32> to vector<8x64xf32>
    %278 = arith.subf %271, %277 : vector<8x64xf32>
    %279 = arith.mulf %278, %278 : vector<8x64xf32>
    %cst_132 = arith.constant dense<0.000000e+00> : vector<8xf32>
    %280 = vector.multi_reduction <add>, %279, %cst_132 [1] : vector<8x64xf32> to vector<8xf32>
    %281 = vector.shape_cast %280 : vector<8xf32> to vector<8x1xf32>
    %cst_133 = arith.constant 6.400000e+01 : f32
    %282 = vector.broadcast %cst_133 : f32 to vector<8x1xf32>
    %283 = arith.divf %281, %282 : vector<8x1xf32>
    %284 = vector.broadcast %276 : vector<8x1xf32> to vector<8x64xf32>
    %285 = arith.subf %271, %284 : vector<8x64xf32>
    %cst_134 = arith.constant 9.99999974E-6 : f32
    %286 = vector.broadcast %cst_134 : f32 to vector<8x1xf32>
    %287 = arith.addf %283, %286 : vector<8x1xf32>
    %288 = math.rsqrt %287 : vector<8x1xf32>
    %289 = vector.broadcast %288 : vector<8x1xf32> to vector<8x64xf32>
    %290 = arith.mulf %285, %289 : vector<8x64xf32>
    %c0_135 = arith.constant 0 : index
    %c0_136 = arith.constant 0 : index
    %291 = vector.load %arg33[%c0_135, %c0_136] : memref<1x64xf32, #tpu.memory_space<vmem>>, vector<1x64xf32>
    %292 = vector.broadcast %291 : vector<1x64xf32> to vector<8x64xf32>
    %293 = arith.mulf %290, %292 : vector<8x64xf32>
    %c0_137 = arith.constant 0 : index
    %c0_138 = arith.constant 0 : index
    %294 = vector.load %arg34[%c0_137, %c0_138] : memref<1x64xf32, #tpu.memory_space<vmem>>, vector<1x64xf32>
    %295 = vector.broadcast %294 : vector<1x64xf32> to vector<8x64xf32>
    %296 = arith.addf %293, %295 : vector<8x64xf32>
    %cst_139 = arith.constant 5.000000e-01 : f32
    %297 = vector.broadcast %cst_139 : f32 to vector<8x64xf32>
    %298 = arith.mulf %297, %296 : vector<8x64xf32>
    %cst_140 = arith.constant 0.707106769 : f32
    %299 = vector.broadcast %cst_140 : f32 to vector<8x64xf32>
    %300 = arith.mulf %296, %299 : vector<8x64xf32>
    %301 = math.erf %300 : vector<8x64xf32>
    %cst_141 = arith.constant 1.000000e+00 : f32
    %302 = vector.broadcast %cst_141 : f32 to vector<8x64xf32>
    %303 = arith.addf %302, %301 : vector<8x64xf32>
    %304 = arith.mulf %298, %303 : vector<8x64xf32>
    %c0_142 = arith.constant 0 : index
    %c0_143 = arith.constant 0 : index
    %305 = vector.load %arg35[%c0_142, %c0_143] : memref<64x64xf32, #tpu.memory_space<vmem>>, vector<64x64xf32>
    %cst_144 = arith.constant dense<0.000000e+00> : vector<8x64xf32>
    %306 = tpu.matmul %304, %305, %cst_144 {dimension_numbers = #tpu.dot_dimension_numbers<[1], [0], [0], [1], [0, 0, 1, 1], [], []>} : vector<8x64xf32>, vector<64x64xf32>, vector<8x64xf32> -> vector<8x64xf32>
    %c0_145 = arith.constant 0 : index
    %c0_146 = arith.constant 0 : index
    %307 = vector.load %arg36[%c0_145, %c0_146] : memref<1x64xf32, #tpu.memory_space<vmem>>, vector<1x64xf32>
    %308 = vector.broadcast %307 : vector<1x64xf32> to vector<8x64xf32>
    %309 = arith.addf %306, %308 : vector<8x64xf32>
    %310 = arith.addf %309, %272 : vector<8x64xf32>
    %cst_147 = arith.constant 5.000000e-01 : f32
    %311 = vector.broadcast %cst_147 : f32 to vector<8x64xf32>
    %312 = arith.mulf %311, %310 : vector<8x64xf32>
    %cst_148 = arith.constant 0.707106769 : f32
    %313 = vector.broadcast %cst_148 : f32 to vector<8x64xf32>
    %314 = arith.mulf %310, %313 : vector<8x64xf32>
    %315 = math.erf %314 : vector<8x64xf32>
    %cst_149 = arith.constant 1.000000e+00 : f32
    %316 = vector.broadcast %cst_149 : f32 to vector<8x64xf32>
    %317 = arith.addf %316, %315 : vector<8x64xf32>
    %318 = arith.mulf %312, %317 : vector<8x64xf32>
    %c0_150 = arith.constant 0 : index
    %c0_151 = arith.constant 0 : index
    %319 = vector.load %arg37[%c0_150, %c0_151] : memref<64x128xf32, #tpu.memory_space<vmem>>, vector<64x128xf32>
    %cst_152 = arith.constant dense<0.000000e+00> : vector<8x128xf32>
    %320 = tpu.matmul %318, %319, %cst_152 {dimension_numbers = #tpu.dot_dimension_numbers<[1], [0], [0], [1], [0, 0, 1, 1], [], []>} : vector<8x64xf32>, vector<64x128xf32>, vector<8x128xf32> -> vector<8x128xf32>
    %c0_153 = arith.constant 0 : index
    %c0_154 = arith.constant 0 : index
    %321 = vector.load %arg38[%c0_153, %c0_154] : memref<1x128xf32, #tpu.memory_space<vmem>>, vector<1x128xf32>
    %322 = vector.broadcast %321 : vector<1x128xf32> to vector<8x128xf32>
    %323 = arith.addf %320, %322 : vector<8x128xf32>
    %c0_155 = arith.constant 0 : index
    %c0_156 = arith.constant 0 : index
    %324 = vector.load %arg39[%c0_155, %c0_156] : memref<8x128xf32, #tpu.memory_space<vmem>>, vector<8x128xf32>
    tpu.vector_store %arg39[%c0_155, %c0_156], %323 {strides = array<i32>} : memref<8x128xf32, #tpu.memory_space<vmem>>, vector<8x128xf32>,
    return
  }
}

</mosaic_0001>

<llo_original>
// kernel: neural_network_forward.1
$region0: #{neural_network_forward.1}
  #allocation0 [shape = 'u32[]', space=smem, size = 0x4, offset = 0x4, fixed_abs, tag = 'smem constant byte address 0x4 - core index']
  #allocation1 [shape = 'u32[144,128]{1,0:T(1,128)}', space=vmem, size = 0x12000, scoped, tag = 'internal scratch']
  %s0 = inlined_call_operand.smem [shape: u32[40], index: -1, kind: input, shape index: {}]
  %s1 = sld [smem:[%s0]]
  %s2 = scalar_lea.smem %s0, 1
  %s3 = sld [smem:[%s2]]
  %s4 = scalar_lea.smem %s0, 2
  %s5 = sld [smem:[%s4]]
  %s6 = scalar_lea.smem %s0, 3
  %s7 = sld [smem:[%s6]]
  %s8 = scalar_lea.smem %s0, 4
  %s9 = sld [smem:[%s8]]
  %s10 = scalar_lea.smem %s0, 5
  %s11 = sld [smem:[%s10]]
  %s12 = scalar_lea.smem %s0, 6
  %s13 = sld [smem:[%s12]]
  %s14 = scalar_lea.smem %s0, 7
  %s15 = sld [smem:[%s14]]
  %s16 = scalar_lea.smem %s0, 8
  %s17 = sld [smem:[%s16]]
  %s18 = scalar_lea.smem %s0, 9
  %s19 = sld [smem:[%s18]]
  %s20 = scalar_lea.smem %s0, 10
  %s21 = sld [smem:[%s20]]
  %s22 = scalar_lea.smem %s0, 11
  %s23 = sld [smem:[%s22]]
  %s24 = scalar_lea.smem %s0, 12
  %s25 = sld [smem:[%s24]]
  %s26 = scalar_lea.smem %s0, 13
  %s27 = sld [smem:[%s26]]
  %s28 = scalar_lea.smem %s0, 14
  %s29 = sld [smem:[%s28]]
  %s30 = scalar_lea.smem %s0, 15
  %s31 = sld [smem:[%s30]]
  %s32 = scalar_lea.smem %s0, 16
  %s33 = sld [smem:[%s32]]
  %s34 = scalar_lea.smem %s0, 17
  %s35 = sld [smem:[%s34]]
  %s36 = scalar_lea.smem %s0, 18
  %s37 = sld [smem:[%s36]]
  %s38 = scalar_lea.smem %s0, 19
  %s39 = sld [smem:[%s38]]
  %s40 = scalar_lea.smem %s0, 20
  %s41 = sld [smem:[%s40]]
  %s42 = scalar_lea.smem %s0, 21
  %s43 = sld [smem:[%s42]]
  %s44 = scalar_lea.smem %s0, 22
  %s45 = sld [smem:[%s44]]
  %s46 = scalar_lea.smem %s0, 23
  %s47 = sld [smem:[%s46]]
  %s48 = scalar_lea.smem %s0, 24
  %s49 = sld [smem:[%s48]]
  %s50 = scalar_lea.smem %s0, 25
  %s51 = sld [smem:[%s50]]
  %s52 = scalar_lea.smem %s0, 26
  %s53 = sld [smem:[%s52]]
  %s54 = scalar_lea.smem %s0, 27
  %s55 = sld [smem:[%s54]]
  %s56 = scalar_lea.smem %s0, 28
  %s57 = sld [smem:[%s56]]
  %s58 = scalar_lea.smem %s0, 29
  %s59 = sld [smem:[%s58]]
  %s60 = scalar_lea.smem %s0, 30
  %s61 = sld [smem:[%s60]]
  %s62 = scalar_lea.smem %s0, 31
  %s63 = sld [smem:[%s62]]
  %s64 = scalar_lea.smem %s0, 32
  %s65 = sld [smem:[%s64]]
  %s66 = scalar_lea.smem %s0, 33
  %s67 = sld [smem:[%s66]]
  %s68 = scalar_lea.smem %s0, 34
  %s69 = sld [smem:[%s68]]
  %s70 = scalar_lea.smem %s0, 35
  %s71 = sld [smem:[%s70]]
  %s72 = scalar_lea.smem %s0, 36
  %s73 = sld [smem:[%s72]]
  %s74 = scalar_lea.smem %s0, 37
  %s75 = sld [smem:[%s74]]
  %s76 = scalar_lea.smem %s0, 38
  %s77 = sld [smem:[%s76]]
  %s78 = scalar_lea.smem %s0, 39
  %s79 = sld [smem:[%s78]]
  %s80 = sld [smem:[#allocation0]]
  $region306: #{neural_network_forward.1} parent=0
    _
  %s82 = ssub.s32 1, %s80
  %s83 = scalar_select 0, %s82, %s80
  $region1: #{neural_network_forward.1} parent=0
    #allocation2 [shape = 'u8[4096]{0}', space=vmem, size = 0x1000, scoped, tag = 'input window, operand 0, single buffered']
    #allocation3 [shape = 's32[1]{0}', space=sflag, size = 0x4, scoped, tag = 'scoped memory for neural_network_forward.1']
    #allocation4 [shape = 'u8[32768]{0}', space=vmem, size = 0x8000, scoped, tag = 'input window, operand 1, single buffered']
    #allocation5 [shape = 's32[1]{0}', space=sflag, size = 0x4, scoped, tag = 'scoped memory for neural_network_forward.1']
    #allocation6 [shape = 'u8[1024]{0}', space=vmem, size = 0x400, scoped, tag = 'input window, operand 2, single buffered']
    #allocation7 [shape = 'u8[512]{0}', space=vmem, size = 0x400, scoped, tag = 'input window, operand 3, single buffered']
    #allocation8 [shape = 's32[1]{0}', space=sflag, size = 0x4, scoped, tag = 'scoped memory for neural_network_forward.1']
    #allocation9 [shape = 'u8[512]{0}', space=vmem, size = 0x400, scoped, tag = 'input window, operand 4, single buffered']
    #allocation10 [shape = 'u8[65536]{0}', space=vmem, size = 0x10000, scoped, tag = 'input window, operand 5, single buffered']
    #allocation11 [shape = 's32[1]{0}', space=sflag, size = 0x4, scoped, tag = 'scoped memory for neural_network_forward.1']
    #allocation12 [shape = 'u8[512]{0}', space=vmem, size = 0x400, scoped, tag = 'input window, operand 6, single buffered']
    #allocation13 [shape = 'u8[262144]{0}', space=vmem, size = 0x40000, scoped, tag = 'input window, operand 7, single buffered']
    #allocation14 [shape = 's32[1]{0}', space=sflag, size = 0x4, scoped, tag = 'scoped memory for neural_network_forward.1']
    #allocation15 [shape = 'u8[2048]{0}', space=vmem, size = 0x800, scoped, tag = 'input window, operand 8, single buffered']
    #allocation16 [shape = 'u8[1024]{0}', space=vmem, size = 0x400, scoped, tag = 'input window, operand 9, single buffered']
    #allocation17 [shape = 's32[1]{0}', space=sflag, size = 0x4, scoped, tag = 'scoped memory for neural_network_forward.1']
    #allocation18 [shape = 'u8[1024]{0}', space=vmem, size = 0x400, scoped, tag = 'input window, operand 10, single buffered']
    #allocation19 [shape = 'u8[262144]{0}', space=vmem, size = 0x40000, scoped, tag = 'input window, operand 11, single buffered']
    #allocation20 [shape = 's32[1]{0}', space=sflag, size = 0x4, scoped, tag = 'scoped memory for neural_network_forward.1']
    #allocation21 [shape = 'u8[1024]{0}', space=vmem, size = 0x400, scoped, tag = 'input window, operand 12, single buffered']
    #allocation22 [shape = 'u8[1048576]{0}', space=vmem, size = 0x100000, scoped, tag = 'input window, operand 13, single buffered']
    #allocation23 [shape = 's32[1]{0}', space=sflag, size = 0x4, scoped, tag = 'scoped memory for neural_network_forward.1']
    #allocation24 [shape = 'u8[4096]{0}', space=vmem, size = 0x1000, scoped, tag = 'input window, operand 14, single buffered']
    #allocation25 [shape = 'u8[2048]{0}', space=vmem, size = 0x800, scoped, tag = 'input window, operand 15, single buffered']
    #allocation26 [shape = 's32[1]{0}', space=sflag, size = 0x4, scoped, tag = 'scoped memory for neural_network_forward.1']
    #allocation27 [shape = 'u8[2048]{0}', space=vmem, size = 0x800, scoped, tag = 'input window, operand 16, single buffered']
    #allocation28 [shape = 'u8[1048576]{0}', space=vmem, size = 0x100000, scoped, tag = 'input window, operand 17, single buffered']
    #allocation29 [shape = 's32[1]{0}', space=sflag, size = 0x4, scoped, tag = 'scoped memory for neural_network_forward.1']
    #allocation30 [shape = 'u8[2048]{0}', space=vmem, size = 0x800, scoped, tag = 'input window, operand 18, single buffered']
    #allocation31 [shape = 'u8[1048576]{0}', space=vmem, size = 0x100000, scoped, tag = 'input window, operand 19, single buffered']
    #allocation32 [shape = 's32[1]{0}', space=sflag, size = 0x4, scoped, tag = 'scoped memory for neural_network_forward.1']
    #allocation33 [shape = 'u8[2048]{0}', space=vmem, size = 0x800, scoped, tag = 'input window, operand 20, single buffered']
    #allocation34 [shape = 'u8[1024]{0}', space=vmem, size = 0x400, scoped, tag = 'input window, operand 21, single buffered']
    #allocation35 [shape = 's32[1]{0}', space=sflag, size = 0x4, scoped, tag = 'scoped memory for neural_network_forward.1']
    #allocation36 [shape = 'u8[1024]{0}', space=vmem, size = 0x400, scoped, tag = 'input window, operand 22, single buffered']
    #allocation37 [shape = 'u8[262144]{0}', space=vmem, size = 0x40000, scoped, tag = 'input window, operand 23, single buffered']
    #allocation38 [shape = 's32[1]{0}', space=sflag, size = 0x4, scoped, tag = 'scoped memory for neural_network_forward.1']
    #allocation39 [shape = 'u8[1024]{0}', space=vmem, size = 0x400, scoped, tag = 'input window, operand 24, single buffered']
    #allocation40 [shape = 'u8[262144]{0}', space=vmem, size = 0x40000, scoped, tag = 'input window, operand 25, single buffered']
    #allocation41 [shape = 's32[1]{0}', space=sflag, size = 0x4, scoped, tag = 'scoped memory for neural_network_forward.1']
    #allocation42 [shape = 'u8[1024]{0}', space=vmem, size = 0x400, scoped, tag = 'input window, operand 26, single buffered']
    #allocation43 [shape = 'u8[512]{0}', space=vmem, size = 0x400, scoped, tag = 'input window, operand 27, single buffered']
    #allocation44 [shape = 's32[1]{0}', space=sflag, size = 0x4, scoped, tag = 'scoped memory for neural_network_forward.1']
    #allocation45 [shape = 'u8[512]{0}', space=vmem, size = 0x400, scoped, tag = 'input window, operand 28, single buffered']
    #allocation46 [shape = 'u8[65536]{0}', space=vmem, size = 0x10000, scoped, tag = 'input window, operand 29, single buffered']
    #allocation47 [shape = 's32[1]{0}', space=sflag, size = 0x4, scoped, tag = 'scoped memory for neural_network_forward.1']
    #allocation48 [shape = 'u8[512]{0}', space=vmem, size = 0x400, scoped, tag = 'input window, operand 30, single buffered']
    #allocation49 [shape = 'u8[65536]{0}', space=vmem, size = 0x10000, scoped, tag = 'input window, operand 31, single buffered']
    #allocation50 [shape = 's32[1]{0}', space=sflag, size = 0x4, scoped, tag = 'scoped memory for neural_network_forward.1']
    #allocation51 [shape = 'u8[512]{0}', space=vmem, size = 0x400, scoped, tag = 'input window, operand 32, single buffered']
    #allocation52 [shape = 'u8[512]{0}', space=vmem, size = 0x400, scoped, tag = 'input window, operand 33, single buffered']
    #allocation53 [shape = 's32[1]{0}', space=sflag, size = 0x4, scoped, tag = 'scoped memory for neural_network_forward.1']
    #allocation54 [shape = 'u8[512]{0}', space=vmem, size = 0x400, scoped, tag = 'input window, operand 34, single buffered']
    %84 = vsyncpa [#allocation3], 0
    %85 = vsyncpa [#allocation5], 0
    %86 = vsyncpa [#allocation8], 0
    %87 = vsyncpa [#allocation11], 0
    %88 = vsyncpa [#allocation14], 0
    %89 = vsyncpa [#allocation17], 0
    %90 = vsyncpa [#allocation20], 0
    %91 = vsyncpa [#allocation23], 0
    %92 = vsyncpa [#allocation26], 0
    %93 = vsyncpa [#allocation29], 0
    %94 = vsyncpa [#allocation32], 0
    %95 = vsyncpa [#allocation35], 0
    %96 = vsyncpa [#allocation38], 0
    %97 = vsyncpa [#allocation41], 0
    %98 = vsyncpa [#allocation44], 0
    %99 = vsyncpa [#allocation47], 0
    %100 = vsyncpa [#allocation50], 0
    %101 = vsyncpa [#allocation53], 0
    // Predicated region
    $region2: #{neural_network_forward.1} parent=1 // pred_check
      _
    $region3: #{neural_network_forward.1} parent=1 // pred_check_branch
      %103 = sbr.rel (0) target = $region5
    $region4: #{neural_network_forward.1} parent=1 // pred_region
      %s105 = ssub.s32 128, 128
      %106 = vsyncadd [#allocation3], %s105
      %s108 = sshll.u32 [#allocation2], 4
      %s109 = int_to_ptr.vmem [resolvable:$true] %s108
      %111 = dma.hbm_to_vmem [thread:$0]  %s1, 128, %s109, [#allocation3]
    $region5: #{neural_network_forward.1} parent=1 // pred_fallthru
      _
    // Predicated region
    $region6: #{neural_network_forward.1} parent=1 // pred_check
      _
    $region7: #{neural_network_forward.1} parent=1 // pred_check_branch
      %113 = sbr.rel (0) target = $region9
    $region8: #{neural_network_forward.1} parent=1 // pred_region
      %s115 = ssub.s32 1024, 1024
      %116 = vsyncadd [#allocation5], %s115
      %s117 = sshll.u32 [#allocation4], 4
      %s118 = int_to_ptr.vmem [resolvable:$true] %s117
      %123 = dma.hbm_to_vmem [thread:$0]  %s3, 1024, %s118, [#allocation5], 256, 256, 16
    $region9: #{neural_network_forward.1} parent=1 // pred_fallthru
      _
    // Predicated region
    $region10: #{neural_network_forward.1} parent=1 // pred_check
      _
    $region11: #{neural_network_forward.1} parent=1 // pred_check_branch
      %125 = sbr.rel (0) target = $region13
    $region12: #{neural_network_forward.1} parent=1 // pred_region
      %s127 = ssub.s32 32, 32
      %128 = vsyncadd [#allocation5], %s127
      %s130 = sshll.u32 [#allocation6], 4
      %s131 = int_to_ptr.vmem [resolvable:$true] %s130
      %133 = dma.hbm_to_vmem [thread:$0]  %s5, 32, %s131, [#allocation5]
    $region13: #{neural_network_forward.1} parent=1 // pred_fallthru
      _
    // Predicated region
    $region14: #{neural_network_forward.1} parent=1 // pred_check
      _
    $region15: #{neural_network_forward.1} parent=1 // pred_check_branch
      %135 = sbr.rel (0) target = $region17
    $region16: #{neural_network_forward.1} parent=1 // pred_region
      %s137 = ssub.s32 16, 16
      %138 = vsyncadd [#allocation8], %s137
      %s140 = sshll.u32 [#allocation7], 4
      %s141 = int_to_ptr.vmem [resolvable:$true] %s140
      %143 = dma.hbm_to_vmem [thread:$0]  %s7, 16, %s141, [#allocation8]
    $region17: #{neural_network_forward.1} parent=1 // pred_fallthru
      _
    // Predicated region
    $region18: #{neural_network_forward.1} parent=1 // pred_check
      _
    $region19: #{neural_network_forward.1} parent=1 // pred_check_branch
      %145 = sbr.rel (0) target = $region21
    $region20: #{neural_network_forward.1} parent=1 // pred_region
      %s147 = ssub.s32 16, 16
      %148 = vsyncadd [#allocation8], %s147
      %s150 = sshll.u32 [#allocation9], 4
      %s151 = int_to_ptr.vmem [resolvable:$true] %s150
      %153 = dma.hbm_to_vmem [thread:$0]  %s9, 16, %s151, [#allocation8]
    $region21: #{neural_network_forward.1} parent=1 // pred_fallthru
      _
    // Predicated region
    $region22: #{neural_network_forward.1} parent=1 // pred_check
      _
    $region23: #{neural_network_forward.1} parent=1 // pred_check_branch
      %155 = sbr.rel (0) target = $region25
    $region24: #{neural_network_forward.1} parent=1 // pred_region
      %s157 = ssub.s32 2048, 2048
      %158 = vsyncadd [#allocation11], %s157
      %s159 = sshll.u32 [#allocation10], 4
      %s160 = int_to_ptr.vmem [resolvable:$true] %s159
      %165 = dma.hbm_to_vmem [thread:$0]  %s11, 2048, %s160, [#allocation11], 128, 128, 8
    $region25: #{neural_network_forward.1} parent=1 // pred_fallthru
      _
    // Predicated region
    $region26: #{neural_network_forward.1} parent=1 // pred_check
      _
    $region27: #{neural_network_forward.1} parent=1 // pred_check_branch
      %167 = sbr.rel (0) target = $region29
    $region28: #{neural_network_forward.1} parent=1 // pred_region
      %s169 = ssub.s32 16, 16
      %170 = vsyncadd [#allocation11], %s169
      %s172 = sshll.u32 [#allocation12], 4
      %s173 = int_to_ptr.vmem [resolvable:$true] %s172
      %175 = dma.hbm_to_vmem [thread:$0]  %s13, 16, %s173, [#allocation11]
    $region29: #{neural_network_forward.1} parent=1 // pred_fallthru
      _
    // Predicated region
    $region30: #{neural_network_forward.1} parent=1 // pred_check
      _
    $region31: #{neural_network_forward.1} parent=1 // pred_check_branch
      %177 = sbr.rel (0) target = $region33
    $region32: #{neural_network_forward.1} parent=1 // pred_region
      %s179 = ssub.s32 8192, 8192
      %180 = vsyncadd [#allocation14], %s179
      %s181 = sshll.u32 [#allocation13], 4
      %s182 = int_to_ptr.vmem [resolvable:$true] %s181
      %187 = dma.hbm_to_vmem [thread:$0]  %s15, 8192, %s182, [#allocation14], 512, 512, 32
    $region33: #{neural_network_forward.1} parent=1 // pred_fallthru
      _
    // Predicated region
    $region34: #{neural_network_forward.1} parent=1 // pred_check
      _
    $region35: #{neural_network_forward.1} parent=1 // pred_check_branch
      %189 = sbr.rel (0) target = $region37
    $region36: #{neural_network_forward.1} parent=1 // pred_region
      %s191 = ssub.s32 64, 64
      %192 = vsyncadd [#allocation14], %s191
      %s194 = sshll.u32 [#allocation15], 4
      %s195 = int_to_ptr.vmem [resolvable:$true] %s194
      %197 = dma.hbm_to_vmem [thread:$0]  %s17, 64, %s195, [#allocation14]
    $region37: #{neural_network_forward.1} parent=1 // pred_fallthru
      _
    // Predicated region
    $region38: #{neural_network_forward.1} parent=1 // pred_check
      _
    $region39: #{neural_network_forward.1} parent=1 // pred_check_branch
      %199 = sbr.rel (0) target = $region41
    $region40: #{neural_network_forward.1} parent=1 // pred_region
      %s201 = ssub.s32 32, 32
      %202 = vsyncadd [#allocation17], %s201
      %s204 = sshll.u32 [#allocation16], 4
      %s205 = int_to_ptr.vmem [resolvable:$true] %s204
      %207 = dma.hbm_to_vmem [thread:$0]  %s19, 32, %s205, [#allocation17]
    $region41: #{neural_network_forward.1} parent=1 // pred_fallthru
      _
    // Predicated region
    $region42: #{neural_network_forward.1} parent=1 // pred_check
      _
    $region43: #{neural_network_forward.1} parent=1 // pred_check_branch
      %209 = sbr.rel (0) target = $region45
    $region44: #{neural_network_forward.1} parent=1 // pred_region
      %s211 = ssub.s32 32, 32
      %212 = vsyncadd [#allocation17], %s211
      %s214 = sshll.u32 [#allocation18], 4
      %s215 = int_to_ptr.vmem [resolvable:$true] %s214
      %217 = dma.hbm_to_vmem [thread:$0]  %s21, 32, %s215, [#allocation17]
    $region45: #{neural_network_forward.1} parent=1 // pred_fallthru
      _
    // Predicated region
    $region46: #{neural_network_forward.1} parent=1 // pred_check
      _
    $region47: #{neural_network_forward.1} parent=1 // pred_check_branch
      %219 = sbr.rel (0) target = $region49
    $region48: #{neural_network_forward.1} parent=1 // pred_region
      %s221 = ssub.s32 8192, 8192
      %222 = vsyncadd [#allocation20], %s221
      %s223 = sshll.u32 [#allocation19], 4
      %s224 = int_to_ptr.vmem [resolvable:$true] %s223
      %229 = dma.hbm_to_vmem [thread:$0]  %s23, 8192, %s224, [#allocation20], 256, 256, 16
    $region49: #{neural_network_forward.1} parent=1 // pred_fallthru
      _
    // Predicated region
    $region50: #{neural_network_forward.1} parent=1 // pred_check
      _
    $region51: #{neural_network_forward.1} parent=1 // pred_check_branch
      %231 = sbr.rel (0) target = $region53
    $region52: #{neural_network_forward.1} parent=1 // pred_region
      %s233 = ssub.s32 32, 32
      %234 = vsyncadd [#allocation20], %s233
      %s236 = sshll.u32 [#allocation21], 4
      %s237 = int_to_ptr.vmem [resolvable:$true] %s236
      %239 = dma.hbm_to_vmem [thread:$0]  %s25, 32, %s237, [#allocation20]
    $region53: #{neural_network_forward.1} parent=1 // pred_fallthru
      _
    // Predicated region
    $region54: #{neural_network_forward.1} parent=1 // pred_check
      _
    $region55: #{neural_network_forward.1} parent=1 // pred_check_branch
      %241 = sbr.rel (0) target = $region57
    $region56: #{neural_network_forward.1} parent=1 // pred_region
      %s243 = ssub.s32 32768, 32768
      %244 = vsyncadd [#allocation23], %s243
      %s245 = sshll.u32 [#allocation22], 4
      %s246 = int_to_ptr.vmem [resolvable:$true] %s245
      %251 = dma.hbm_to_vmem [thread:$0]  %s27, 32768, %s246, [#allocation23], 1024, 1024, 64
    $region57: #{neural_network_forward.1} parent=1 // pred_fallthru
      _
    // Predicated region
    $region58: #{neural_network_forward.1} parent=1 // pred_check
      _
    $region59: #{neural_network_forward.1} parent=1 // pred_check_branch
      %253 = sbr.rel (0) target = $region61
    $region60: #{neural_network_forward.1} parent=1 // pred_region
      %s255 = ssub.s32 128, 128
      %256 = vsyncadd [#allocation23], %s255
      %s258 = sshll.u32 [#allocation24], 4
      %s259 = int_to_ptr.vmem [resolvable:$true] %s258
      %261 = dma.hbm_to_vmem [thread:$0]  %s29, 128, %s259, [#allocation23]
    $region61: #{neural_network_forward.1} parent=1 // pred_fallthru
      _
    // Predicated region
    $region62: #{neural_network_forward.1} parent=1 // pred_check
      _
    $region63: #{neural_network_forward.1} parent=1 // pred_check_branch
      %263 = sbr.rel (0) target = $region65
    $region64: #{neural_network_forward.1} parent=1 // pred_region
      %s265 = ssub.s32 64, 64
      %266 = vsyncadd [#allocation26], %s265
      %s268 = sshll.u32 [#allocation25], 4
      %s269 = int_to_ptr.vmem [resolvable:$true] %s268
      %271 = dma.hbm_to_vmem [thread:$0]  %s31, 64, %s269, [#allocation26]
    $region65: #{neural_network_forward.1} parent=1 // pred_fallthru
      _
    // Predicated region
    $region66: #{neural_network_forward.1} parent=1 // pred_check
      _
    $region67: #{neural_network_forward.1} parent=1 // pred_check_branch
      %273 = sbr.rel (0) target = $region69
    $region68: #{neural_network_forward.1} parent=1 // pred_region
      %s275 = ssub.s32 64, 64
      %276 = vsyncadd [#allocation26], %s275
      %s278 = sshll.u32 [#allocation27], 4
      %s279 = int_to_ptr.vmem [resolvable:$true] %s278
      %281 = dma.hbm_to_vmem [thread:$0]  %s33, 64, %s279, [#allocation26]
    $region69: #{neural_network_forward.1} parent=1 // pred_fallthru
      _
    // Predicated region
    $region70: #{neural_network_forward.1} parent=1 // pred_check
      _
    $region71: #{neural_network_forward.1} parent=1 // pred_check_branch
      %283 = sbr.rel (0) target = $region73
    $region72: #{neural_network_forward.1} parent=1 // pred_region
      %s285 = ssub.s32 32768, 32768
      %286 = vsyncadd [#allocation29], %s285
      %s287 = sshll.u32 [#allocation28], 4
      %s288 = int_to_ptr.vmem [resolvable:$true] %s287
      %293 = dma.hbm_to_vmem [thread:$0]  %s35, 32768, %s288, [#allocation29], 512, 512, 32
    $region73: #{neural_network_forward.1} parent=1 // pred_fallthru
      _
    // Predicated region
    $region74: #{neural_network_forward.1} parent=1 // pred_check
      _
    $region75: #{neural_network_forward.1} parent=1 // pred_check_branch
      %295 = sbr.rel (0) target = $region77
    $region76: #{neural_network_forward.1} parent=1 // pred_region
      %s297 = ssub.s32 64, 64
      %298 = vsyncadd [#allocation29], %s297
      %s300 = sshll.u32 [#allocation30], 4
      %s301 = int_to_ptr.vmem [resolvable:$true] %s300
      %303 = dma.hbm_to_vmem [thread:$0]  %s37, 64, %s301, [#allocation29]
    $region77: #{neural_network_forward.1} parent=1 // pred_fallthru
      _
    // Predicated region
    $region78: #{neural_network_forward.1} parent=1 // pred_check
      _
    $region79: #{neural_network_forward.1} parent=1 // pred_check_branch
      %305 = sbr.rel (0) target = $region81
    $region80: #{neural_network_forward.1} parent=1 // pred_region
      %s307 = ssub.s32 32768, 32768
      %308 = vsyncadd [#allocation32], %s307
      %s309 = sshll.u32 [#allocation31], 4
      %s310 = int_to_ptr.vmem [resolvable:$true] %s309
      %315 = dma.hbm_to_vmem [thread:$0]  %s39, 32768, %s310, [#allocation32], 512, 512, 32
    $region81: #{neural_network_forward.1} parent=1 // pred_fallthru
      _
    // Predicated region
    $region82: #{neural_network_forward.1} parent=1 // pred_check
      _
    $region83: #{neural_network_forward.1} parent=1 // pred_check_branch
      %317 = sbr.rel (0) target = $region85
    $region84: #{neural_network_forward.1} parent=1 // pred_region
      %s319 = ssub.s32 64, 64
      %320 = vsyncadd [#allocation32], %s319
      %s322 = sshll.u32 [#allocation33], 4
      %s323 = int_to_ptr.vmem [resolvable:$true] %s322
      %325 = dma.hbm_to_vmem [thread:$0]  %s41, 64, %s323, [#allocation32]
    $region85: #{neural_network_forward.1} parent=1 // pred_fallthru
      _
    // Predicated region
    $region86: #{neural_network_forward.1} parent=1 // pred_check
      _
    $region87: #{neural_network_forward.1} parent=1 // pred_check_branch
      %327 = sbr.rel (0) target = $region89
    $region88: #{neural_network_forward.1} parent=1 // pred_region
      %s329 = ssub.s32 32, 32
      %330 = vsyncadd [#allocation35], %s329
      %s332 = sshll.u32 [#allocation34], 4
      %s333 = int_to_ptr.vmem [resolvable:$true] %s332
      %335 = dma.hbm_to_vmem [thread:$0]  %s43, 32, %s333, [#allocation35]
    $region89: #{neural_network_forward.1} parent=1 // pred_fallthru
      _
    // Predicated region
    $region90: #{neural_network_forward.1} parent=1 // pred_check
      _
    $region91: #{neural_network_forward.1} parent=1 // pred_check_branch
      %337 = sbr.rel (0) target = $region93
    $region92: #{neural_network_forward.1} parent=1 // pred_region
      %s339 = ssub.s32 32, 32
      %340 = vsyncadd [#allocation35], %s339
      %s342 = sshll.u32 [#allocation36], 4
      %s343 = int_to_ptr.vmem [resolvable:$true] %s342
      %345 = dma.hbm_to_vmem [thread:$0]  %s45, 32, %s343, [#allocation35]
    $region93: #{neural_network_forward.1} parent=1 // pred_fallthru
      _
    // Predicated region
    $region94: #{neural_network_forward.1} parent=1 // pred_check
      _
    $region95: #{neural_network_forward.1} parent=1 // pred_check_branch
      %347 = sbr.rel (0) target = $region97
    $region96: #{neural_network_forward.1} parent=1 // pred_region
      %s349 = ssub.s32 8192, 8192
      %350 = vsyncadd [#allocation38], %s349
      %s351 = sshll.u32 [#allocation37], 4
      %s352 = int_to_ptr.vmem [resolvable:$true] %s351
      %357 = dma.hbm_to_vmem [thread:$0]  %s47, 8192, %s352, [#allocation38], 256, 256, 16
    $region97: #{neural_network_forward.1} parent=1 // pred_fallthru
      _
    // Predicated region
    $region98: #{neural_network_forward.1} parent=1 // pred_check
      _
    $region99: #{neural_network_forward.1} parent=1 // pred_check_branch
      %359 = sbr.rel (0) target = $region101
    $region100: #{neural_network_forward.1} parent=1 // pred_region
      %s361 = ssub.s32 32, 32
      %362 = vsyncadd [#allocation38], %s361
      %s364 = sshll.u32 [#allocation39], 4
      %s365 = int_to_ptr.vmem [resolvable:$true] %s364
      %367 = dma.hbm_to_vmem [thread:$0]  %s49, 32, %s365, [#allocation38]
    $region101: #{neural_network_forward.1} parent=1 // pred_fallthru
      _
    // Predicated region
    $region102: #{neural_network_forward.1} parent=1 // pred_check
      _
    $region103: #{neural_network_forward.1} parent=1 // pred_check_branch
      %369 = sbr.rel (0) target = $region105
    $region104: #{neural_network_forward.1} parent=1 // pred_region
      %s371 = ssub.s32 8192, 8192
      %372 = vsyncadd [#allocation41], %s371
      %s373 = sshll.u32 [#allocation40], 4
      %s374 = int_to_ptr.vmem [resolvable:$true] %s373
      %379 = dma.hbm_to_vmem [thread:$0]  %s51, 8192, %s374, [#allocation41], 256, 256, 16
    $region105: #{neural_network_forward.1} parent=1 // pred_fallthru
      _
    // Predicated region
    $region106: #{neural_network_forward.1} parent=1 // pred_check
      _
    $region107: #{neural_network_forward.1} parent=1 // pred_check_branch
      %381 = sbr.rel (0) target = $region109
    $region108: #{neural_network_forward.1} parent=1 // pred_region
      %s383 = ssub.s32 32, 32
      %384 = vsyncadd [#allocation41], %s383
      %s386 = sshll.u32 [#allocation42], 4
      %s387 = int_to_ptr.vmem [resolvable:$true] %s386
      %389 = dma.hbm_to_vmem [thread:$0]  %s53, 32, %s387, [#allocation41]
    $region109: #{neural_network_forward.1} parent=1 // pred_fallthru
      _
    // Predicated region
    $region110: #{neural_network_forward.1} parent=1 // pred_check
      _
    $region111: #{neural_network_forward.1} parent=1 // pred_check_branch
      %391 = sbr.rel (0) target = $region113
    $region112: #{neural_network_forward.1} parent=1 // pred_region
      %s393 = ssub.s32 16, 16
      %394 = vsyncadd [#allocation44], %s393
      %s396 = sshll.u32 [#allocation43], 4
      %s397 = int_to_ptr.vmem [resolvable:$true] %s396
      %399 = dma.hbm_to_vmem [thread:$0]  %s55, 16, %s397, [#allocation44]
    $region113: #{neural_network_forward.1} parent=1 // pred_fallthru
      _
    // Predicated region
    $region114: #{neural_network_forward.1} parent=1 // pred_check
      _
    $region115: #{neural_network_forward.1} parent=1 // pred_check_branch
      %401 = sbr.rel (0) target = $region117
    $region116: #{neural_network_forward.1} parent=1 // pred_region
      %s403 = ssub.s32 16, 16
      %404 = vsyncadd [#allocation44], %s403
      %s406 = sshll.u32 [#allocation45], 4
      %s407 = int_to_ptr.vmem [resolvable:$true] %s406
      %409 = dma.hbm_to_vmem [thread:$0]  %s57, 16, %s407, [#allocation44]
    $region117: #{neural_network_forward.1} parent=1 // pred_fallthru
      _
    // Predicated region
    $region118: #{neural_network_forward.1} parent=1 // pred_check
      _
    $region119: #{neural_network_forward.1} parent=1 // pred_check_branch
      %411 = sbr.rel (0) target = $region121
    $region120: #{neural_network_forward.1} parent=1 // pred_region
      %s413 = ssub.s32 2048, 2048
      %414 = vsyncadd [#allocation47], %s413
      %s415 = sshll.u32 [#allocation46], 4
      %s416 = int_to_ptr.vmem [resolvable:$true] %s415
      %421 = dma.hbm_to_vmem [thread:$0]  %s59, 2048, %s416, [#allocation47], 128, 128, 8
    $region121: #{neural_network_forward.1} parent=1 // pred_fallthru
      _
    // Predicated region
    $region122: #{neural_network_forward.1} parent=1 // pred_check
      _
    $region123: #{neural_network_forward.1} parent=1 // pred_check_branch
      %423 = sbr.rel (0) target = $region125
    $region124: #{neural_network_forward.1} parent=1 // pred_region
      %s425 = ssub.s32 16, 16
      %426 = vsyncadd [#allocation47], %s425
      %s428 = sshll.u32 [#allocation48], 4
      %s429 = int_to_ptr.vmem [resolvable:$true] %s428
      %431 = dma.hbm_to_vmem [thread:$0]  %s61, 16, %s429, [#allocation47]
    $region125: #{neural_network_forward.1} parent=1 // pred_fallthru
      _
    // Predicated region
    $region126: #{neural_network_forward.1} parent=1 // pred_check
      _
    $region127: #{neural_network_forward.1} parent=1 // pred_check_branch
      %433 = sbr.rel (0) target = $region129
    $region128: #{neural_network_forward.1} parent=1 // pred_region
      %s435 = ssub.s32 2048, 2048
      %436 = vsyncadd [#allocation50], %s435
      %s437 = sshll.u32 [#allocation49], 4
      %s438 = int_to_ptr.vmem [resolvable:$true] %s437
      %443 = dma.hbm_to_vmem [thread:$0]  %s63, 2048, %s438, [#allocation50], 128, 128, 8
    $region129: #{neural_network_forward.1} parent=1 // pred_fallthru
      _
    // Predicated region
    $region130: #{neural_network_forward.1} parent=1 // pred_check
      _
    $region131: #{neural_network_forward.1} parent=1 // pred_check_branch
      %445 = sbr.rel (0) target = $region133
    $region132: #{neural_network_forward.1} parent=1 // pred_region
      %s447 = ssub.s32 16, 16
      %448 = vsyncadd [#allocation50], %s447
      %s450 = sshll.u32 [#allocation51], 4
      %s451 = int_to_ptr.vmem [resolvable:$true] %s450
      %453 = dma.hbm_to_vmem [thread:$0]  %s65, 16, %s451, [#allocation50]
    $region133: #{neural_network_forward.1} parent=1 // pred_fallthru
      _
    // Predicated region
    $region134: #{neural_network_forward.1} parent=1 // pred_check
      _
    $region135: #{neural_network_forward.1} parent=1 // pred_check_branch
      %455 = sbr.rel (0) target = $region137
    $region136: #{neural_network_forward.1} parent=1 // pred_region
      %s457 = ssub.s32 16, 16
      %458 = vsyncadd [#allocation53], %s457
      %s460 = sshll.u32 [#allocation52], 4
      %s461 = int_to_ptr.vmem [resolvable:$true] %s460
      %463 = dma.hbm_to_vmem [thread:$0]  %s67, 16, %s461, [#allocation53]
    $region137: #{neural_network_forward.1} parent=1 // pred_fallthru
      _
    // Predicated region
    $region138: #{neural_network_forward.1} parent=1 // pred_check
      _
    $region139: #{neural_network_forward.1} parent=1 // pred_check_branch
      %465 = sbr.rel (0) target = $region141
    $region140: #{neural_network_forward.1} parent=1 // pred_region
      %s467 = ssub.s32 16, 16
      %468 = vsyncadd [#allocation53], %s467
      %s470 = sshll.u32 [#allocation54], 4
      %s471 = int_to_ptr.vmem [resolvable:$true] %s470
      %473 = dma.hbm_to_vmem [thread:$0]  %s69, 16, %s471, [#allocation53]
    $region141: #{neural_network_forward.1} parent=1 // pred_fallthru
      _
    // Predicated region
    $region142: #{neural_network_forward.1} parent=1 // pred_check
      _
    $region143: #{neural_network_forward.1} parent=1 // pred_check_branch
      %475 = sbr.rel (0) target = $region145
    $region144: #{neural_network_forward.1} parent=1 // pred_region
      _
    $region145: #{neural_network_forward.1} parent=1 // pred_fallthru
      _
    // Predicated region
    $region146: #{neural_network_forward.1} parent=1 // pred_check
      _
    $region147: #{neural_network_forward.1} parent=1 // pred_check_branch
      %477 = sbr.rel (0) target = $region149
    $region148: #{neural_network_forward.1} parent=1 // pred_region
      _
    $region149: #{neural_network_forward.1} parent=1 // pred_fallthru
      _
    // Predicated region
    $region150: #{neural_network_forward.1} parent=1 // pred_check
      _
    $region151: #{neural_network_forward.1} parent=1 // pred_check_branch
      %479 = sbr.rel (0) target = $region153
    $region152: #{neural_network_forward.1} parent=1 // pred_region
      _
    $region153: #{neural_network_forward.1} parent=1 // pred_fallthru
      _
    // Predicated region
    $region154: #{neural_network_forward.1} parent=1 // pred_check
      _
    $region155: #{neural_network_forward.1} parent=1 // pred_check_branch
      %481 = sbr.rel (0) target = $region157
    $region156: #{neural_network_forward.1} parent=1 // pred_region
      _
    $region157: #{neural_network_forward.1} parent=1 // pred_fallthru
      _
    // Predicated region
    $region158: #{neural_network_forward.1} parent=1 // pred_check
      _
    $region159: #{neural_network_forward.1} parent=1 // pred_check_branch
      %483 = sbr.rel (0) target = $region161
    $region160: #{neural_network_forward.1} parent=1 // pred_region
      %484 = dma.done [#allocation3], 128
    $region161: #{neural_network_forward.1} parent=1 // pred_fallthru
      _
    // Predicated region
    $region162: #{neural_network_forward.1} parent=1 // pred_check
      _
    $region163: #{neural_network_forward.1} parent=1 // pred_check_branch
      %486 = sbr.rel (0) target = $region165
    $region164: #{neural_network_forward.1} parent=1 // pred_region
      %487 = dma.done [#allocation5], 1024
    $region165: #{neural_network_forward.1} parent=1 // pred_fallthru
      _
    // Predicated region
    $region166: #{neural_network_forward.1} parent=1 // pred_check
      _
    $region167: #{neural_network_forward.1} parent=1 // pred_check_branch
      %489 = sbr.rel (0) target = $region169
    $region168: #{neural_network_forward.1} parent=1 // pred_region
      %490 = dma.done [#allocation5], 32
    $region169: #{neural_network_forward.1} parent=1 // pred_fallthru
      _
    // Predicated region
    $region170: #{neural_network_forward.1} parent=1 // pred_check
      _
    $region171: #{neural_network_forward.1} parent=1 // pred_check_branch
      %492 = sbr.rel (0) target = $region173
    $region172: #{neural_network_forward.1} parent=1 // pred_region
      %493 = dma.done [#allocation8], 16
    $region173: #{neural_network_forward.1} parent=1 // pred_fallthru
      _
    // Predicated region
    $region174: #{neural_network_forward.1} parent=1 // pred_check
      _
    $region175: #{neural_network_forward.1} parent=1 // pred_check_branch
      %495 = sbr.rel (0) target = $region177
    $region176: #{neural_network_forward.1} parent=1 // pred_region
      %496 = dma.done [#allocation8], 16
    $region177: #{neural_network_forward.1} parent=1 // pred_fallthru
      _
    // Predicated region
    $region178: #{neural_network_forward.1} parent=1 // pred_check
      _
    $region179: #{neural_network_forward.1} parent=1 // pred_check_branch
      %498 = sbr.rel (0) target = $region181
    $region180: #{neural_network_forward.1} parent=1 // pred_region
      %499 = dma.done [#allocation11], 2048
    $region181: #{neural_network_forward.1} parent=1 // pred_fallthru
      _
    // Predicated region
    $region182: #{neural_network_forward.1} parent=1 // pred_check
      _
    $region183: #{neural_network_forward.1} parent=1 // pred_check_branch
      %501 = sbr.rel (0) target = $region185
    $region184: #{neural_network_forward.1} parent=1 // pred_region
      %502 = dma.done [#allocation11], 16
    $region185: #{neural_network_forward.1} parent=1 // pred_fallthru
      _
    // Predicated region
    $region186: #{neural_network_forward.1} parent=1 // pred_check
      _
    $region187: #{neural_network_forward.1} parent=1 // pred_check_branch
      %504 = sbr.rel (0) target = $region189
    $region188: #{neural_network_forward.1} parent=1 // pred_region
      %505 = dma.done [#allocation14], 8192
    $region189: #{neural_network_forward.1} parent=1 // pred_fallthru
      _
    // Predicated region
    $region190: #{neural_network_forward.1} parent=1 // pred_check
      _
    $region191: #{neural_network_forward.1} parent=1 // pred_check_branch
      %507 = sbr.rel (0) target = $region193
    $region192: #{neural_network_forward.1} parent=1 // pred_region
      %508 = dma.done [#allocation14], 64
    $region193: #{neural_network_forward.1} parent=1 // pred_fallthru
      _
    // Predicated region
    $region194: #{neural_network_forward.1} parent=1 // pred_check
      _
    $region195: #{neural_network_forward.1} parent=1 // pred_check_branch
      %510 = sbr.rel (0) target = $region197
    $region196: #{neural_network_forward.1} parent=1 // pred_region
      %511 = dma.done [#allocation17], 32
    $region197: #{neural_network_forward.1} parent=1 // pred_fallthru
      _
    // Predicated region
    $region198: #{neural_network_forward.1} parent=1 // pred_check
      _
    $region199: #{neural_network_forward.1} parent=1 // pred_check_branch
      %513 = sbr.rel (0) target = $region201
    $region200: #{neural_network_forward.1} parent=1 // pred_region
      %514 = dma.done [#allocation17], 32
    $region201: #{neural_network_forward.1} parent=1 // pred_fallthru
      _
    // Predicated region
    $region202: #{neural_network_forward.1} parent=1 // pred_check
      _
    $region203: #{neural_network_forward.1} parent=1 // pred_check_branch
      %516 = sbr.rel (0) target = $region205
    $region204: #{neural_network_forward.1} parent=1 // pred_region
      %517 = dma.done [#allocation20], 8192
    $region205: #{neural_network_forward.1} parent=1 // pred_fallthru
      _
    // Predicated region
    $region206: #{neural_network_forward.1} parent=1 // pred_check
      _
    $region207: #{neural_network_forward.1} parent=1 // pred_check_branch
      %519 = sbr.rel (0) target = $region209
    $region208: #{neural_network_forward.1} parent=1 // pred_region
      %520 = dma.done [#allocation20], 32
    $region209: #{neural_network_forward.1} parent=1 // pred_fallthru
      _
    // Predicated region
    $region210: #{neural_network_forward.1} parent=1 // pred_check
      _
    $region211: #{neural_network_forward.1} parent=1 // pred_check_branch
      %522 = sbr.rel (0) target = $region213
    $region212: #{neural_network_forward.1} parent=1 // pred_region
      %523 = dma.done [#allocation23], 32768
    $region213: #{neural_network_forward.1} parent=1 // pred_fallthru
      _
    // Predicated region
    $region214: #{neural_network_forward.1} parent=1 // pred_check
      _
    $region215: #{neural_network_forward.1} parent=1 // pred_check_branch
      %525 = sbr.rel (0) target = $region217
    $region216: #{neural_network_forward.1} parent=1 // pred_region
      %526 = dma.done [#allocation23], 128
    $region217: #{neural_network_forward.1} parent=1 // pred_fallthru
      _
    // Predicated region
    $region218: #{neural_network_forward.1} parent=1 // pred_check
      _
    $region219: #{neural_network_forward.1} parent=1 // pred_check_branch
      %528 = sbr.rel (0) target = $region221
    $region220: #{neural_network_forward.1} parent=1 // pred_region
      %529 = dma.done [#allocation26], 64
    $region221: #{neural_network_forward.1} parent=1 // pred_fallthru
      _
    // Predicated region
    $region222: #{neural_network_forward.1} parent=1 // pred_check
      _
    $region223: #{neural_network_forward.1} parent=1 // pred_check_branch
      %531 = sbr.rel (0) target = $region225
    $region224: #{neural_network_forward.1} parent=1 // pred_region
      %532 = dma.done [#allocation26], 64
    $region225: #{neural_network_forward.1} parent=1 // pred_fallthru
      _
    // Predicated region
    $region226: #{neural_network_forward.1} parent=1 // pred_check
      _
    $region227: #{neural_network_forward.1} parent=1 // pred_check_branch
      %534 = sbr.rel (0) target = $region229
    $region228: #{neural_network_forward.1} parent=1 // pred_region
      %535 = dma.done [#allocation29], 32768
    $region229: #{neural_network_forward.1} parent=1 // pred_fallthru
      _
    // Predicated region
    $region230: #{neural_network_forward.1} parent=1 // pred_check
      _
    $region231: #{neural_network_forward.1} parent=1 // pred_check_branch
      %537 = sbr.rel (0) target = $region233
    $region232: #{neural_network_forward.1} parent=1 // pred_region
      %538 = dma.done [#allocation29], 64
    $region233: #{neural_network_forward.1} parent=1 // pred_fallthru
      _
    // Predicated region
    $region234: #{neural_network_forward.1} parent=1 // pred_check
      _
    $region235: #{neural_network_forward.1} parent=1 // pred_check_branch
      %540 = sbr.rel (0) target = $region237
    $region236: #{neural_network_forward.1} parent=1 // pred_region
      %541 = dma.done [#allocation32], 32768
    $region237: #{neural_network_forward.1} parent=1 // pred_fallthru
      _
    // Predicated region
    $region238: #{neural_network_forward.1} parent=1 // pred_check
      _
    $region239: #{neural_network_forward.1} parent=1 // pred_check_branch
      %543 = sbr.rel (0) target = $region241
    $region240: #{neural_network_forward.1} parent=1 // pred_region
      %544 = dma.done [#allocation32], 64
    $region241: #{neural_network_forward.1} parent=1 // pred_fallthru
      _
    // Predicated region
    $region242: #{neural_network_forward.1} parent=1 // pred_check
      _
    $region243: #{neural_network_forward.1} parent=1 // pred_check_branch
      %546 = sbr.rel (0) target = $region245
    $region244: #{neural_network_forward.1} parent=1 // pred_region
      %547 = dma.done [#allocation35], 32
    $region245: #{neural_network_forward.1} parent=1 // pred_fallthru
      _
    // Predicated region
    $region246: #{neural_network_forward.1} parent=1 // pred_check
      _
    $region247: #{neural_network_forward.1} parent=1 // pred_check_branch
      %549 = sbr.rel (0) target = $region249
    $region248: #{neural_network_forward.1} parent=1 // pred_region
      %550 = dma.done [#allocation35], 32
    $region249: #{neural_network_forward.1} parent=1 // pred_fallthru
      _
    // Predicated region
    $region250: #{neural_network_forward.1} parent=1 // pred_check
      _
    $region251: #{neural_network_forward.1} parent=1 // pred_check_branch
      %552 = sbr.rel (0) target = $region253
    $region252: #{neural_network_forward.1} parent=1 // pred_region
      %553 = dma.done [#allocation38], 8192
    $region253: #{neural_network_forward.1} parent=1 // pred_fallthru
      _
    // Predicated region
    $region254: #{neural_network_forward.1} parent=1 // pred_check
      _
    $region255: #{neural_network_forward.1} parent=1 // pred_check_branch
      %555 = sbr.rel (0) target = $region257
    $region256: #{neural_network_forward.1} parent=1 // pred_region
      %556 = dma.done [#allocation38], 32
    $region257: #{neural_network_forward.1} parent=1 // pred_fallthru
      _
    // Predicated region
    $region258: #{neural_network_forward.1} parent=1 // pred_check
      _
    $region259: #{neural_network_forward.1} parent=1 // pred_check_branch
      %558 = sbr.rel (0) target = $region261
    $region260: #{neural_network_forward.1} parent=1 // pred_region
      %559 = dma.done [#allocation41], 8192
    $region261: #{neural_network_forward.1} parent=1 // pred_fallthru
      _
    // Predicated region
    $region262: #{neural_network_forward.1} parent=1 // pred_check
      _
    $region263: #{neural_network_forward.1} parent=1 // pred_check_branch
      %561 = sbr.rel (0) target = $region265
    $region264: #{neural_network_forward.1} parent=1 // pred_region
      %562 = dma.done [#allocation41], 32
    $region265: #{neural_network_forward.1} parent=1 // pred_fallthru
      _
    // Predicated region
    $region266: #{neural_network_forward.1} parent=1 // pred_check
      _
    $region267: #{neural_network_forward.1} parent=1 // pred_check_branch
      %564 = sbr.rel (0) target = $region269
    $region268: #{neural_network_forward.1} parent=1 // pred_region
      %565 = dma.done [#allocation44], 16
    $region269: #{neural_network_forward.1} parent=1 // pred_fallthru
      _
    // Predicated region
    $region270: #{neural_network_forward.1} parent=1 // pred_check
      _
    $region271: #{neural_network_forward.1} parent=1 // pred_check_branch
      %567 = sbr.rel (0) target = $region273
    $region272: #{neural_network_forward.1} parent=1 // pred_region
      %568 = dma.done [#allocation44], 16
    $region273: #{neural_network_forward.1} parent=1 // pred_fallthru
      _
    // Predicated region
    $region274: #{neural_network_forward.1} parent=1 // pred_check
      _
    $region275: #{neural_network_forward.1} parent=1 // pred_check_branch
      %570 = sbr.rel (0) target = $region277
    $region276: #{neural_network_forward.1} parent=1 // pred_region
      %571 = dma.done [#allocation47], 2048
    $region277: #{neural_network_forward.1} parent=1 // pred_fallthru
      _
    // Predicated region
    $region278: #{neural_network_forward.1} parent=1 // pred_check
      _
    $region279: #{neural_network_forward.1} parent=1 // pred_check_branch
      %573 = sbr.rel (0) target = $region281
    $region280: #{neural_network_forward.1} parent=1 // pred_region
      %574 = dma.done [#allocation47], 16
    $region281: #{neural_network_forward.1} parent=1 // pred_fallthru
      _
    // Predicated region
    $region282: #{neural_network_forward.1} parent=1 // pred_check
      _
    $region283: #{neural_network_forward.1} parent=1 // pred_check_branch
      %576 = sbr.rel (0) target = $region285
    $region284: #{neural_network_forward.1} parent=1 // pred_region
      %577 = dma.done [#allocation50], 2048
    $region285: #{neural_network_forward.1} parent=1 // pred_fallthru
      _
    // Predicated region
    $region286: #{neural_network_forward.1} parent=1 // pred_check
      _
    $region287: #{neural_network_forward.1} parent=1 // pred_check_branch
      %579 = sbr.rel (0) target = $region289
    $region288: #{neural_network_forward.1} parent=1 // pred_region
      %580 = dma.done [#allocation50], 16
    $region289: #{neural_network_forward.1} parent=1 // pred_fallthru
      _
    // Predicated region
    $region290: #{neural_network_forward.1} parent=1 // pred_check
      _
    $region291: #{neural_network_forward.1} parent=1 // pred_check_branch
      %582 = sbr.rel (0) target = $region293
    $region292: #{neural_network_forward.1} parent=1 // pred_region
      %583 = dma.done [#allocation53], 16
    $region293: #{neural_network_forward.1} parent=1 // pred_fallthru
      _
    // Predicated region
    $region294: #{neural_network_forward.1} parent=1 // pred_check
      _
    $region295: #{neural_network_forward.1} parent=1 // pred_check_branch
      %585 = sbr.rel (0) target = $region297
    $region296: #{neural_network_forward.1} parent=1 // pred_region
      %586 = dma.done [#allocation53], 16
    $region297: #{neural_network_forward.1} parent=1 // pred_fallthru
      _
    %v587 = vld [vmem:[#allocation2] sm:$0xff]
    %v588 = vld [vmem:[#allocation4] sm:$0xff]
    %v589 = vld [vmem:[#allocation4 + $0x8] sm:$0xff]
    %v590 = vld [vmem:[#allocation4 + $0x10] sm:$0xff]
    %v591 = vld [vmem:[#allocation4 + $0x18] sm:$0xff]
    %v592 = vld [vmem:[#allocation4 + $0x20] sm:$0xff]
    %v593 = vld [vmem:[#allocation4 + $0x28] sm:$0xff]
    %v594 = vld [vmem:[#allocation4 + $0x30] sm:$0xff]
    %v595 = vld [vmem:[#allocation4 + $0x38] sm:$0xff]
    %v596 = vld [vmem:[#allocation6] sm:$0x3]
    %v598 = vlaneseq
    %v599 = vshrl.u32 %v598, 7
    %v600 = vsub.s32 0, %v599
    %v601 = vrot.slane %v596, %v600
    %v602 = vlaneseq
    %v603 = vshrl.u32 %v602, 7
    %v604 = vsub.s32 1, %v603
    %v605 = vrot.slane %v596, %v604
    %vm608 = vcmask 261120
    %v610 = vsel %vm608, %v587, 0
    %612 = vmatprep.subr.mxu0 %v589
    %613 = vmatpush1.msra.mxu0 %v588
    %614 = vmatprep.subr.mxu0 %v591
    %615 = vmatpush1.msra.mxu0 %v590
    %616 = vmatprep.subr.mxu0 %v593
    %617 = vmatpush1.msra.mxu0 %v592
    %618 = vmatprep.subr.mxu0 %v595
    %619 = vmatpush1.msra.mxu0 %v594
    %620 = vmatprep.subr.mxu0 0.0
    %621 = vmatpush1.msra.mxu0 0.0
    %622 = vmatprep.subr.mxu0 0.0
    %623 = vmatpush1.msra.mxu0 0.0
    %624 = vmatprep.subr.mxu0 0.0
    %625 = vmatpush1.msra.mxu0 0.0
    %626 = vmatprep.subr.mxu0 0.0
    %627 = vmatpush1.msra.mxu0 0.0
    %628 = vmatprep.subr.mxu0 0.0
    %629 = vmatpush1.msra.mxu0 0.0
    %630 = vmatprep.subr.mxu0 0.0
    %631 = vmatpush1.msra.mxu0 0.0
    %632 = vmatprep.subr.mxu0 0.0
    %633 = vmatpush1.msra.mxu0 0.0
    %634 = vmatprep.subr.mxu0 0.0
    %635 = vmatpush1.msra.mxu0 0.0
    %636 = vmatprep.subr.mxu0 0.0
    %637 = vmatpush1.msra.mxu0 0.0
    %638 = vmatprep.subr.mxu0 0.0
    %639 = vmatpush1.msra.mxu0 0.0
    %640 = vmatprep.subr.mxu0 0.0
    %641 = vmatpush1.msra.mxu0 0.0
    %642 = vmatprep.subr.mxu0 0.0
    %643 = vmatpush1.msra.mxu0 0.0
    %644 = vmatprep.subr.mxu0 0.0
    %645 = vmatpush1.msra.mxu0 0.0
    %646 = vmatprep.subr.mxu0 0.0
    %647 = vmatpush1.msra.mxu0 0.0
    %648 = vmatprep.subr.mxu0 0.0
    %649 = vmatpush1.msra.mxu0 0.0
    %650 = vmatprep.subr.mxu0 0.0
    %651 = vmatpush1.msra.mxu0 0.0
    %652 = vmatprep.subr.mxu0 0.0
    %653 = vmatpush1.msra.mxu0 0.0
    %654 = vmatprep.subr.mxu0 0.0
    %655 = vmatpush1.msra.mxu0 0.0
    %656 = vmatprep.subr.mxu0 0.0
    %657 = vmatpush1.msra.mxu0 0.0
    %658 = vmatprep.subr.mxu0 0.0
    %659 = vmatpush1.msra.mxu0 0.0
    %660 = vmatprep.subr.mxu0 0.0
    %661 = vmatpush1.msra.mxu0 0.0
    %662 = vmatprep.subr.mxu0 0.0
    %663 = vmatpush1.msra.mxu0 0.0
    %664 = vmatprep.subr.mxu0 0.0
    %665 = vmatpush1.msra.mxu0 0.0
    %666 = vmatprep.subr.mxu0 0.0
    %667 = vmatpush1.msra.mxu0 0.0
    %668 = vmatprep.subr.mxu0 0.0
    %669 = vmatpush1.msra.mxu0 0.0
    %670 = vmatprep.subr.mxu0 0.0
    %671 = vmatpush1.msra.mxu0 0.0
    %672 = vmatprep.subr.mxu0 0.0
    %673 = vmatpush1.msra.mxu0 0.0
    %674 = vmatprep.subr.mxu0 0.0
    %675 = vmatpush1.msra.mxu0 0.0
    %676 = vmatprep.mubr.f32.mxu0 0.0
    %677 = vmatmul.mubr.f32.gmra.mrb[0].mxu0 %v610
    %v678 = vpop.f32.mrb[0].mxu0
    %v679 = vadd.f32 %v601, %v678
    %v680 = vpop.f32.mrb[0].mxu0
    %v681 = vadd.f32 %v605, %v680
    %682 = vdwg.mxu0
    %683 = vadd.xlane.f32.xlu0 %v679
    %v684 = vpop.xlane.xlu0 %683
    %v685 = vrcp.pop 128.0
    %v686 = vmul.f32 %v684, %v685
    %v687 = vsub.f32 %v679, %v686
    %v688 = vmul.f32 %v687, %v687
    %689 = vadd.xlane.f32.xlu0 %v688
    %v690 = vpop.xlane.xlu0 %689
    %v691 = vmul.f32 %v690, %v685
    %v692 = vadd.f32 %v691, 1e-05
    %v693 = vrsqrt.pop %v692
    %v694 = vmul.f32 %v687, %v693
    %v695 = vld [vmem:[#allocation7] sm:$0x1]
    %v697 = vlaneseq
    %v698 = vshrl.u32 %v697, 7
    %v699 = vsub.s32 0, %v698
    %v700 = vrot.slane %v695, %v699
    %v702 = vmul.f32 %v694, %v700
    %v703 = vld [vmem:[#allocation9] sm:$0x1]
    %v705 = vlaneseq
    %v706 = vshrl.u32 %v705, 7
    %v707 = vsub.s32 0, %v706
    %v708 = vrot.slane %v703, %v707
    %v710 = vadd.f32 %v702, %v708
    %v711 = vmul.f32 %v710, 0.5
    %v712 = vmul.f32 %v710, 0.70710677
    %v713 = verf.f32.pop %v712
    %v714 = vadd.f32 %v713, 1.0
    %v715 = vmul.f32 %v711, %v714
    %v716 = vld [vmem:[#allocation10] sm:$0xff]
    %v717 = vld [vmem:[#allocation10 + $0x8] sm:$0xff]
    %v718 = vld [vmem:[#allocation10 + $0x10] sm:$0xff]
    %v719 = vld [vmem:[#allocation10 + $0x18] sm:$0xff]
    %v720 = vld [vmem:[#allocation10 + $0x20] sm:$0xff]
    %v721 = vld [vmem:[#allocation10 + $0x28] sm:$0xff]
    %v722 = vld [vmem:[#allocation10 + $0x30] sm:$0xff]
    %v723 = vld [vmem:[#allocation10 + $0x38] sm:$0xff]
    %v724 = vld [vmem:[#allocation10 + $0x40] sm:$0xff]
    %v725 = vld [vmem:[#allocation10 + $0x48] sm:$0xff]
    %v726 = vld [vmem:[#allocation10 + $0x50] sm:$0xff]
    %v727 = vld [vmem:[#allocation10 + $0x58] sm:$0xff]
    %v728 = vld [vmem:[#allocation10 + $0x60] sm:$0xff]
    %v729 = vld [vmem:[#allocation10 + $0x68] sm:$0xff]
    %v730 = vld [vmem:[#allocation10 + $0x70] sm:$0xff]
    %v731 = vld [vmem:[#allocation10 + $0x78] sm:$0xff]
    %v732 = vld [vmem:[#allocation12] sm:$0x1]
    %v734 = vlaneseq
    %v735 = vshrl.u32 %v734, 7
    %v736 = vsub.s32 0, %v735
    %v737 = vrot.slane %v732, %v736
    %739 = vmatprep.subr.mxu0 0.0
    %740 = vmatpush1.msra.mxu0 %v716
    %741 = vmatprep.subr.mxu0 0.0
    %742 = vmatpush1.msra.mxu0 %v717
    %743 = vmatprep.subr.mxu0 0.0
    %744 = vmatpush1.msra.mxu0 %v718
    %745 = vmatprep.subr.mxu0 0.0
    %746 = vmatpush1.msra.mxu0 %v719
    %747 = vmatprep.subr.mxu0 0.0
    %748 = vmatpush1.msra.mxu0 %v720
    %749 = vmatprep.subr.mxu0 0.0
    %750 = vmatpush1.msra.mxu0 %v721
    %751 = vmatprep.subr.mxu0 0.0
    %752 = vmatpush1.msra.mxu0 %v722
    %753 = vmatprep.subr.mxu0 0.0
    %754 = vmatpush1.msra.mxu0 %v723
    %755 = vmatprep.subr.mxu0 0.0
    %756 = vmatpush1.msra.mxu0 %v724
    %757 = vmatprep.subr.mxu0 0.0
    %758 = vmatpush1.msra.mxu0 %v725
    %759 = vmatprep.subr.mxu0 0.0
    %760 = vmatpush1.msra.mxu0 %v726
    %761 = vmatprep.subr.mxu0 0.0
    %762 = vmatpush1.msra.mxu0 %v727
    %763 = vmatprep.subr.mxu0 0.0
    %764 = vmatpush1.msra.mxu0 %v728
    %765 = vmatprep.subr.mxu0 0.0
    %766 = vmatpush1.msra.mxu0 %v729
    %767 = vmatprep.subr.mxu0 0.0
    %768 = vmatpush1.msra.mxu0 %v730
    %769 = vmatprep.subr.mxu0 0.0
    %770 = vmatpush1.msra.mxu0 %v731
    %771 = vmatprep.subr.mxu0 0.0
    %772 = vmatpush1.msra.mxu0 0.0
    %773 = vmatprep.subr.mxu0 0.0
    %774 = vmatpush1.msra.mxu0 0.0
    %775 = vmatprep.subr.mxu0 0.0
    %776 = vmatpush1.msra.mxu0 0.0
    %777 = vmatprep.subr.mxu0 0.0
    %778 = vmatpush1.msra.mxu0 0.0
    %779 = vmatprep.subr.mxu0 0.0
    %780 = vmatpush1.msra.mxu0 0.0
    %781 = vmatprep.subr.mxu0 0.0
    %782 = vmatpush1.msra.mxu0 0.0
    %783 = vmatprep.subr.mxu0 0.0
    %784 = vmatpush1.msra.mxu0 0.0
    %785 = vmatprep.subr.mxu0 0.0
    %786 = vmatpush1.msra.mxu0 0.0
    %787 = vmatprep.subr.mxu0 0.0
    %788 = vmatpush1.msra.mxu0 0.0
    %789 = vmatprep.subr.mxu0 0.0
    %790 = vmatpush1.msra.mxu0 0.0
    %791 = vmatprep.subr.mxu0 0.0
    %792 = vmatpush1.msra.mxu0 0.0
    %793 = vmatprep.subr.mxu0 0.0
    %794 = vmatpush1.msra.mxu0 0.0
    %795 = vmatprep.subr.mxu0 0.0
    %796 = vmatpush1.msra.mxu0 0.0
    %797 = vmatprep.subr.mxu0 0.0
    %798 = vmatpush1.msra.mxu0 0.0
    %799 = vmatprep.subr.mxu0 0.0
    %800 = vmatpush1.msra.mxu0 0.0
    %801 = vmatprep.subr.mxu0 0.0
    %802 = vmatpush1.msra.mxu0 0.0
    %803 = vmatprep.mubr.f32.mxu0 0.0
    %804 = vmatmul.mubr.f32.gmra.mrb[0].mxu0 %v715
    %v805 = vpop.f32.mrb[0].mxu0
    %v806 = vadd.f32 %v737, %v805
    %v807 = vpop.f32.mrb[0].mxu0
    %808 = vdwg.mxu0
    %v809 = vadd.f32 %v806, %v681
    %v810 = vmul.f32 %v809, 0.5
    %v811 = vmul.f32 %v809, 0.70710677
    %v812 = verf.f32.pop %v811
    %v813 = vadd.f32 %v812, 1.0
    %v814 = vmul.f32 %v810, %v813
    %v815 = vld [vmem:[#allocation13] sm:$0xff]
    %v816 = vld [vmem:[#allocation13 + $0x8] sm:$0xff]
    %v817 = vld [vmem:[#allocation13 + $0x10] sm:$0xff]
    %v818 = vld [vmem:[#allocation13 + $0x18] sm:$0xff]
    %v819 = vld [vmem:[#allocation13 + $0x20] sm:$0xff]
    %v820 = vld [vmem:[#allocation13 + $0x28] sm:$0xff]
    %v821 = vld [vmem:[#allocation13 + $0x30] sm:$0xff]
    %v822 = vld [vmem:[#allocation13 + $0x38] sm:$0xff]
    %v823 = vld [vmem:[#allocation13 + $0x40] sm:$0xff]
    %v824 = vld [vmem:[#allocation13 + $0x48] sm:$0xff]
    %v825 = vld [vmem:[#allocation13 + $0x50] sm:$0xff]
    %v826 = vld [vmem:[#allocation13 + $0x58] sm:$0xff]
    %v827 = vld [vmem:[#allocation13 + $0x60] sm:$0xff]
    %v828 = vld [vmem:[#allocation13 + $0x68] sm:$0xff]
    %v829 = vld [vmem:[#allocation13 + $0x70] sm:$0xff]
    %v830 = vld [vmem:[#allocation13 + $0x78] sm:$0xff]
    %v831 = vld [vmem:[#allocation13 + $0x80] sm:$0xff]
    %v832 = vld [vmem:[#allocation13 + $0x88] sm:$0xff]
    %v833 = vld [vmem:[#allocation13 + $0x90] sm:$0xff]
    %v834 = vld [vmem:[#allocation13 + $0x98] sm:$0xff]
    %v835 = vld [vmem:[#allocation13 + $0xa0] sm:$0xff]
    %v836 = vld [vmem:[#allocation13 + $0xa8] sm:$0xff]
    %v837 = vld [vmem:[#allocation13 + $0xb0] sm:$0xff]
    %v838 = vld [vmem:[#allocation13 + $0xb8] sm:$0xff]
    %v839 = vld [vmem:[#allocation13 + $0xc0] sm:$0xff]
    %v840 = vld [vmem:[#allocation13 + $0xc8] sm:$0xff]
    %v841 = vld [vmem:[#allocation13 + $0xd0] sm:$0xff]
    %v842 = vld [vmem:[#allocation13 + $0xd8] sm:$0xff]
    %v843 = vld [vmem:[#allocation13 + $0xe0] sm:$0xff]
    %v844 = vld [vmem:[#allocation13 + $0xe8] sm:$0xff]
    %v845 = vld [vmem:[#allocation13 + $0xf0] sm:$0xff]
    %v846 = vld [vmem:[#allocation13 + $0xf8] sm:$0xff]
    %v847 = vld [vmem:[#allocation13 + $0x100] sm:$0xff]
    %v848 = vld [vmem:[#allocation13 + $0x108] sm:$0xff]
    %v849 = vld [vmem:[#allocation13 + $0x110] sm:$0xff]
    %v850 = vld [vmem:[#allocation13 + $0x118] sm:$0xff]
    %v851 = vld [vmem:[#allocation13 + $0x120] sm:$0xff]
    %v852 = vld [vmem:[#allocation13 + $0x128] sm:$0xff]
    %v853 = vld [vmem:[#allocation13 + $0x130] sm:$0xff]
    %v854 = vld [vmem:[#allocation13 + $0x138] sm:$0xff]
    %v855 = vld [vmem:[#allocation13 + $0x140] sm:$0xff]
    %v856 = vld [vmem:[#allocation13 + $0x148] sm:$0xff]
    %v857 = vld [vmem:[#allocation13 + $0x150] sm:$0xff]
    %v858 = vld [vmem:[#allocation13 + $0x158] sm:$0xff]
    %v859 = vld [vmem:[#allocation13 + $0x160] sm:$0xff]
    %v860 = vld [vmem:[#allocation13 + $0x168] sm:$0xff]
    %v861 = vld [vmem:[#allocation13 + $0x170] sm:$0xff]
    %v862 = vld [vmem:[#allocation13 + $0x178] sm:$0xff]
    %v863 = vld [vmem:[#allocation13 + $0x180] sm:$0xff]
    %v864 = vld [vmem:[#allocation13 + $0x188] sm:$0xff]
    %v865 = vld [vmem:[#allocation13 + $0x190] sm:$0xff]
    %v866 = vld [vmem:[#allocation13 + $0x198] sm:$0xff]
    %v867 = vld [vmem:[#allocation13 + $0x1a0] sm:$0xff]
    %v868 = vld [vmem:[#allocation13 + $0x1a8] sm:$0xff]
    %v869 = vld [vmem:[#allocation13 + $0x1b0] sm:$0xff]
    %v870 = vld [vmem:[#allocation13 + $0x1b8] sm:$0xff]
    %v871 = vld [vmem:[#allocation13 + $0x1c0] sm:$0xff]
    %v872 = vld [vmem:[#allocation13 + $0x1c8] sm:$0xff]
    %v873 = vld [vmem:[#allocation13 + $0x1d0] sm:$0xff]
    %v874 = vld [vmem:[#allocation13 + $0x1d8] sm:$0xff]
    %v875 = vld [vmem:[#allocation13 + $0x1e0] sm:$0xff]
    %v876 = vld [vmem:[#allocation13 + $0x1e8] sm:$0xff]
    %v877 = vld [vmem:[#allocation13 + $0x1f0] sm:$0xff]
    %v878 = vld [vmem:[#allocation13 + $0x1f8] sm:$0xff]
    %v879 = vld [vmem:[#allocation15] sm:$0xf]
    %v881 = vlaneseq
    %v882 = vshrl.u32 %v881, 7
    %v883 = vsub.s32 0, %v882
    %v884 = vrot.slane %v879, %v883
    %v885 = vlaneseq
    %v886 = vshrl.u32 %v885, 7
    %v887 = vsub.s32 1, %v886
    %v888 = vrot.slane %v879, %v887
    %v889 = vlaneseq
    %v890 = vshrl.u32 %v889, 7
    %v891 = vsub.s32 2, %v890
    %v892 = vrot.slane %v879, %v891
    %v893 = vlaneseq
    %v894 = vshrl.u32 %v893, 7
    %v895 = vsub.s32 3, %v894
    %v896 = vrot.slane %v879, %v895
    %901 = vmatprep.subr.mxu0 %v816
    %902 = vmatpush1.msra.mxu0 %v815
    %903 = vmatprep.subr.mxu0 %v820
    %904 = vmatpush1.msra.mxu0 %v819
    %905 = vmatprep.subr.mxu0 %v824
    %906 = vmatpush1.msra.mxu0 %v823
    %907 = vmatprep.subr.mxu0 %v828
    %908 = vmatpush1.msra.mxu0 %v827
    %909 = vmatprep.subr.mxu0 %v832
    %910 = vmatpush1.msra.mxu0 %v831
    %911 = vmatprep.subr.mxu0 %v836
    %912 = vmatpush1.msra.mxu0 %v835
    %913 = vmatprep.subr.mxu0 %v840
    %914 = vmatpush1.msra.mxu0 %v839
    %915 = vmatprep.subr.mxu0 %v844
    %916 = vmatpush1.msra.mxu0 %v843
    %917 = vmatprep.subr.mxu0 %v848
    %918 = vmatpush1.msra.mxu0 %v847
    %919 = vmatprep.subr.mxu0 %v852
    %920 = vmatpush1.msra.mxu0 %v851
    %921 = vmatprep.subr.mxu0 %v856
    %922 = vmatpush1.msra.mxu0 %v855
    %923 = vmatprep.subr.mxu0 %v860
    %924 = vmatpush1.msra.mxu0 %v859
    %925 = vmatprep.subr.mxu0 %v864
    %926 = vmatpush1.msra.mxu0 %v863
    %927 = vmatprep.subr.mxu0 %v868
    %928 = vmatpush1.msra.mxu0 %v867
    %929 = vmatprep.subr.mxu0 %v872
    %930 = vmatpush1.msra.mxu0 %v871
    %931 = vmatprep.subr.mxu0 %v876
    %932 = vmatpush1.msra.mxu0 %v875
    %933 = vmatprep.subr.mxu0 0.0
    %934 = vmatpush1.msra.mxu0 0.0
    %935 = vmatprep.subr.mxu0 0.0
    %936 = vmatpush1.msra.mxu0 0.0
    %937 = vmatprep.subr.mxu0 0.0
    %938 = vmatpush1.msra.mxu0 0.0
    %939 = vmatprep.subr.mxu0 0.0
    %940 = vmatpush1.msra.mxu0 0.0
    %941 = vmatprep.subr.mxu0 0.0
    %942 = vmatpush1.msra.mxu0 0.0
    %943 = vmatprep.subr.mxu0 0.0
    %944 = vmatpush1.msra.mxu0 0.0
    %945 = vmatprep.subr.mxu0 0.0
    %946 = vmatpush1.msra.mxu0 0.0
    %947 = vmatprep.subr.mxu0 0.0
    %948 = vmatpush1.msra.mxu0 0.0
    %949 = vmatprep.subr.mxu0 0.0
    %950 = vmatpush1.msra.mxu0 0.0
    %951 = vmatprep.subr.mxu0 0.0
    %952 = vmatpush1.msra.mxu0 0.0
    %953 = vmatprep.subr.mxu0 0.0
    %954 = vmatpush1.msra.mxu0 0.0
    %955 = vmatprep.subr.mxu0 0.0
    %956 = vmatpush1.msra.mxu0 0.0
    %957 = vmatprep.subr.mxu0 0.0
    %958 = vmatpush1.msra.mxu0 0.0
    %959 = vmatprep.subr.mxu0 0.0
    %960 = vmatpush1.msra.mxu0 0.0
    %961 = vmatprep.subr.mxu0 0.0
    %962 = vmatpush1.msra.mxu0 0.0
    %963 = vmatprep.subr.mxu0 0.0
    %964 = vmatpush1.msra.mxu0 0.0
    %965 = vmatprep.mubr.f32.mxu0 0.0
    %966 = vmatmul.mubr.f32.gmra.mrb[0].mxu0 %v814
    %v967 = vpop.f32.mrb[0].mxu0
    %v968 = vadd.f32 %v884, %v967
    %v969 = vpop.f32.mrb[0].mxu0
    %v970 = vadd.f32 %v888, %v969
    %971 = vdwg.mxu0
    %972 = vmatprep.subr.mxu0 %v818
    %973 = vmatpush1.msra.mxu0 %v817
    %974 = vmatprep.subr.mxu0 %v822
    %975 = vmatpush1.msra.mxu0 %v821
    %976 = vmatprep.subr.mxu0 %v826
    %977 = vmatpush1.msra.mxu0 %v825
    %978 = vmatprep.subr.mxu0 %v830
    %979 = vmatpush1.msra.mxu0 %v829
    %980 = vmatprep.subr.mxu0 %v834
    %981 = vmatpush1.msra.mxu0 %v833
    %982 = vmatprep.subr.mxu0 %v838
    %983 = vmatpush1.msra.mxu0 %v837
    %984 = vmatprep.subr.mxu0 %v842
    %985 = vmatpush1.msra.mxu0 %v841
    %986 = vmatprep.subr.mxu0 %v846
    %987 = vmatpush1.msra.mxu0 %v845
    %988 = vmatprep.subr.mxu0 %v850
    %989 = vmatpush1.msra.mxu0 %v849
    %990 = vmatprep.subr.mxu0 %v854
    %991 = vmatpush1.msra.mxu0 %v853
    %992 = vmatprep.subr.mxu0 %v858
    %993 = vmatpush1.msra.mxu0 %v857
    %994 = vmatprep.subr.mxu0 %v862
    %995 = vmatpush1.msra.mxu0 %v861
    %996 = vmatprep.subr.mxu0 %v866
    %997 = vmatpush1.msra.mxu0 %v865
    %998 = vmatprep.subr.mxu0 %v870
    %999 = vmatpush1.msra.mxu0 %v869
    %1000 = vmatprep.subr.mxu0 %v874
    %1001 = vmatpush1.msra.mxu0 %v873
    %1002 = vmatprep.subr.mxu0 %v878
    %1003 = vmatpush1.msra.mxu0 %v877
    %1004 = vmatprep.subr.mxu0 0.0
    %1005 = vmatpush1.msra.mxu0 0.0
    %1006 = vmatprep.subr.mxu0 0.0
    %1007 = vmatpush1.msra.mxu0 0.0
    %1008 = vmatprep.subr.mxu0 0.0
    %1009 = vmatpush1.msra.mxu0 0.0
    %1010 = vmatprep.subr.mxu0 0.0
    %1011 = vmatpush1.msra.mxu0 0.0
    %1012 = vmatprep.subr.mxu0 0.0
    %1013 = vmatpush1.msra.mxu0 0.0
    %1014 = vmatprep.subr.mxu0 0.0
    %1015 = vmatpush1.msra.mxu0 0.0
    %1016 = vmatprep.subr.mxu0 0.0
    %1017 = vmatpush1.msra.mxu0 0.0
    %1018 = vmatprep.subr.mxu0 0.0
    %1019 = vmatpush1.msra.mxu0 0.0
    %1020 = vmatprep.subr.mxu0 0.0
    %1021 = vmatpush1.msra.mxu0 0.0
    %1022 = vmatprep.subr.mxu0 0.0
    %1023 = vmatpush1.msra.mxu0 0.0
    %1024 = vmatprep.subr.mxu0 0.0
    %1025 = vmatpush1.msra.mxu0 0.0
    %1026 = vmatprep.subr.mxu0 0.0
    %1027 = vmatpush1.msra.mxu0 0.0
    %1028 = vmatprep.subr.mxu0 0.0
    %1029 = vmatpush1.msra.mxu0 0.0
    %1030 = vmatprep.subr.mxu0 0.0
    %1031 = vmatpush1.msra.mxu0 0.0
    %1032 = vmatprep.subr.mxu0 0.0
    %1033 = vmatpush1.msra.mxu0 0.0
    %1034 = vmatprep.subr.mxu0 0.0
    %1035 = vmatpush1.msra.mxu0 0.0
    %1036 = vmatprep.mubr.f32.mxu0 0.0
    %1037 = vmatmul.mubr.f32.gmra.mrb[0].mxu0 %v814
    %v1038 = vpop.f32.mrb[0].mxu0
    %v1039 = vadd.f32 %v892, %v1038
    %v1040 = vpop.f32.mrb[0].mxu0
    %v1041 = vadd.f32 %v896, %v1040
    %1042 = vdwg.mxu0
    %v1043 = vadd.f32 %v968, %v970
    %1044 = vadd.xlane.f32.xlu0 %v1043
    %v1045 = vpop.xlane.xlu0 %1044
    %v1046 = vrcp.pop 256.0
    %v1047 = vmul.f32 %v1045, %v1046
    %v1048 = vsub.f32 %v968, %v1047
    %v1049 = vsub.f32 %v970, %v1047
    %v1050 = vmul.f32 %v1048, %v1048
    %v1051 = vmul.f32 %v1049, %v1049
    %v1052 = vadd.f32 %v1050, %v1051
    %1053 = vadd.xlane.f32.xlu0 %v1052
    %v1054 = vpop.xlane.xlu0 %1053
    %v1055 = vmul.f32 %v1054, %v1046
    %v1056 = vadd.f32 %v1055, 1e-05
    %v1057 = vrsqrt.pop %v1056
    %v1058 = vmul.f32 %v1048, %v1057
    %v1059 = vmul.f32 %v1049, %v1057
    %v1060 = vld [vmem:[#allocation16] sm:$0x3]
    %v1062 = vlaneseq
    %v1063 = vshrl.u32 %v1062, 7
    %v1064 = vsub.s32 0, %v1063
    %v1065 = vrot.slane %v1060, %v1064
    %v1066 = vlaneseq
    %v1067 = vshrl.u32 %v1066, 7
    %v1068 = vsub.s32 1, %v1067
    %v1069 = vrot.slane %v1060, %v1068
    %v1072 = vmul.f32 %v1058, %v1065
    %v1073 = vmul.f32 %v1059, %v1069
    %v1074 = vld [vmem:[#allocation18] sm:$0x3]
    %v1076 = vlaneseq
    %v1077 = vshrl.u32 %v1076, 7
    %v1078 = vsub.s32 0, %v1077
    %v1079 = vrot.slane %v1074, %v1078
    %v1080 = vlaneseq
    %v1081 = vshrl.u32 %v1080, 7
    %v1082 = vsub.s32 1, %v1081
    %v1083 = vrot.slane %v1074, %v1082
    %v1086 = vadd.f32 %v1072, %v1079
    %v1087 = vadd.f32 %v1073, %v1083
    %v1088 = vmul.f32 %v1086, 0.5
    %v1089 = vmul.f32 %v1087, 0.5
    %v1090 = vmul.f32 %v1086, 0.70710677
    %v1091 = vmul.f32 %v1087, 0.70710677
    %v1092 = verf.f32.pop %v1090
    %v1093 = verf.f32.pop %v1091
    %v1094 = vadd.f32 %v1092, 1.0
    %v1095 = vadd.f32 %v1093, 1.0
    %v1096 = vmul.f32 %v1088, %v1094
    %v1097 = vmul.f32 %v1089, %v1095
    %v1098 = vld [vmem:[#allocation19] sm:$0xff]
    %v1099 = vld [vmem:[#allocation19 + $0x8] sm:$0xff]
    %v1100 = vld [vmem:[#allocation19 + $0x10] sm:$0xff]
    %v1101 = vld [vmem:[#allocation19 + $0x18] sm:$0xff]
    %v1102 = vld [vmem:[#allocation19 + $0x20] sm:$0xff]
    %v1103 = vld [vmem:[#allocation19 + $0x28] sm:$0xff]
    %v1104 = vld [vmem:[#allocation19 + $0x30] sm:$0xff]
    %v1105 = vld [vmem:[#allocation19 + $0x38] sm:$0xff]
    %v1106 = vld [vmem:[#allocation19 + $0x40] sm:$0xff]
    %v1107 = vld [vmem:[#allocation19 + $0x48] sm:$0xff]
    %v1108 = vld [vmem:[#allocation19 + $0x50] sm:$0xff]
    %v1109 = vld [vmem:[#allocation19 + $0x58] sm:$0xff]
    %v1110 = vld [vmem:[#allocation19 + $0x60] sm:$0xff]
    %v1111 = vld [vmem:[#allocation19 + $0x68] sm:$0xff]
    %v1112 = vld [vmem:[#allocation19 + $0x70] sm:$0xff]
    %v1113 = vld [vmem:[#allocation19 + $0x78] sm:$0xff]
    %v1114 = vld [vmem:[#allocation19 + $0x80] sm:$0xff]
    %v1115 = vld [vmem:[#allocation19 + $0x88] sm:$0xff]
    %v1116 = vld [vmem:[#allocation19 + $0x90] sm:$0xff]
    %v1117 = vld [vmem:[#allocation19 + $0x98] sm:$0xff]
    %v1118 = vld [vmem:[#allocation19 + $0xa0] sm:$0xff]
    %v1119 = vld [vmem:[#allocation19 + $0xa8] sm:$0xff]
    %v1120 = vld [vmem:[#allocation19 + $0xb0] sm:$0xff]
    %v1121 = vld [vmem:[#allocation19 + $0xb8] sm:$0xff]
    %v1122 = vld [vmem:[#allocation19 + $0xc0] sm:$0xff]
    %v1123 = vld [vmem:[#allocation19 + $0xc8] sm:$0xff]
    %v1124 = vld [vmem:[#allocation19 + $0xd0] sm:$0xff]
    %v1125 = vld [vmem:[#allocation19 + $0xd8] sm:$0xff]
    %v1126 = vld [vmem:[#allocation19 + $0xe0] sm:$0xff]
    %v1127 = vld [vmem:[#allocation19 + $0xe8] sm:$0xff]
    %v1128 = vld [vmem:[#allocation19 + $0xf0] sm:$0xff]
    %v1129 = vld [vmem:[#allocation19 + $0xf8] sm:$0xff]
    %v1130 = vld [vmem:[#allocation19 + $0x100] sm:$0xff]
    %v1131 = vld [vmem:[#allocation19 + $0x108] sm:$0xff]
    %v1132 = vld [vmem:[#allocation19 + $0x110] sm:$0xff]
    %v1133 = vld [vmem:[#allocation19 + $0x118] sm:$0xff]
    %v1134 = vld [vmem:[#allocation19 + $0x120] sm:$0xff]
    %v1135 = vld [vmem:[#allocation19 + $0x128] sm:$0xff]
    %v1136 = vld [vmem:[#allocation19 + $0x130] sm:$0xff]
    %v1137 = vld [vmem:[#allocation19 + $0x138] sm:$0xff]
    %v1138 = vld [vmem:[#allocation19 + $0x140] sm:$0xff]
    %v1139 = vld [vmem:[#allocation19 + $0x148] sm:$0xff]
    %v1140 = vld [vmem:[#allocation19 + $0x150] sm:$0xff]
    %v1141 = vld [vmem:[#allocation19 + $0x158] sm:$0xff]
    %v1142 = vld [vmem:[#allocation19 + $0x160] sm:$0xff]
    %v1143 = vld [vmem:[#allocation19 + $0x168] sm:$0xff]
    %v1144 = vld [vmem:[#allocation19 + $0x170] sm:$0xff]
    %v1145 = vld [vmem:[#allocation19 + $0x178] sm:$0xff]
    %v1146 = vld [vmem:[#allocation19 + $0x180] sm:$0xff]
    %v1147 = vld [vmem:[#allocation19 + $0x188] sm:$0xff]
    %v1148 = vld [vmem:[#allocation19 + $0x190] sm:$0xff]
    %v1149 = vld [vmem:[#allocation19 + $0x198] sm:$0xff]
    %v1150 = vld [vmem:[#allocation19 + $0x1a0] sm:$0xff]
    %v1151 = vld [vmem:[#allocation19 + $0x1a8] sm:$0xff]
    %v1152 = vld [vmem:[#allocation19 + $0x1b0] sm:$0xff]
    %v1153 = vld [vmem:[#allocation19 + $0x1b8] sm:$0xff]
    %v1154 = vld [vmem:[#allocation19 + $0x1c0] sm:$0xff]
    %v1155 = vld [vmem:[#allocation19 + $0x1c8] sm:$0xff]
    %v1156 = vld [vmem:[#allocation19 + $0x1d0] sm:$0xff]
    %v1157 = vld [vmem:[#allocation19 + $0x1d8] sm:$0xff]
    %v1158 = vld [vmem:[#allocation19 + $0x1e0] sm:$0xff]
    %v1159 = vld [vmem:[#allocation19 + $0x1e8] sm:$0xff]
    %v1160 = vld [vmem:[#allocation19 + $0x1f0] sm:$0xff]
    %v1161 = vld [vmem:[#allocation19 + $0x1f8] sm:$0xff]
    %v1162 = vld [vmem:[#allocation21] sm:$0x3]
    %v1164 = vlaneseq
    %v1165 = vshrl.u32 %v1164, 7
    %v1166 = vsub.s32 0, %v1165
    %v1167 = vrot.slane %v1162, %v1166
    %v1168 = vlaneseq
    %v1169 = vshrl.u32 %v1168, 7
    %v1170 = vsub.s32 1, %v1169
    %v1171 = vrot.slane %v1162, %v1170
    %1174 = vmatprep.subr.mxu0 %v1099
    %1175 = vmatpush1.msra.mxu0 %v1098
    %1176 = vmatprep.subr.mxu0 %v1101
    %1177 = vmatpush1.msra.mxu0 %v1100
    %1178 = vmatprep.subr.mxu0 %v1103
    %1179 = vmatpush1.msra.mxu0 %v1102
    %1180 = vmatprep.subr.mxu0 %v1105
    %1181 = vmatpush1.msra.mxu0 %v1104
    %1182 = vmatprep.subr.mxu0 %v1107
    %1183 = vmatpush1.msra.mxu0 %v1106
    %1184 = vmatprep.subr.mxu0 %v1109
    %1185 = vmatpush1.msra.mxu0 %v1108
    %1186 = vmatprep.subr.mxu0 %v1111
    %1187 = vmatpush1.msra.mxu0 %v1110
    %1188 = vmatprep.subr.mxu0 %v1113
    %1189 = vmatpush1.msra.mxu0 %v1112
    %1190 = vmatprep.subr.mxu0 %v1115
    %1191 = vmatpush1.msra.mxu0 %v1114
    %1192 = vmatprep.subr.mxu0 %v1117
    %1193 = vmatpush1.msra.mxu0 %v1116
    %1194 = vmatprep.subr.mxu0 %v1119
    %1195 = vmatpush1.msra.mxu0 %v1118
    %1196 = vmatprep.subr.mxu0 %v1121
    %1197 = vmatpush1.msra.mxu0 %v1120
    %1198 = vmatprep.subr.mxu0 %v1123
    %1199 = vmatpush1.msra.mxu0 %v1122
    %1200 = vmatprep.subr.mxu0 %v1125
    %1201 = vmatpush1.msra.mxu0 %v1124
    %1202 = vmatprep.subr.mxu0 %v1127
    %1203 = vmatpush1.msra.mxu0 %v1126
    %1204 = vmatprep.subr.mxu0 %v1129
    %1205 = vmatpush1.msra.mxu0 %v1128
    %1206 = vmatprep.subr.mxu0 %v1131
    %1207 = vmatpush1.msra.mxu0 %v1130
    %1208 = vmatprep.subr.mxu0 %v1133
    %1209 = vmatpush1.msra.mxu0 %v1132
    %1210 = vmatprep.subr.mxu0 %v1135
    %1211 = vmatpush1.msra.mxu0 %v1134
    %1212 = vmatprep.subr.mxu0 %v1137
    %1213 = vmatpush1.msra.mxu0 %v1136
    %1214 = vmatprep.subr.mxu0 %v1139
    %1215 = vmatpush1.msra.mxu0 %v1138
    %1216 = vmatprep.subr.mxu0 %v1141
    %1217 = vmatpush1.msra.mxu0 %v1140
    %1218 = vmatprep.subr.mxu0 %v1143
    %1219 = vmatpush1.msra.mxu0 %v1142
    %1220 = vmatprep.subr.mxu0 %v1145
    %1221 = vmatpush1.msra.mxu0 %v1144
    %1222 = vmatprep.subr.mxu0 %v1147
    %1223 = vmatpush1.msra.mxu0 %v1146
    %1224 = vmatprep.subr.mxu0 %v1149
    %1225 = vmatpush1.msra.mxu0 %v1148
    %1226 = vmatprep.subr.mxu0 %v1151
    %1227 = vmatpush1.msra.mxu0 %v1150
    %1228 = vmatprep.subr.mxu0 %v1153
    %1229 = vmatpush1.msra.mxu0 %v1152
    %1230 = vmatprep.subr.mxu0 %v1155
    %1231 = vmatpush1.msra.mxu0 %v1154
    %1232 = vmatprep.subr.mxu0 %v1157
    %1233 = vmatpush1.msra.mxu0 %v1156
    %1234 = vmatprep.subr.mxu0 %v1159
    %1235 = vmatpush1.msra.mxu0 %v1158
    %1236 = vmatprep.subr.mxu0 %v1161
    %1237 = vmatpush1.msra.mxu0 %v1160
    %1238 = vmatprep.mubr.f32.mxu0 %v1097
    %1239 = vmatmul.mubr.f32.gmra.mrb[0].mxu0 %v1096
    %v1240 = vpop.f32.mrb[0].mxu0
    %v1241 = vadd.f32 %v1167, %v1240
    %v1242 = vpop.f32.mrb[0].mxu0
    %v1243 = vadd.f32 %v1171, %v1242
    %1244 = vdwg.mxu0
    %v1245 = vadd.f32 %v1241, %v1039
    %v1246 = vadd.f32 %v1243, %v1041
    %v1247 = vmul.f32 %v1245, 0.5
    %v1248 = vmul.f32 %v1246, 0.5
    %v1249 = vmul.f32 %v1245, 0.70710677
    %v1250 = vmul.f32 %v1246, 0.70710677
    %v1251 = verf.f32.pop %v1249
    %v1252 = verf.f32.pop %v1250
    %v1253 = vadd.f32 %v1251, 1.0
    %v1254 = vadd.f32 %v1252, 1.0
    %v1255 = vmul.f32 %v1247, %v1253
    %v1256 = vmul.f32 %v1248, %v1254
    %v1257 = vld [vmem:[#allocation22] sm:$0xff]
    %v1258 = vld [vmem:[#allocation22 + $0x8] sm:$0xff]
    %v1259 = vld [vmem:[#allocation22 + $0x10] sm:$0xff]
    %v1260 = vld [vmem:[#allocation22 + $0x18] sm:$0xff]
    %v1261 = vld [vmem:[#allocation22 + $0x20] sm:$0xff]
    %v1262 = vld [vmem:[#allocation22 + $0x28] sm:$0xff]
    %v1263 = vld [vmem:[#allocation22 + $0x30] sm:$0xff]
    %v1264 = vld [vmem:[#allocation22 + $0x38] sm:$0xff]
    %v1265 = vld [vmem:[#allocation22 + $0x40] sm:$0xff]
    %v1266 = vld [vmem:[#allocation22 + $0x48] sm:$0xff]
    %v1267 = vld [vmem:[#allocation22 + $0x50] sm:$0xff]
    %v1268 = vld [vmem:[#allocation22 + $0x58] sm:$0xff]
    %v1269 = vld [vmem:[#allocation22 + $0x60] sm:$0xff]
    %v1270 = vld [vmem:[#allocation22 + $0x68] sm:$0xff]
    %v1271 = vld [vmem:[#allocation22 + $0x70] sm:$0xff]
    %v1272 = vld [vmem:[#allocation22 + $0x78] sm:$0xff]
    %v1273 = vld [vmem:[#allocation22 + $0x80] sm:$0xff]
    %v1274 = vld [vmem:[#allocation22 + $0x88] sm:$0xff]
    %v1275 = vld [vmem:[#allocation22 + $0x90] sm:$0xff]
    %v1276 = vld [vmem:[#allocation22 + $0x98] sm:$0xff]
    %v1277 = vld [vmem:[#allocation22 + $0xa0] sm:$0xff]
    %v1278 = vld [vmem:[#allocation22 + $0xa8] sm:$0xff]
    %v1279 = vld [vmem:[#allocation22 + $0xb0] sm:$0xff]
    %v1280 = vld [vmem:[#allocation22 + $0xb8] sm:$0xff]
    %v1281 = vld [vmem:[#allocation22 + $0xc0] sm:$0xff]
    %v1282 = vld [vmem:[#allocation22 + $0xc8] sm:$0xff]
    %v1283 = vld [vmem:[#allocation22 + $0xd0] sm:$0xff]
    %v1284 = vld [vmem:[#allocation22 + $0xd8] sm:$0xff]
    %v1285 = vld [vmem:[#allocation22 + $0xe0] sm:$0xff]
    %v1286 = vld [vmem:[#allocation22 + $0xe8] sm:$0xff]
    %v1287 = vld [vmem:[#allocation22 + $0xf0] sm:$0xff]
    %v1288 = vld [vmem:[#allocation22 + $0xf8] sm:$0xff]
    %v1289 = vld [vmem:[#allocation22 + $0x100] sm:$0xff]
    %v1290 = vld [vmem:[#allocation22 + $0x108] sm:$0xff]
    %v1291 = vld [vmem:[#allocation22 + $0x110] sm:$0xff]
    %v1292 = vld [vmem:[#allocation22 + $0x118] sm:$0xff]
    %v1293 = vld [vmem:[#allocation22 + $0x120] sm:$0xff]
    %v1294 = vld [vmem:[#allocation22 + $0x128] sm:$0xff]
    %v1295 = vld [vmem:[#allocation22 + $0x130] sm:$0xff]
    %v1296 = vld [vmem:[#allocation22 + $0x138] sm:$0xff]
    %v1297 = vld [vmem:[#allocation22 + $0x140] sm:$0xff]
    %v1298 = vld [vmem:[#allocation22 + $0x148] sm:$0xff]
    %v1299 = vld [vmem:[#allocation22 + $0x150] sm:$0xff]
    %v1300 = vld [vmem:[#allocation22 + $0x158] sm:$0xff]
    %v1301 = vld [vmem:[#allocation22 + $0x160] sm:$0xff]
    %v1302 = vld [vmem:[#allocation22 + $0x168] sm:$0xff]
    %v1303 = vld [vmem:[#allocation22 + $0x170] sm:$0xff]
    %v1304 = vld [vmem:[#allocation22 + $0x178] sm:$0xff]
    %v1305 = vld [vmem:[#allocation22 + $0x180] sm:$0xff]
    %v1306 = vld [vmem:[#allocation22 + $0x188] sm:$0xff]
    %v1307 = vld [vmem:[#allocation22 + $0x190] sm:$0xff]
    %v1308 = vld [vmem:[#allocation22 + $0x198] sm:$0xff]
    %v1309 = vld [vmem:[#allocation22 + $0x1a0] sm:$0xff]
    %v1310 = vld [vmem:[#allocation22 + $0x1a8] sm:$0xff]
    %v1311 = vld [vmem:[#allocation22 + $0x1b0] sm:$0xff]
    %v1312 = vld [vmem:[#allocation22 + $0x1b8] sm:$0xff]
    %v1313 = vld [vmem:[#allocation22 + $0x1c0] sm:$0xff]
    %v1314 = vld [vmem:[#allocation22 + $0x1c8] sm:$0xff]
    %v1315 = vld [vmem:[#allocation22 + $0x1d0] sm:$0xff]
    %v1316 = vld [vmem:[#allocation22 + $0x1d8] sm:$0xff]
    %v1317 = vld [vmem:[#allocation22 + $0x1e0] sm:$0xff]
    %v1318 = vld [vmem:[#allocation22 + $0x1e8] sm:$0xff]
    %v1319 = vld [vmem:[#allocation22 + $0x1f0] sm:$0xff]
    %v1320 = vld [vmem:[#allocation22 + $0x1f8] sm:$0xff]
    %v1321 = vld [vmem:[#allocation22 + $0x200] sm:$0xff]
    %v1322 = vld [vmem:[#allocation22 + $0x208] sm:$0xff]
    %v1323 = vld [vmem:[#allocation22 + $0x210] sm:$0xff]
    %v1324 = vld [vmem:[#allocation22 + $0x218] sm:$0xff]
    %v1325 = vld [vmem:[#allocation22 + $0x220] sm:$0xff]
    %v1326 = vld [vmem:[#allocation22 + $0x228] sm:$0xff]
    %v1327 = vld [vmem:[#allocation22 + $0x230] sm:$0xff]
    %v1328 = vld [vmem:[#allocation22 + $0x238] sm:$0xff]
    %v1329 = vld [vmem:[#allocation22 + $0x240] sm:$0xff]
    %v1330 = vld [vmem:[#allocation22 + $0x248] sm:$0xff]
    %v1331 = vld [vmem:[#allocation22 + $0x250] sm:$0xff]
    %v1332 = vld [vmem:[#allocation22 + $0x258] sm:$0xff]
    %v1333 = vld [vmem:[#allocation22 + $0x260] sm:$0xff]
    %v1334 = vld [vmem:[#allocation22 + $0x268] sm:$0xff]
    %v1335 = vld [vmem:[#allocation22 + $0x270] sm:$0xff]
    %v1336 = vld [vmem:[#allocation22 + $0x278] sm:$0xff]
    %v1337 = vld [vmem:[#allocation22 + $0x280] sm:$0xff]
    %v1338 = vld [vmem:[#allocation22 + $0x288] sm:$0xff]
    %v1339 = vld [vmem:[#allocation22 + $0x290] sm:$0xff]
    %v1340 = vld [vmem:[#allocation22 + $0x298] sm:$0xff]
    %v1341 = vld [vmem:[#allocation22 + $0x2a0] sm:$0xff]
    %v1342 = vld [vmem:[#allocation22 + $0x2a8] sm:$0xff]
    %v1343 = vld [vmem:[#allocation22 + $0x2b0] sm:$0xff]
    %v1344 = vld [vmem:[#allocation22 + $0x2b8] sm:$0xff]
    %v1345 = vld [vmem:[#allocation22 + $0x2c0] sm:$0xff]
    %v1346 = vld [vmem:[#allocation22 + $0x2c8] sm:$0xff]
    %v1347 = vld [vmem:[#allocation22 + $0x2d0] sm:$0xff]
    %v1348 = vld [vmem:[#allocation22 + $0x2d8] sm:$0xff]
    %v1349 = vld [vmem:[#allocation22 + $0x2e0] sm:$0xff]
    %v1350 = vld [vmem:[#allocation22 + $0x2e8] sm:$0xff]
    %v1351 = vld [vmem:[#allocation22 + $0x2f0] sm:$0xff]
    %v1352 = vld [vmem:[#allocation22 + $0x2f8] sm:$0xff]
    %v1353 = vld [vmem:[#allocation22 + $0x300] sm:$0xff]
    %v1354 = vld [vmem:[#allocation22 + $0x308] sm:$0xff]
    %v1355 = vld [vmem:[#allocation22 + $0x310] sm:$0xff]
    %v1356 = vld [vmem:[#allocation22 + $0x318] sm:$0xff]
    %v1357 = vld [vmem:[#allocation22 + $0x320] sm:$0xff]
    %v1358 = vld [vmem:[#allocation22 + $0x328] sm:$0xff]
    %v1359 = vld [vmem:[#allocation22 + $0x330] sm:$0xff]
    %v1360 = vld [vmem:[#allocation22 + $0x338] sm:$0xff]
    %v1361 = vld [vmem:[#allocation22 + $0x340] sm:$0xff]
    %v1362 = vld [vmem:[#allocation22 + $0x348] sm:$0xff]
    %v1363 = vld [vmem:[#allocation22 + $0x350] sm:$0xff]
    %v1364 = vld [vmem:[#allocation22 + $0x358] sm:$0xff]
    %v1365 = vld [vmem:[#allocation22 + $0x360] sm:$0xff]
    %v1366 = vld [vmem:[#allocation22 + $0x368] sm:$0xff]
    %v1367 = vld [vmem:[#allocation22 + $0x370] sm:$0xff]
    %v1368 = vld [vmem:[#allocation22 + $0x378] sm:$0xff]
    %v1369 = vld [vmem:[#allocation22 + $0x380] sm:$0xff]
    %v1370 = vld [vmem:[#allocation22 + $0x388] sm:$0xff]
    %v1371 = vld [vmem:[#allocation22 + $0x390] sm:$0xff]
    %v1372 = vld [vmem:[#allocation22 + $0x398] sm:$0xff]
    %v1373 = vld [vmem:[#allocation22 + $0x3a0] sm:$0xff]
    %v1374 = vld [vmem:[#allocation22 + $0x3a8] sm:$0xff]
    %v1375 = vld [vmem:[#allocation22 + $0x3b0] sm:$0xff]
    %v1376 = vld [vmem:[#allocation22 + $0x3b8] sm:$0xff]
    %v1377 = vld [vmem:[#allocation22 + $0x3c0] sm:$0xff]
    %v1378 = vld [vmem:[#allocation22 + $0x3c8] sm:$0xff]
    %v1379 = vld [vmem:[#allocation22 + $0x3d0] sm:$0xff]
    %v1380 = vld [vmem:[#allocation22 + $0x3d8] sm:$0xff]
    %v1381 = vld [vmem:[#allocation22 + $0x3e0] sm:$0xff]
    %v1382 = vld [vmem:[#allocation22 + $0x3e8] sm:$0xff]
    %v1383 = vld [vmem:[#allocation22 + $0x3f0] sm:$0xff]
    %v1384 = vld [vmem:[#allocation22 + $0x3f8] sm:$0xff]
    %v1385 = vld [vmem:[#allocation22 + $0x400] sm:$0xff]
    %v1386 = vld [vmem:[#allocation22 + $0x408] sm:$0xff]
    %v1387 = vld [vmem:[#allocation22 + $0x410] sm:$0xff]
    %v1388 = vld [vmem:[#allocation22 + $0x418] sm:$0xff]
    %v1389 = vld [vmem:[#allocation22 + $0x420] sm:$0xff]
    %v1390 = vld [vmem:[#allocation22 + $0x428] sm:$0xff]
    %v1391 = vld [vmem:[#allocation22 + $0x430] sm:$0xff]
    %v1392 = vld [vmem:[#allocation22 + $0x438] sm:$0xff]
    %v1393 = vld [vmem:[#allocation22 + $0x440] sm:$0xff]
    %v1394 = vld [vmem:[#allocation22 + $0x448] sm:$0xff]
    %v1395 = vld [vmem:[#allocation22 + $0x450] sm:$0xff]
    %v1396 = vld [vmem:[#allocation22 + $0x458] sm:$0xff]
    %v1397 = vld [vmem:[#allocation22 + $0x460] sm:$0xff]
    %v1398 = vld [vmem:[#allocation22 + $0x468] sm:$0xff]
    %v1399 = vld [vmem:[#allocation22 + $0x470] sm:$0xff]
    %v1400 = vld [vmem:[#allocation22 + $0x478] sm:$0xff]
    %v1401 = vld [vmem:[#allocation22 + $0x480] sm:$0xff]
    %v1402 = vld [vmem:[#allocation22 + $0x488] sm:$0xff]
    %v1403 = vld [vmem:[#allocation22 + $0x490] sm:$0xff]
    %v1404 = vld [vmem:[#allocation22 + $0x498] sm:$0xff]
    %v1405 = vld [vmem:[#allocation22 + $0x4a0] sm:$0xff]
    %v1406 = vld [vmem:[#allocation22 + $0x4a8] sm:$0xff]
    %v1407 = vld [vmem:[#allocation22 + $0x4b0] sm:$0xff]
    %v1408 = vld [vmem:[#allocation22 + $0x4b8] sm:$0xff]
    %v1409 = vld [vmem:[#allocation22 + $0x4c0] sm:$0xff]
    %v1410 = vld [vmem:[#allocation22 + $0x4c8] sm:$0xff]
    %v1411 = vld [vmem:[#allocation22 + $0x4d0] sm:$0xff]
    %v1412 = vld [vmem:[#allocation22 + $0x4d8] sm:$0xff]
    %v1413 = vld [vmem:[#allocation22 + $0x4e0] sm:$0xff]
    %v1414 = vld [vmem:[#allocation22 + $0x4e8] sm:$0xff]
    %v1415 = vld [vmem:[#allocation22 + $0x4f0] sm:$0xff]
    %v1416 = vld [vmem:[#allocation22 + $0x4f8] sm:$0xff]
    %v1417 = vld [vmem:[#allocation22 + $0x500] sm:$0xff]
    %v1418 = vld [vmem:[#allocation22 + $0x508] sm:$0xff]
    %v1419 = vld [vmem:[#allocation22 + $0x510] sm:$0xff]
    %v1420 = vld [vmem:[#allocation22 + $0x518] sm:$0xff]
    %v1421 = vld [vmem:[#allocation22 + $0x520] sm:$0xff]
    %v1422 = vld [vmem:[#allocation22 + $0x528] sm:$0xff]
    %v1423 = vld [vmem:[#allocation22 + $0x530] sm:$0xff]
    %v1424 = vld [vmem:[#allocation22 + $0x538] sm:$0xff]
    %v1425 = vld [vmem:[#allocation22 + $0x540] sm:$0xff]
    %v1426 = vld [vmem:[#allocation22 + $0x548] sm:$0xff]
    %v1427 = vld [vmem:[#allocation22 + $0x550] sm:$0xff]
    %v1428 = vld [vmem:[#allocation22 + $0x558] sm:$0xff]
    %v1429 = vld [vmem:[#allocation22 + $0x560] sm:$0xff]
    %v1430 = vld [vmem:[#allocation22 + $0x568] sm:$0xff]
    %v1431 = vld [vmem:[#allocation22 + $0x570] sm:$0xff]
    %v1432 = vld [vmem:[#allocation22 + $0x578] sm:$0xff]
    %v1433 = vld [vmem:[#allocation22 + $0x580] sm:$0xff]
    %v1434 = vld [vmem:[#allocation22 + $0x588] sm:$0xff]
    %v1435 = vld [vmem:[#allocation22 + $0x590] sm:$0xff]
    %v1436 = vld [vmem:[#allocation22 + $0x598] sm:$0xff]
    %v1437 = vld [vmem:[#allocation22 + $0x5a0] sm:$0xff]
    %v1438 = vld [vmem:[#allocation22 + $0x5a8] sm:$0xff]
    %v1439 = vld [vmem:[#allocation22 + $0x5b0] sm:$0xff]
    %v1440 = vld [vmem:[#allocation22 + $0x5b8] sm:$0xff]
    %v1441 = vld [vmem:[#allocation22 + $0x5c0] sm:$0xff]
    %v1442 = vld [vmem:[#allocation22 + $0x5c8] sm:$0xff]
    %v1443 = vld [vmem:[#allocation22 + $0x5d0] sm:$0xff]
    %v1444 = vld [vmem:[#allocation22 + $0x5d8] sm:$0xff]
    %v1445 = vld [vmem:[#allocation22 + $0x5e0] sm:$0xff]
    %v1446 = vld [vmem:[#allocation22 + $0x5e8] sm:$0xff]
    %v1447 = vld [vmem:[#allocation22 + $0x5f0] sm:$0xff]
    %v1448 = vld [vmem:[#allocation22 + $0x5f8] sm:$0xff]
    %v1449 = vld [vmem:[#allocation22 + $0x600] sm:$0xff]
    %v1450 = vld [vmem:[#allocation22 + $0x608] sm:$0xff]
    %v1451 = vld [vmem:[#allocation22 + $0x610] sm:$0xff]
    %v1452 = vld [vmem:[#allocation22 + $0x618] sm:$0xff]
    %v1453 = vld [vmem:[#allocation22 + $0x620] sm:$0xff]
    %v1454 = vld [vmem:[#allocation22 + $0x628] sm:$0xff]
    %v1455 = vld [vmem:[#allocation22 + $0x630] sm:$0xff]
    %v1456 = vld [vmem:[#allocation22 + $0x638] sm:$0xff]
    %v1457 = vld [vmem:[#allocation22 + $0x640] sm:$0xff]
    %v1458 = vld [vmem:[#allocation22 + $0x648] sm:$0xff]
    %v1459 = vld [vmem:[#allocation22 + $0x650] sm:$0xff]
    %v1460 = vld [vmem:[#allocation22 + $0x658] sm:$0xff]
    %v1461 = vld [vmem:[#allocation22 + $0x660] sm:$0xff]
    %v1462 = vld [vmem:[#allocation22 + $0x668] sm:$0xff]
    %v1463 = vld [vmem:[#allocation22 + $0x670] sm:$0xff]
    %v1464 = vld [vmem:[#allocation22 + $0x678] sm:$0xff]
    %v1465 = vld [vmem:[#allocation22 + $0x680] sm:$0xff]
    %v1466 = vld [vmem:[#allocation22 + $0x688] sm:$0xff]
    %v1467 = vld [vmem:[#allocation22 + $0x690] sm:$0xff]
    %v1468 = vld [vmem:[#allocation22 + $0x698] sm:$0xff]
    %v1469 = vld [vmem:[#allocation22 + $0x6a0] sm:$0xff]
    %v1470 = vld [vmem:[#allocation22 + $0x6a8] sm:$0xff]
    %v1471 = vld [vmem:[#allocation22 + $0x6b0] sm:$0xff]
    %v1472 = vld [vmem:[#allocation22 + $0x6b8] sm:$0xff]
    %v1473 = vld [vmem:[#allocation22 + $0x6c0] sm:$0xff]
    %v1474 = vld [vmem:[#allocation22 + $0x6c8] sm:$0xff]
    %v1475 = vld [vmem:[#allocation22 + $0x6d0] sm:$0xff]
    %v1476 = vld [vmem:[#allocation22 + $0x6d8] sm:$0xff]
    %v1477 = vld [vmem:[#allocation22 + $0x6e0] sm:$0xff]
    %v1478 = vld [vmem:[#allocation22 + $0x6e8] sm:$0xff]
    %v1479 = vld [vmem:[#allocation22 + $0x6f0] sm:$0xff]
    %v1480 = vld [vmem:[#allocation22 + $0x6f8] sm:$0xff]
    %v1481 = vld [vmem:[#allocation22 + $0x700] sm:$0xff]
    %v1482 = vld [vmem:[#allocation22 + $0x708] sm:$0xff]
    %v1483 = vld [vmem:[#allocation22 + $0x710] sm:$0xff]
    %v1484 = vld [vmem:[#allocation22 + $0x718] sm:$0xff]
    %v1485 = vld [vmem:[#allocation22 + $0x720] sm:$0xff]
    %v1486 = vld [vmem:[#allocation22 + $0x728] sm:$0xff]
    %v1487 = vld [vmem:[#allocation22 + $0x730] sm:$0xff]
    %v1488 = vld [vmem:[#allocation22 + $0x738] sm:$0xff]
    %v1489 = vld [vmem:[#allocation22 + $0x740] sm:$0xff]
    %v1490 = vld [vmem:[#allocation22 + $0x748] sm:$0xff]
    %v1491 = vld [vmem:[#allocation22 + $0x750] sm:$0xff]
    %v1492 = vld [vmem:[#allocation22 + $0x758] sm:$0xff]
    %v1493 = vld [vmem:[#allocation22 + $0x760] sm:$0xff]
    %v1494 = vld [vmem:[#allocation22 + $0x768] sm:$0xff]
    %v1495 = vld [vmem:[#allocation22 + $0x770] sm:$0xff]
    %v1496 = vld [vmem:[#allocation22 + $0x778] sm:$0xff]
    %v1497 = vld [vmem:[#allocation22 + $0x780] sm:$0xff]
    %v1498 = vld [vmem:[#allocation22 + $0x788] sm:$0xff]
    %v1499 = vld [vmem:[#allocation22 + $0x790] sm:$0xff]
    %v1500 = vld [vmem:[#allocation22 + $0x798] sm:$0xff]
    %v1501 = vld [vmem:[#allocation22 + $0x7a0] sm:$0xff]
    %v1502 = vld [vmem:[#allocation22 + $0x7a8] sm:$0xff]
    %v1503 = vld [vmem:[#allocation22 + $0x7b0] sm:$0xff]
    %v1504 = vld [vmem:[#allocation22 + $0x7b8] sm:$0xff]
    %v1505 = vld [vmem:[#allocation22 + $0x7c0] sm:$0xff]
    %v1506 = vld [vmem:[#allocation22 + $0x7c8] sm:$0xff]
    %v1507 = vld [vmem:[#allocation22 + $0x7d0] sm:$0xff]
    %v1508 = vld [vmem:[#allocation22 + $0x7d8] sm:$0xff]
    %v1509 = vld [vmem:[#allocation22 + $0x7e0] sm:$0xff]
    %v1510 = vld [vmem:[#allocation22 + $0x7e8] sm:$0xff]
    %v1511 = vld [vmem:[#allocation22 + $0x7f0] sm:$0xff]
    %v1512 = vld [vmem:[#allocation22 + $0x7f8] sm:$0xff]
    %v1513 = vld [vmem:[#allocation24] sm:$0xff]
    %v1515 = vlaneseq
    %v1516 = vshrl.u32 %v1515, 7
    %v1517 = vsub.s32 0, %v1516
    %v1518 = vrot.slane %v1513, %v1517
    %v1519 = vlaneseq
    %v1520 = vshrl.u32 %v1519, 7
    %v1521 = vsub.s32 1, %v1520
    %v1522 = vrot.slane %v1513, %v1521
    %v1523 = vlaneseq
    %v1524 = vshrl.u32 %v1523, 7
    %v1525 = vsub.s32 2, %v1524
    %v1526 = vrot.slane %v1513, %v1525
    %v1527 = vlaneseq
    %v1528 = vshrl.u32 %v1527, 7
    %v1529 = vsub.s32 3, %v1528
    %v1530 = vrot.slane %v1513, %v1529
    %v1531 = vlaneseq
    %v1532 = vshrl.u32 %v1531, 7
    %v1533 = vsub.s32 4, %v1532
    %v1534 = vrot.slane %v1513, %v1533
    %v1535 = vlaneseq
    %v1536 = vshrl.u32 %v1535, 7
    %v1537 = vsub.s32 5, %v1536
    %v1538 = vrot.slane %v1513, %v1537
    %v1539 = vlaneseq
    %v1540 = vshrl.u32 %v1539, 7
    %v1541 = vsub.s32 6, %v1540
    %v1542 = vrot.slane %v1513, %v1541
    %v1543 = vlaneseq
    %v1544 = vshrl.u32 %v1543, 7
    %v1545 = vsub.s32 7, %v1544
    %v1546 = vrot.slane %v1513, %v1545
    %1555 = vmatprep.subr.mxu0 %v1258
    %1556 = vmatpush1.msra.mxu0 %v1257
    %1557 = vmatprep.subr.mxu0 %v1266
    %1558 = vmatpush1.msra.mxu0 %v1265
    %1559 = vmatprep.subr.mxu0 %v1274
    %1560 = vmatpush1.msra.mxu0 %v1273
    %1561 = vmatprep.subr.mxu0 %v1282
    %1562 = vmatpush1.msra.mxu0 %v1281
    %1563 = vmatprep.subr.mxu0 %v1290
    %1564 = vmatpush1.msra.mxu0 %v1289
    %1565 = vmatprep.subr.mxu0 %v1298
    %1566 = vmatpush1.msra.mxu0 %v1297
    %1567 = vmatprep.subr.mxu0 %v1306
    %1568 = vmatpush1.msra.mxu0 %v1305
    %1569 = vmatprep.subr.mxu0 %v1314
    %1570 = vmatpush1.msra.mxu0 %v1313
    %1571 = vmatprep.subr.mxu0 %v1322
    %1572 = vmatpush1.msra.mxu0 %v1321
    %1573 = vmatprep.subr.mxu0 %v1330
    %1574 = vmatpush1.msra.mxu0 %v1329
    %1575 = vmatprep.subr.mxu0 %v1338
    %1576 = vmatpush1.msra.mxu0 %v1337
    %1577 = vmatprep.subr.mxu0 %v1346
    %1578 = vmatpush1.msra.mxu0 %v1345
    %1579 = vmatprep.subr.mxu0 %v1354
    %1580 = vmatpush1.msra.mxu0 %v1353
    %1581 = vmatprep.subr.mxu0 %v1362
    %1582 = vmatpush1.msra.mxu0 %v1361
    %1583 = vmatprep.subr.mxu0 %v1370
    %1584 = vmatpush1.msra.mxu0 %v1369
    %1585 = vmatprep.subr.mxu0 %v1378
    %1586 = vmatpush1.msra.mxu0 %v1377
    %1587 = vmatprep.subr.mxu0 %v1386
    %1588 = vmatpush1.msra.mxu0 %v1385
    %1589 = vmatprep.subr.mxu0 %v1394
    %1590 = vmatpush1.msra.mxu0 %v1393
    %1591 = vmatprep.subr.mxu0 %v1402
    %1592 = vmatpush1.msra.mxu0 %v1401
    %1593 = vmatprep.subr.mxu0 %v1410
    %1594 = vmatpush1.msra.mxu0 %v1409
    %1595 = vmatprep.subr.mxu0 %v1418
    %1596 = vmatpush1.msra.mxu0 %v1417
    %1597 = vmatprep.subr.mxu0 %v1426
    %1598 = vmatpush1.msra.mxu0 %v1425
    %1599 = vmatprep.subr.mxu0 %v1434
    %1600 = vmatpush1.msra.mxu0 %v1433
    %1601 = vmatprep.subr.mxu0 %v1442
    %1602 = vmatpush1.msra.mxu0 %v1441
    %1603 = vmatprep.subr.mxu0 %v1450
    %1604 = vmatpush1.msra.mxu0 %v1449
    %1605 = vmatprep.subr.mxu0 %v1458
    %1606 = vmatpush1.msra.mxu0 %v1457
    %1607 = vmatprep.subr.mxu0 %v1466
    %1608 = vmatpush1.msra.mxu0 %v1465
    %1609 = vmatprep.subr.mxu0 %v1474
    %1610 = vmatpush1.msra.mxu0 %v1473
    %1611 = vmatprep.subr.mxu0 %v1482
    %1612 = vmatpush1.msra.mxu0 %v1481
    %1613 = vmatprep.subr.mxu0 %v1490
    %1614 = vmatpush1.msra.mxu0 %v1489
    %1615 = vmatprep.subr.mxu0 %v1498
    %1616 = vmatpush1.msra.mxu0 %v1497
    %1617 = vmatprep.subr.mxu0 %v1506
    %1618 = vmatpush1.msra.mxu0 %v1505
    %1619 = vmatprep.mubr.f32.mxu0 %v1256
    %1620 = vmatmul.mubr.f32.gmra.mrb[0].mxu0 %v1255
    %v1621 = vpop.f32.mrb[0].mxu0
    %v1622 = vadd.f32 %v1518, %v1621
    %v1623 = vpop.f32.mrb[0].mxu0
    %v1624 = vadd.f32 %v1522, %v1623
    %1625 = vdwg.mxu0
    %1626 = vmatprep.subr.mxu0 %v1260
    %1627 = vmatpush1.msra.mxu0 %v1259
    %1628 = vmatprep.subr.mxu0 %v1268
    %1629 = vmatpush1.msra.mxu0 %v1267
    %1630 = vmatprep.subr.mxu0 %v1276
    %1631 = vmatpush1.msra.mxu0 %v1275
    %1632 = vmatprep.subr.mxu0 %v1284
    %1633 = vmatpush1.msra.mxu0 %v1283
    %1634 = vmatprep.subr.mxu0 %v1292
    %1635 = vmatpush1.msra.mxu0 %v1291
    %1636 = vmatprep.subr.mxu0 %v1300
    %1637 = vmatpush1.msra.mxu0 %v1299
    %1638 = vmatprep.subr.mxu0 %v1308
    %1639 = vmatpush1.msra.mxu0 %v1307
    %1640 = vmatprep.subr.mxu0 %v1316
    %1641 = vmatpush1.msra.mxu0 %v1315
    %1642 = vmatprep.subr.mxu0 %v1324
    %1643 = vmatpush1.msra.mxu0 %v1323
    %1644 = vmatprep.subr.mxu0 %v1332
    %1645 = vmatpush1.msra.mxu0 %v1331
    %1646 = vmatprep.subr.mxu0 %v1340
    %1647 = vmatpush1.msra.mxu0 %v1339
    %1648 = vmatprep.subr.mxu0 %v1348
    %1649 = vmatpush1.msra.mxu0 %v1347
    %1650 = vmatprep.subr.mxu0 %v1356
    %1651 = vmatpush1.msra.mxu0 %v1355
    %1652 = vmatprep.subr.mxu0 %v1364
    %1653 = vmatpush1.msra.mxu0 %v1363
    %1654 = vmatprep.subr.mxu0 %v1372
    %1655 = vmatpush1.msra.mxu0 %v1371
    %1656 = vmatprep.subr.mxu0 %v1380
    %1657 = vmatpush1.msra.mxu0 %v1379
    %1658 = vmatprep.subr.mxu0 %v1388
    %1659 = vmatpush1.msra.mxu0 %v1387
    %1660 = vmatprep.subr.mxu0 %v1396
    %1661 = vmatpush1.msra.mxu0 %v1395
    %1662 = vmatprep.subr.mxu0 %v1404
    %1663 = vmatpush1.msra.mxu0 %v1403
    %1664 = vmatprep.subr.mxu0 %v1412
    %1665 = vmatpush1.msra.mxu0 %v1411
    %1666 = vmatprep.subr.mxu0 %v1420
    %1667 = vmatpush1.msra.mxu0 %v1419
    %1668 = vmatprep.subr.mxu0 %v1428
    %1669 = vmatpush1.msra.mxu0 %v1427
    %1670 = vmatprep.subr.mxu0 %v1436
    %1671 = vmatpush1.msra.mxu0 %v1435
    %1672 = vmatprep.subr.mxu0 %v1444
    %1673 = vmatpush1.msra.mxu0 %v1443
    %1674 = vmatprep.subr.mxu0 %v1452
    %1675 = vmatpush1.msra.mxu0 %v1451
    %1676 = vmatprep.subr.mxu0 %v1460
    %1677 = vmatpush1.msra.mxu0 %v1459
    %1678 = vmatprep.subr.mxu0 %v1468
    %1679 = vmatpush1.msra.mxu0 %v1467
    %1680 = vmatprep.subr.mxu0 %v1476
    %1681 = vmatpush1.msra.mxu0 %v1475
    %1682 = vmatprep.subr.mxu0 %v1484
    %1683 = vmatpush1.msra.mxu0 %v1483
    %1684 = vmatprep.subr.mxu0 %v1492
    %1685 = vmatpush1.msra.mxu0 %v1491
    %1686 = vmatprep.subr.mxu0 %v1500
    %1687 = vmatpush1.msra.mxu0 %v1499
    %1688 = vmatprep.subr.mxu0 %v1508
    %1689 = vmatpush1.msra.mxu0 %v1507
    %1690 = vmatprep.mubr.f32.mxu0 %v1256
    %1691 = vmatmul.mubr.f32.gmra.mrb[0].mxu0 %v1255
    %v1692 = vpop.f32.mrb[0].mxu0
    %v1693 = vadd.f32 %v1526, %v1692
    %v1694 = vpop.f32.mrb[0].mxu0
    %v1695 = vadd.f32 %v1530, %v1694
    %1696 = vdwg.mxu0
    %1697 = vmatprep.subr.mxu0 %v1262
    %1698 = vmatpush1.msra.mxu0 %v1261
    %1699 = vmatprep.subr.mxu0 %v1270
    %1700 = vmatpush1.msra.mxu0 %v1269
    %1701 = vmatprep.subr.mxu0 %v1278
    %1702 = vmatpush1.msra.mxu0 %v1277
    %1703 = vmatprep.subr.mxu0 %v1286
    %1704 = vmatpush1.msra.mxu0 %v1285
    %1705 = vmatprep.subr.mxu0 %v1294
    %1706 = vmatpush1.msra.mxu0 %v1293
    %1707 = vmatprep.subr.mxu0 %v1302
    %1708 = vmatpush1.msra.mxu0 %v1301
    %1709 = vmatprep.subr.mxu0 %v1310
    %1710 = vmatpush1.msra.mxu0 %v1309
    %1711 = vmatprep.subr.mxu0 %v1318
    %1712 = vmatpush1.msra.mxu0 %v1317
    %1713 = vmatprep.subr.mxu0 %v1326
    %1714 = vmatpush1.msra.mxu0 %v1325
    %1715 = vmatprep.subr.mxu0 %v1334
    %1716 = vmatpush1.msra.mxu0 %v1333
    %1717 = vmatprep.subr.mxu0 %v1342
    %1718 = vmatpush1.msra.mxu0 %v1341
    %1719 = vmatprep.subr.mxu0 %v1350
    %1720 = vmatpush1.msra.mxu0 %v1349
    %1721 = vmatprep.subr.mxu0 %v1358
    %1722 = vmatpush1.msra.mxu0 %v1357
    %1723 = vmatprep.subr.mxu0 %v1366
    %1724 = vmatpush1.msra.mxu0 %v1365
    %1725 = vmatprep.subr.mxu0 %v1374
    %1726 = vmatpush1.msra.mxu0 %v1373
    %1727 = vmatprep.subr.mxu0 %v1382
    %1728 = vmatpush1.msra.mxu0 %v1381
    %1729 = vmatprep.subr.mxu0 %v1390
    %1730 = vmatpush1.msra.mxu0 %v1389
    %1731 = vmatprep.subr.mxu0 %v1398
    %1732 = vmatpush1.msra.mxu0 %v1397
    %1733 = vmatprep.subr.mxu0 %v1406
    %1734 = vmatpush1.msra.mxu0 %v1405
    %1735 = vmatprep.subr.mxu0 %v1414
    %1736 = vmatpush1.msra.mxu0 %v1413
    %1737 = vmatprep.subr.mxu0 %v1422
    %1738 = vmatpush1.msra.mxu0 %v1421
    %1739 = vmatprep.subr.mxu0 %v1430
    %1740 = vmatpush1.msra.mxu0 %v1429
    %1741 = vmatprep.subr.mxu0 %v1438
    %1742 = vmatpush1.msra.mxu0 %v1437
    %1743 = vmatprep.subr.mxu0 %v1446
    %1744 = vmatpush1.msra.mxu0 %v1445
    %1745 = vmatprep.subr.mxu0 %v1454
    %1746 = vmatpush1.msra.mxu0 %v1453
    %1747 = vmatprep.subr.mxu0 %v1462
    %1748 = vmatpush1.msra.mxu0 %v1461
    %1749 = vmatprep.subr.mxu0 %v1470
    %1750 = vmatpush1.msra.mxu0 %v1469
    %1751 = vmatprep.subr.mxu0 %v1478
    %1752 = vmatpush1.msra.mxu0 %v1477
    %1753 = vmatprep.subr.mxu0 %v1486
    %1754 = vmatpush1.msra.mxu0 %v1485
    %1755 = vmatprep.subr.mxu0 %v1494
    %1756 = vmatpush1.msra.mxu0 %v1493
    %1757 = vmatprep.subr.mxu0 %v1502
    %1758 = vmatpush1.msra.mxu0 %v1501
    %1759 = vmatprep.subr.mxu0 %v1510
    %1760 = vmatpush1.msra.mxu0 %v1509
    %1761 = vmatprep.mubr.f32.mxu0 %v1256
    %1762 = vmatmul.mubr.f32.gmra.mrb[0].mxu0 %v1255
    %v1763 = vpop.f32.mrb[0].mxu0
    %v1764 = vadd.f32 %v1534, %v1763
    %v1765 = vpop.f32.mrb[0].mxu0
    %v1766 = vadd.f32 %v1538, %v1765
    %1767 = vdwg.mxu0
    %1768 = vmatprep.subr.mxu0 %v1264
    %1769 = vmatpush1.msra.mxu0 %v1263
    %1770 = vmatprep.subr.mxu0 %v1272
    %1771 = vmatpush1.msra.mxu0 %v1271
    %1772 = vmatprep.subr.mxu0 %v1280
    %1773 = vmatpush1.msra.mxu0 %v1279
    %1774 = vmatprep.subr.mxu0 %v1288
    %1775 = vmatpush1.msra.mxu0 %v1287
    %1776 = vmatprep.subr.mxu0 %v1296
    %1777 = vmatpush1.msra.mxu0 %v1295
    %1778 = vmatprep.subr.mxu0 %v1304
    %1779 = vmatpush1.msra.mxu0 %v1303
    %1780 = vmatprep.subr.mxu0 %v1312
    %1781 = vmatpush1.msra.mxu0 %v1311
    %1782 = vmatprep.subr.mxu0 %v1320
    %1783 = vmatpush1.msra.mxu0 %v1319
    %1784 = vmatprep.subr.mxu0 %v1328
    %1785 = vmatpush1.msra.mxu0 %v1327
    %1786 = vmatprep.subr.mxu0 %v1336
    %1787 = vmatpush1.msra.mxu0 %v1335
    %1788 = vmatprep.subr.mxu0 %v1344
    %1789 = vmatpush1.msra.mxu0 %v1343
    %1790 = vmatprep.subr.mxu0 %v1352
    %1791 = vmatpush1.msra.mxu0 %v1351
    %1792 = vmatprep.subr.mxu0 %v1360
    %1793 = vmatpush1.msra.mxu0 %v1359
    %1794 = vmatprep.subr.mxu0 %v1368
    %1795 = vmatpush1.msra.mxu0 %v1367
    %1796 = vmatprep.subr.mxu0 %v1376
    %1797 = vmatpush1.msra.mxu0 %v1375
    %1798 = vmatprep.subr.mxu0 %v1384
    %1799 = vmatpush1.msra.mxu0 %v1383
    %1800 = vmatprep.subr.mxu0 %v1392
    %1801 = vmatpush1.msra.mxu0 %v1391
    %1802 = vmatprep.subr.mxu0 %v1400
    %1803 = vmatpush1.msra.mxu0 %v1399
    %1804 = vmatprep.subr.mxu0 %v1408
    %1805 = vmatpush1.msra.mxu0 %v1407
    %1806 = vmatprep.subr.mxu0 %v1416
    %1807 = vmatpush1.msra.mxu0 %v1415
    %1808 = vmatprep.subr.mxu0 %v1424
    %1809 = vmatpush1.msra.mxu0 %v1423
    %1810 = vmatprep.subr.mxu0 %v1432
    %1811 = vmatpush1.msra.mxu0 %v1431
    %1812 = vmatprep.subr.mxu0 %v1440
    %1813 = vmatpush1.msra.mxu0 %v1439
    %1814 = vmatprep.subr.mxu0 %v1448
    %1815 = vmatpush1.msra.mxu0 %v1447
    %1816 = vmatprep.subr.mxu0 %v1456
    %1817 = vmatpush1.msra.mxu0 %v1455
    %1818 = vmatprep.subr.mxu0 %v1464
    %1819 = vmatpush1.msra.mxu0 %v1463
    %1820 = vmatprep.subr.mxu0 %v1472
    %1821 = vmatpush1.msra.mxu0 %v1471
    %1822 = vmatprep.subr.mxu0 %v1480
    %1823 = vmatpush1.msra.mxu0 %v1479
    %1824 = vmatprep.subr.mxu0 %v1488
    %1825 = vmatpush1.msra.mxu0 %v1487
    %1826 = vmatprep.subr.mxu0 %v1496
    %1827 = vmatpush1.msra.mxu0 %v1495
    %1828 = vmatprep.subr.mxu0 %v1504
    %1829 = vmatpush1.msra.mxu0 %v1503
    %1830 = vmatprep.subr.mxu0 %v1512
    %1831 = vmatpush1.msra.mxu0 %v1511
    %1832 = vmatprep.mubr.f32.mxu0 %v1256
    %1833 = vmatmul.mubr.f32.gmra.mrb[0].mxu0 %v1255
    %v1834 = vpop.f32.mrb[0].mxu0
    %v1835 = vadd.f32 %v1542, %v1834
    %v1836 = vpop.f32.mrb[0].mxu0
    %v1837 = vadd.f32 %v1546, %v1836
    %1838 = vdwg.mxu0
    %v1839 = vadd.f32 %v1622, %v1624
    %v1840 = vadd.f32 %v1839, %v1693
    %v1841 = vadd.f32 %v1840, %v1695
    %1842 = vadd.xlane.f32.xlu0 %v1841
    %v1843 = vpop.xlane.xlu0 %1842
    %v1844 = vrcp.pop 512.0
    %v1845 = vmul.f32 %v1843, %v1844
    %v1846 = vsub.f32 %v1622, %v1845
    %v1847 = vsub.f32 %v1624, %v1845
    %v1848 = vsub.f32 %v1693, %v1845
    %v1849 = vsub.f32 %v1695, %v1845
    %v1850 = vmul.f32 %v1846, %v1846
    %v1851 = vmul.f32 %v1847, %v1847
    %v1852 = vmul.f32 %v1848, %v1848
    %v1853 = vmul.f32 %v1849, %v1849
    %v1854 = vadd.f32 %v1850, %v1851
    %v1855 = vadd.f32 %v1854, %v1852
    %v1856 = vadd.f32 %v1855, %v1853
    %1857 = vadd.xlane.f32.xlu0 %v1856
    %v1858 = vpop.xlane.xlu0 %1857
    %v1859 = vmul.f32 %v1858, %v1844
    %v1860 = vadd.f32 %v1859, 1e-05
    %v1861 = vrsqrt.pop %v1860
    %v1862 = vmul.f32 %v1846, %v1861
    %v1863 = vmul.f32 %v1847, %v1861
    %v1864 = vmul.f32 %v1848, %v1861
    %v1865 = vmul.f32 %v1849, %v1861
    %v1866 = vld [vmem:[#allocation25] sm:$0xf]
    %v1868 = vlaneseq
    %v1869 = vshrl.u32 %v1868, 7
    %v1870 = vsub.s32 0, %v1869
    %v1871 = vrot.slane %v1866, %v1870
    %v1872 = vlaneseq
    %v1873 = vshrl.u32 %v1872, 7
    %v1874 = vsub.s32 1, %v1873
    %v1875 = vrot.slane %v1866, %v1874
    %v1876 = vlaneseq
    %v1877 = vshrl.u32 %v1876, 7
    %v1878 = vsub.s32 2, %v1877
    %v1879 = vrot.slane %v1866, %v1878
    %v1880 = vlaneseq
    %v1881 = vshrl.u32 %v1880, 7
    %v1882 = vsub.s32 3, %v1881
    %v1883 = vrot.slane %v1866, %v1882
    %v1888 = vmul.f32 %v1862, %v1871
    %v1889 = vmul.f32 %v1863, %v1875
    %v1890 = vmul.f32 %v1864, %v1879
    %v1891 = vmul.f32 %v1865, %v1883
    %v1892 = vld [vmem:[#allocation27] sm:$0xf]
    %v1894 = vlaneseq
    %v1895 = vshrl.u32 %v1894, 7
    %v1896 = vsub.s32 0, %v1895
    %v1897 = vrot.slane %v1892, %v1896
    %v1898 = vlaneseq
    %v1899 = vshrl.u32 %v1898, 7
    %v1900 = vsub.s32 1, %v1899
    %v1901 = vrot.slane %v1892, %v1900
    %v1902 = vlaneseq
    %v1903 = vshrl.u32 %v1902, 7
    %v1904 = vsub.s32 2, %v1903
    %v1905 = vrot.slane %v1892, %v1904
    %v1906 = vlaneseq
    %v1907 = vshrl.u32 %v1906, 7
    %v1908 = vsub.s32 3, %v1907
    %v1909 = vrot.slane %v1892, %v1908
    %v1914 = vadd.f32 %v1888, %v1897
    %v1915 = vadd.f32 %v1889, %v1901
    %v1916 = vadd.f32 %v1890, %v1905
    %v1917 = vadd.f32 %v1891, %v1909
    %v1918 = vmul.f32 %v1914, 0.5
    %v1919 = vmul.f32 %v1915, 0.5
    %v1920 = vmul.f32 %v1916, 0.5
    %v1921 = vmul.f32 %v1917, 0.5
    %v1922 = vmul.f32 %v1914, 0.70710677
    %v1923 = vmul.f32 %v1915, 0.70710677
    %v1924 = vmul.f32 %v1916, 0.70710677
    %v1925 = vmul.f32 %v1917, 0.70710677
    %v1926 = verf.f32.pop %v1922
    %v1927 = verf.f32.pop %v1923
    %v1928 = verf.f32.pop %v1924
    %v1929 = verf.f32.pop %v1925
    %v1930 = vadd.f32 %v1926, 1.0
    %v1931 = vadd.f32 %v1927, 1.0
    %v1932 = vadd.f32 %v1928, 1.0
    %v1933 = vadd.f32 %v1929, 1.0
    %v1934 = vmul.f32 %v1918, %v1930
    %v1935 = vmul.f32 %v1919, %v1931
    %v1936 = vmul.f32 %v1920, %v1932
    %v1937 = vmul.f32 %v1921, %v1933
    %v1938 = vld [vmem:[#allocation28] sm:$0xff]
    %v1939 = vld [vmem:[#allocation28 + $0x8] sm:$0xff]
    %v1940 = vld [vmem:[#allocation28 + $0x10] sm:$0xff]
    %v1941 = vld [vmem:[#allocation28 + $0x18] sm:$0xff]
    %v1942 = vld [vmem:[#allocation28 + $0x20] sm:$0xff]
    %v1943 = vld [vmem:[#allocation28 + $0x28] sm:$0xff]
    %v1944 = vld [vmem:[#allocation28 + $0x30] sm:$0xff]
    %v1945 = vld [vmem:[#allocation28 + $0x38] sm:$0xff]
    %v1946 = vld [vmem:[#allocation28 + $0x40] sm:$0xff]
    %v1947 = vld [vmem:[#allocation28 + $0x48] sm:$0xff]
    %v1948 = vld [vmem:[#allocation28 + $0x50] sm:$0xff]
    %v1949 = vld [vmem:[#allocation28 + $0x58] sm:$0xff]
    %v1950 = vld [vmem:[#allocation28 + $0x60] sm:$0xff]
    %v1951 = vld [vmem:[#allocation28 + $0x68] sm:$0xff]
    %v1952 = vld [vmem:[#allocation28 + $0x70] sm:$0xff]
    %v1953 = vld [vmem:[#allocation28 + $0x78] sm:$0xff]
    %v1954 = vld [vmem:[#allocation28 + $0x80] sm:$0xff]
    %v1955 = vld [vmem:[#allocation28 + $0x88] sm:$0xff]
    %v1956 = vld [vmem:[#allocation28 + $0x90] sm:$0xff]
    %v1957 = vld [vmem:[#allocation28 + $0x98] sm:$0xff]
    %v1958 = vld [vmem:[#allocation28 + $0xa0] sm:$0xff]
    %v1959 = vld [vmem:[#allocation28 + $0xa8] sm:$0xff]
    %v1960 = vld [vmem:[#allocation28 + $0xb0] sm:$0xff]
    %v1961 = vld [vmem:[#allocation28 + $0xb8] sm:$0xff]
    %v1962 = vld [vmem:[#allocation28 + $0xc0] sm:$0xff]
    %v1963 = vld [vmem:[#allocation28 + $0xc8] sm:$0xff]
    %v1964 = vld [vmem:[#allocation28 + $0xd0] sm:$0xff]
    %v1965 = vld [vmem:[#allocation28 + $0xd8] sm:$0xff]
    %v1966 = vld [vmem:[#allocation28 + $0xe0] sm:$0xff]
    %v1967 = vld [vmem:[#allocation28 + $0xe8] sm:$0xff]
    %v1968 = vld [vmem:[#allocation28 + $0xf0] sm:$0xff]
    %v1969 = vld [vmem:[#allocation28 + $0xf8] sm:$0xff]
    %v1970 = vld [vmem:[#allocation28 + $0x100] sm:$0xff]
    %v1971 = vld [vmem:[#allocation28 + $0x108] sm:$0xff]
    %v1972 = vld [vmem:[#allocation28 + $0x110] sm:$0xff]
    %v1973 = vld [vmem:[#allocation28 + $0x118] sm:$0xff]
    %v1974 = vld [vmem:[#allocation28 + $0x120] sm:$0xff]
    %v1975 = vld [vmem:[#allocation28 + $0x128] sm:$0xff]
    %v1976 = vld [vmem:[#allocation28 + $0x130] sm:$0xff]
    %v1977 = vld [vmem:[#allocation28 + $0x138] sm:$0xff]
    %v1978 = vld [vmem:[#allocation28 + $0x140] sm:$0xff]
    %v1979 = vld [vmem:[#allocation28 + $0x148] sm:$0xff]
    %v1980 = vld [vmem:[#allocation28 + $0x150] sm:$0xff]
    %v1981 = vld [vmem:[#allocation28 + $0x158] sm:$0xff]
    %v1982 = vld [vmem:[#allocation28 + $0x160] sm:$0xff]
    %v1983 = vld [vmem:[#allocation28 + $0x168] sm:$0xff]
    %v1984 = vld [vmem:[#allocation28 + $0x170] sm:$0xff]
    %v1985 = vld [vmem:[#allocation28 + $0x178] sm:$0xff]
    %v1986 = vld [vmem:[#allocation28 + $0x180] sm:$0xff]
    %v1987 = vld [vmem:[#allocation28 + $0x188] sm:$0xff]
    %v1988 = vld [vmem:[#allocation28 + $0x190] sm:$0xff]
    %v1989 = vld [vmem:[#allocation28 + $0x198] sm:$0xff]
    %v1990 = vld [vmem:[#allocation28 + $0x1a0] sm:$0xff]
    %v1991 = vld [vmem:[#allocation28 + $0x1a8] sm:$0xff]
    %v1992 = vld [vmem:[#allocation28 + $0x1b0] sm:$0xff]
    %v1993 = vld [vmem:[#allocation28 + $0x1b8] sm:$0xff]
    %v1994 = vld [vmem:[#allocation28 + $0x1c0] sm:$0xff]
    %v1995 = vld [vmem:[#allocation28 + $0x1c8] sm:$0xff]
    %v1996 = vld [vmem:[#allocation28 + $0x1d0] sm:$0xff]
    %v1997 = vld [vmem:[#allocation28 + $0x1d8] sm:$0xff]
    %v1998 = vld [vmem:[#allocation28 + $0x1e0] sm:$0xff]
    %v1999 = vld [vmem:[#allocation28 + $0x1e8] sm:$0xff]
    %v2000 = vld [vmem:[#allocation28 + $0x1f0] sm:$0xff]
    %v2001 = vld [vmem:[#allocation28 + $0x1f8] sm:$0xff]
    %v2002 = vld [vmem:[#allocation28 + $0x200] sm:$0xff]
    %v2003 = vld [vmem:[#allocation28 + $0x208] sm:$0xff]
    %v2004 = vld [vmem:[#allocation28 + $0x210] sm:$0xff]
    %v2005 = vld [vmem:[#allocation28 + $0x218] sm:$0xff]
    %v2006 = vld [vmem:[#allocation28 + $0x220] sm:$0xff]
    %v2007 = vld [vmem:[#allocation28 + $0x228] sm:$0xff]
    %v2008 = vld [vmem:[#allocation28 + $0x230] sm:$0xff]
    %v2009 = vld [vmem:[#allocation28 + $0x238] sm:$0xff]
    %v2010 = vld [vmem:[#allocation28 + $0x240] sm:$0xff]
    %v2011 = vld [vmem:[#allocation28 + $0x248] sm:$0xff]
    %v2012 = vld [vmem:[#allocation28 + $0x250] sm:$0xff]
    %v2013 = vld [vmem:[#allocation28 + $0x258] sm:$0xff]
    %v2014 = vld [vmem:[#allocation28 + $0x260] sm:$0xff]
    %v2015 = vld [vmem:[#allocation28 + $0x268] sm:$0xff]
    %v2016 = vld [vmem:[#allocation28 + $0x270] sm:$0xff]
    %v2017 = vld [vmem:[#allocation28 + $0x278] sm:$0xff]
    %v2018 = vld [vmem:[#allocation28 + $0x280] sm:$0xff]
    %v2019 = vld [vmem:[#allocation28 + $0x288] sm:$0xff]
    %v2020 = vld [vmem:[#allocation28 + $0x290] sm:$0xff]
    %v2021 = vld [vmem:[#allocation28 + $0x298] sm:$0xff]
    %v2022 = vld [vmem:[#allocation28 + $0x2a0] sm:$0xff]
    %v2023 = vld [vmem:[#allocation28 + $0x2a8] sm:$0xff]
    %v2024 = vld [vmem:[#allocation28 + $0x2b0] sm:$0xff]
    %v2025 = vld [vmem:[#allocation28 + $0x2b8] sm:$0xff]
    %v2026 = vld [vmem:[#allocation28 + $0x2c0] sm:$0xff]
    %v2027 = vld [vmem:[#allocation28 + $0x2c8] sm:$0xff]
    %v2028 = vld [vmem:[#allocation28 + $0x2d0] sm:$0xff]
    %v2029 = vld [vmem:[#allocation28 + $0x2d8] sm:$0xff]
    %v2030 = vld [vmem:[#allocation28 + $0x2e0] sm:$0xff]
    %v2031 = vld [vmem:[#allocation28 + $0x2e8] sm:$0xff]
    %v2032 = vld [vmem:[#allocation28 + $0x2f0] sm:$0xff]
    %v2033 = vld [vmem:[#allocation28 + $0x2f8] sm:$0xff]
    %v2034 = vld [vmem:[#allocation28 + $0x300] sm:$0xff]
    %v2035 = vld [vmem:[#allocation28 + $0x308] sm:$0xff]
    %v2036 = vld [vmem:[#allocation28 + $0x310] sm:$0xff]
    %v2037 = vld [vmem:[#allocation28 + $0x318] sm:$0xff]
    %v2038 = vld [vmem:[#allocation28 + $0x320] sm:$0xff]
    %v2039 = vld [vmem:[#allocation28 + $0x328] sm:$0xff]
    %v2040 = vld [vmem:[#allocation28 + $0x330] sm:$0xff]
    %v2041 = vld [vmem:[#allocation28 + $0x338] sm:$0xff]
    %v2042 = vld [vmem:[#allocation28 + $0x340] sm:$0xff]
    %v2043 = vld [vmem:[#allocation28 + $0x348] sm:$0xff]
    %v2044 = vld [vmem:[#allocation28 + $0x350] sm:$0xff]
    %v2045 = vld [vmem:[#allocation28 + $0x358] sm:$0xff]
    %v2046 = vld [vmem:[#allocation28 + $0x360] sm:$0xff]
    %v2047 = vld [vmem:[#allocation28 + $0x368] sm:$0xff]
    %v2048 = vld [vmem:[#allocation28 + $0x370] sm:$0xff]
    %v2049 = vld [vmem:[#allocation28 + $0x378] sm:$0xff]
    %v2050 = vld [vmem:[#allocation28 + $0x380] sm:$0xff]
    %v2051 = vld [vmem:[#allocation28 + $0x388] sm:$0xff]
    %v2052 = vld [vmem:[#allocation28 + $0x390] sm:$0xff]
    %v2053 = vld [vmem:[#allocation28 + $0x398] sm:$0xff]
    %v2054 = vld [vmem:[#allocation28 + $0x3a0] sm:$0xff]
    %v2055 = vld [vmem:[#allocation28 + $0x3a8] sm:$0xff]
    %v2056 = vld [vmem:[#allocation28 + $0x3b0] sm:$0xff]
    %v2057 = vld [vmem:[#allocation28 + $0x3b8] sm:$0xff]
    %v2058 = vld [vmem:[#allocation28 + $0x3c0] sm:$0xff]
    %v2059 = vld [vmem:[#allocation28 + $0x3c8] sm:$0xff]
    %v2060 = vld [vmem:[#allocation28 + $0x3d0] sm:$0xff]
    %v2061 = vld [vmem:[#allocation28 + $0x3d8] sm:$0xff]
    %v2062 = vld [vmem:[#allocation28 + $0x3e0] sm:$0xff]
    %v2063 = vld [vmem:[#allocation28 + $0x3e8] sm:$0xff]
    %v2064 = vld [vmem:[#allocation28 + $0x3f0] sm:$0xff]
    %v2065 = vld [vmem:[#allocation28 + $0x3f8] sm:$0xff]
    %v2066 = vld [vmem:[#allocation28 + $0x400] sm:$0xff]
    %v2067 = vld [vmem:[#allocation28 + $0x408] sm:$0xff]
    %v2068 = vld [vmem:[#allocation28 + $0x410] sm:$0xff]
    %v2069 = vld [vmem:[#allocation28 + $0x418] sm:$0xff]
    %v2070 = vld [vmem:[#allocation28 + $0x420] sm:$0xff]
    %v2071 = vld [vmem:[#allocation28 + $0x428] sm:$0xff]
    %v2072 = vld [vmem:[#allocation28 + $0x430] sm:$0xff]
    %v2073 = vld [vmem:[#allocation28 + $0x438] sm:$0xff]
    %v2074 = vld [vmem:[#allocation28 + $0x440] sm:$0xff]
    %v2075 = vld [vmem:[#allocation28 + $0x448] sm:$0xff]
    %v2076 = vld [vmem:[#allocation28 + $0x450] sm:$0xff]
    %v2077 = vld [vmem:[#allocation28 + $0x458] sm:$0xff]
    %v2078 = vld [vmem:[#allocation28 + $0x460] sm:$0xff]
    %v2079 = vld [vmem:[#allocation28 + $0x468] sm:$0xff]
    %v2080 = vld [vmem:[#allocation28 + $0x470] sm:$0xff]
    %v2081 = vld [vmem:[#allocation28 + $0x478] sm:$0xff]
    %v2082 = vld [vmem:[#allocation28 + $0x480] sm:$0xff]
    %v2083 = vld [vmem:[#allocation28 + $0x488] sm:$0xff]
    %v2084 = vld [vmem:[#allocation28 + $0x490] sm:$0xff]
    %v2085 = vld [vmem:[#allocation28 + $0x498] sm:$0xff]
    %v2086 = vld [vmem:[#allocation28 + $0x4a0] sm:$0xff]
    %v2087 = vld [vmem:[#allocation28 + $0x4a8] sm:$0xff]
    %v2088 = vld [vmem:[#allocation28 + $0x4b0] sm:$0xff]
    %v2089 = vld [vmem:[#allocation28 + $0x4b8] sm:$0xff]
    %v2090 = vld [vmem:[#allocation28 + $0x4c0] sm:$0xff]
    %v2091 = vld [vmem:[#allocation28 + $0x4c8] sm:$0xff]
    %v2092 = vld [vmem:[#allocation28 + $0x4d0] sm:$0xff]
    %v2093 = vld [vmem:[#allocation28 + $0x4d8] sm:$0xff]
    %v2094 = vld [vmem:[#allocation28 + $0x4e0] sm:$0xff]
    %v2095 = vld [vmem:[#allocation28 + $0x4e8] sm:$0xff]
    %v2096 = vld [vmem:[#allocation28 + $0x4f0] sm:$0xff]
    %v2097 = vld [vmem:[#allocation28 + $0x4f8] sm:$0xff]
    %v2098 = vld [vmem:[#allocation28 + $0x500] sm:$0xff]
    %v2099 = vld [vmem:[#allocation28 + $0x508] sm:$0xff]
    %v2100 = vld [vmem:[#allocation28 + $0x510] sm:$0xff]
    %v2101 = vld [vmem:[#allocation28 + $0x518] sm:$0xff]
    %v2102 = vld [vmem:[#allocation28 + $0x520] sm:$0xff]
    %v2103 = vld [vmem:[#allocation28 + $0x528] sm:$0xff]
    %v2104 = vld [vmem:[#allocation28 + $0x530] sm:$0xff]
    %v2105 = vld [vmem:[#allocation28 + $0x538] sm:$0xff]
    %v2106 = vld [vmem:[#allocation28 + $0x540] sm:$0xff]
    %v2107 = vld [vmem:[#allocation28 + $0x548] sm:$0xff]
    %v2108 = vld [vmem:[#allocation28 + $0x550] sm:$0xff]
    %v2109 = vld [vmem:[#allocation28 + $0x558] sm:$0xff]
    %v2110 = vld [vmem:[#allocation28 + $0x560] sm:$0xff]
    %v2111 = vld [vmem:[#allocation28 + $0x568] sm:$0xff]
    %v2112 = vld [vmem:[#allocation28 + $0x570] sm:$0xff]
    %v2113 = vld [vmem:[#allocation28 + $0x578] sm:$0xff]
    %v2114 = vld [vmem:[#allocation28 + $0x580] sm:$0xff]
    %v2115 = vld [vmem:[#allocation28 + $0x588] sm:$0xff]
    %v2116 = vld [vmem:[#allocation28 + $0x590] sm:$0xff]
    %v2117 = vld [vmem:[#allocation28 + $0x598] sm:$0xff]
    %v2118 = vld [vmem:[#allocation28 + $0x5a0] sm:$0xff]
    %v2119 = vld [vmem:[#allocation28 + $0x5a8] sm:$0xff]
    %v2120 = vld [vmem:[#allocation28 + $0x5b0] sm:$0xff]
    %v2121 = vld [vmem:[#allocation28 + $0x5b8] sm:$0xff]
    %v2122 = vld [vmem:[#allocation28 + $0x5c0] sm:$0xff]
    %v2123 = vld [vmem:[#allocation28 + $0x5c8] sm:$0xff]
    %v2124 = vld [vmem:[#allocation28 + $0x5d0] sm:$0xff]
    %v2125 = vld [vmem:[#allocation28 + $0x5d8] sm:$0xff]
    %v2126 = vld [vmem:[#allocation28 + $0x5e0] sm:$0xff]
    %v2127 = vld [vmem:[#allocation28 + $0x5e8] sm:$0xff]
    %v2128 = vld [vmem:[#allocation28 + $0x5f0] sm:$0xff]
    %v2129 = vld [vmem:[#allocation28 + $0x5f8] sm:$0xff]
    %v2130 = vld [vmem:[#allocation28 + $0x600] sm:$0xff]
    %v2131 = vld [vmem:[#allocation28 + $0x608] sm:$0xff]
    %v2132 = vld [vmem:[#allocation28 + $0x610] sm:$0xff]
    %v2133 = vld [vmem:[#allocation28 + $0x618] sm:$0xff]
    %v2134 = vld [vmem:[#allocation28 + $0x620] sm:$0xff]
    %v2135 = vld [vmem:[#allocation28 + $0x628] sm:$0xff]
    %v2136 = vld [vmem:[#allocation28 + $0x630] sm:$0xff]
    %v2137 = vld [vmem:[#allocation28 + $0x638] sm:$0xff]
    %v2138 = vld [vmem:[#allocation28 + $0x640] sm:$0xff]
    %v2139 = vld [vmem:[#allocation28 + $0x648] sm:$0xff]
    %v2140 = vld [vmem:[#allocation28 + $0x650] sm:$0xff]
    %v2141 = vld [vmem:[#allocation28 + $0x658] sm:$0xff]
    %v2142 = vld [vmem:[#allocation28 + $0x660] sm:$0xff]
    %v2143 = vld [vmem:[#allocation28 + $0x668] sm:$0xff]
    %v2144 = vld [vmem:[#allocation28 + $0x670] sm:$0xff]
    %v2145 = vld [vmem:[#allocation28 + $0x678] sm:$0xff]
    %v2146 = vld [vmem:[#allocation28 + $0x680] sm:$0xff]
    %v2147 = vld [vmem:[#allocation28 + $0x688] sm:$0xff]
    %v2148 = vld [vmem:[#allocation28 + $0x690] sm:$0xff]
    %v2149 = vld [vmem:[#allocation28 + $0x698] sm:$0xff]
    %v2150 = vld [vmem:[#allocation28 + $0x6a0] sm:$0xff]
    %v2151 = vld [vmem:[#allocation28 + $0x6a8] sm:$0xff]
    %v2152 = vld [vmem:[#allocation28 + $0x6b0] sm:$0xff]
    %v2153 = vld [vmem:[#allocation28 + $0x6b8] sm:$0xff]
    %v2154 = vld [vmem:[#allocation28 + $0x6c0] sm:$0xff]
    %v2155 = vld [vmem:[#allocation28 + $0x6c8] sm:$0xff]
    %v2156 = vld [vmem:[#allocation28 + $0x6d0] sm:$0xff]
    %v2157 = vld [vmem:[#allocation28 + $0x6d8] sm:$0xff]
    %v2158 = vld [vmem:[#allocation28 + $0x6e0] sm:$0xff]
    %v2159 = vld [vmem:[#allocation28 + $0x6e8] sm:$0xff]
    %v2160 = vld [vmem:[#allocation28 + $0x6f0] sm:$0xff]
    %v2161 = vld [vmem:[#allocation28 + $0x6f8] sm:$0xff]
    %v2162 = vld [vmem:[#allocation28 + $0x700] sm:$0xff]
    %v2163 = vld [vmem:[#allocation28 + $0x708] sm:$0xff]
    %v2164 = vld [vmem:[#allocation28 + $0x710] sm:$0xff]
    %v2165 = vld [vmem:[#allocation28 + $0x718] sm:$0xff]
    %v2166 = vld [vmem:[#allocation28 + $0x720] sm:$0xff]
    %v2167 = vld [vmem:[#allocation28 + $0x728] sm:$0xff]
    %v2168 = vld [vmem:[#allocation28 + $0x730] sm:$0xff]
    %v2169 = vld [vmem:[#allocation28 + $0x738] sm:$0xff]
    %v2170 = vld [vmem:[#allocation28 + $0x740] sm:$0xff]
    %v2171 = vld [vmem:[#allocation28 + $0x748] sm:$0xff]
    %v2172 = vld [vmem:[#allocation28 + $0x750] sm:$0xff]
    %v2173 = vld [vmem:[#allocation28 + $0x758] sm:$0xff]
    %v2174 = vld [vmem:[#allocation28 + $0x760] sm:$0xff]
    %v2175 = vld [vmem:[#allocation28 + $0x768] sm:$0xff]
    %v2176 = vld [vmem:[#allocation28 + $0x770] sm:$0xff]
    %v2177 = vld [vmem:[#allocation28 + $0x778] sm:$0xff]
    %v2178 = vld [vmem:[#allocation28 + $0x780] sm:$0xff]
    %v2179 = vld [vmem:[#allocation28 + $0x788] sm:$0xff]
    %v2180 = vld [vmem:[#allocation28 + $0x790] sm:$0xff]
    %v2181 = vld [vmem:[#allocation28 + $0x798] sm:$0xff]
    %v2182 = vld [vmem:[#allocation28 + $0x7a0] sm:$0xff]
    %v2183 = vld [vmem:[#allocation28 + $0x7a8] sm:$0xff]
    %v2184 = vld [vmem:[#allocation28 + $0x7b0] sm:$0xff]
    %v2185 = vld [vmem:[#allocation28 + $0x7b8] sm:$0xff]
    %v2186 = vld [vmem:[#allocation28 + $0x7c0] sm:$0xff]
    %v2187 = vld [vmem:[#allocation28 + $0x7c8] sm:$0xff]
    %v2188 = vld [vmem:[#allocation28 + $0x7d0] sm:$0xff]
    %v2189 = vld [vmem:[#allocation28 + $0x7d8] sm:$0xff]
    %v2190 = vld [vmem:[#allocation28 + $0x7e0] sm:$0xff]
    %v2191 = vld [vmem:[#allocation28 + $0x7e8] sm:$0xff]
    %v2192 = vld [vmem:[#allocation28 + $0x7f0] sm:$0xff]
    %v2193 = vld [vmem:[#allocation28 + $0x7f8] sm:$0xff]
    %v2194 = vld [vmem:[#allocation30] sm:$0xf]
    %v2196 = vlaneseq
    %v2197 = vshrl.u32 %v2196, 7
    %v2198 = vsub.s32 0, %v2197
    %v2199 = vrot.slane %v2194, %v2198
    %v2200 = vlaneseq
    %v2201 = vshrl.u32 %v2200, 7
    %v2202 = vsub.s32 1, %v2201
    %v2203 = vrot.slane %v2194, %v2202
    %v2204 = vlaneseq
    %v2205 = vshrl.u32 %v2204, 7
    %v2206 = vsub.s32 2, %v2205
    %v2207 = vrot.slane %v2194, %v2206
    %v2208 = vlaneseq
    %v2209 = vshrl.u32 %v2208, 7
    %v2210 = vsub.s32 3, %v2209
    %v2211 = vrot.slane %v2194, %v2210
    %2216 = vmatprep.subr.mxu0 %v1939
    %2217 = vmatpush1.msra.mxu0 %v1938
    %2218 = vmatprep.subr.mxu0 %v1943
    %2219 = vmatpush1.msra.mxu0 %v1942
    %2220 = vmatprep.subr.mxu0 %v1947
    %2221 = vmatpush1.msra.mxu0 %v1946
    %2222 = vmatprep.subr.mxu0 %v1951
    %2223 = vmatpush1.msra.mxu0 %v1950
    %2224 = vmatprep.subr.mxu0 %v1955
    %2225 = vmatpush1.msra.mxu0 %v1954
    %2226 = vmatprep.subr.mxu0 %v1959
    %2227 = vmatpush1.msra.mxu0 %v1958
    %2228 = vmatprep.subr.mxu0 %v1963
    %2229 = vmatpush1.msra.mxu0 %v1962
    %2230 = vmatprep.subr.mxu0 %v1967
    %2231 = vmatpush1.msra.mxu0 %v1966
    %2232 = vmatprep.subr.mxu0 %v1971
    %2233 = vmatpush1.msra.mxu0 %v1970
    %2234 = vmatprep.subr.mxu0 %v1975
    %2235 = vmatpush1.msra.mxu0 %v1974
    %2236 = vmatprep.subr.mxu0 %v1979
    %2237 = vmatpush1.msra.mxu0 %v1978
    %2238 = vmatprep.subr.mxu0 %v1983
    %2239 = vmatpush1.msra.mxu0 %v1982
    %2240 = vmatprep.subr.mxu0 %v1987
    %2241 = vmatpush1.msra.mxu0 %v1986
    %2242 = vmatprep.subr.mxu0 %v1991
    %2243 = vmatpush1.msra.mxu0 %v1990
    %2244 = vmatprep.subr.mxu0 %v1995
    %2245 = vmatpush1.msra.mxu0 %v1994
    %2246 = vmatprep.subr.mxu0 %v1999
    %2247 = vmatpush1.msra.mxu0 %v1998
    %2248 = vmatprep.subr.mxu0 %v2003
    %2249 = vmatpush1.msra.mxu0 %v2002
    %2250 = vmatprep.subr.mxu0 %v2007
    %2251 = vmatpush1.msra.mxu0 %v2006
    %2252 = vmatprep.subr.mxu0 %v2011
    %2253 = vmatpush1.msra.mxu0 %v2010
    %2254 = vmatprep.subr.mxu0 %v2015
    %2255 = vmatpush1.msra.mxu0 %v2014
    %2256 = vmatprep.subr.mxu0 %v2019
    %2257 = vmatpush1.msra.mxu0 %v2018
    %2258 = vmatprep.subr.mxu0 %v2023
    %2259 = vmatpush1.msra.mxu0 %v2022
    %2260 = vmatprep.subr.mxu0 %v2027
    %2261 = vmatpush1.msra.mxu0 %v2026
    %2262 = vmatprep.subr.mxu0 %v2031
    %2263 = vmatpush1.msra.mxu0 %v2030
    %2264 = vmatprep.subr.mxu0 %v2035
    %2265 = vmatpush1.msra.mxu0 %v2034
    %2266 = vmatprep.subr.mxu0 %v2039
    %2267 = vmatpush1.msra.mxu0 %v2038
    %2268 = vmatprep.subr.mxu0 %v2043
    %2269 = vmatpush1.msra.mxu0 %v2042
    %2270 = vmatprep.subr.mxu0 %v2047
    %2271 = vmatpush1.msra.mxu0 %v2046
    %2272 = vmatprep.subr.mxu0 %v2051
    %2273 = vmatpush1.msra.mxu0 %v2050
    %2274 = vmatprep.subr.mxu0 %v2055
    %2275 = vmatpush1.msra.mxu0 %v2054
    %2276 = vmatprep.subr.mxu0 %v2059
    %2277 = vmatpush1.msra.mxu0 %v2058
    %2278 = vmatprep.subr.mxu0 %v2063
    %2279 = vmatpush1.msra.mxu0 %v2062
    %2280 = vmatprep.mubr.f32.mxu0 %v1935
    %2281 = vmatmul.mubr.f32.gmra.mrb[0].mxu0 %v1934
    %v2282 = vpop.f32.mrb[0].mxu0
    %v2283 = vadd.f32 %v2199, %v2282
    %v2284 = vpop.f32.mrb[0].mxu0
    %v2285 = vadd.f32 %v2203, %v2284
    %2286 = vdwg.mxu0
    %2287 = vmatprep.subr.mxu0 %v2067
    %2288 = vmatpush1.msra.mxu0 %v2066
    %2289 = vmatprep.subr.mxu0 %v2071
    %2290 = vmatpush1.msra.mxu0 %v2070
    %2291 = vmatprep.subr.mxu0 %v2075
    %2292 = vmatpush1.msra.mxu0 %v2074
    %2293 = vmatprep.subr.mxu0 %v2079
    %2294 = vmatpush1.msra.mxu0 %v2078
    %2295 = vmatprep.subr.mxu0 %v2083
    %2296 = vmatpush1.msra.mxu0 %v2082
    %2297 = vmatprep.subr.mxu0 %v2087
    %2298 = vmatpush1.msra.mxu0 %v2086
    %2299 = vmatprep.subr.mxu0 %v2091
    %2300 = vmatpush1.msra.mxu0 %v2090
    %2301 = vmatprep.subr.mxu0 %v2095
    %2302 = vmatpush1.msra.mxu0 %v2094
    %2303 = vmatprep.subr.mxu0 %v2099
    %2304 = vmatpush1.msra.mxu0 %v2098
    %2305 = vmatprep.subr.mxu0 %v2103
    %2306 = vmatpush1.msra.mxu0 %v2102
    %2307 = vmatprep.subr.mxu0 %v2107
    %2308 = vmatpush1.msra.mxu0 %v2106
    %2309 = vmatprep.subr.mxu0 %v2111
    %2310 = vmatpush1.msra.mxu0 %v2110
    %2311 = vmatprep.subr.mxu0 %v2115
    %2312 = vmatpush1.msra.mxu0 %v2114
    %2313 = vmatprep.subr.mxu0 %v2119
    %2314 = vmatpush1.msra.mxu0 %v2118
    %2315 = vmatprep.subr.mxu0 %v2123
    %2316 = vmatpush1.msra.mxu0 %v2122
    %2317 = vmatprep.subr.mxu0 %v2127
    %2318 = vmatpush1.msra.mxu0 %v2126
    %2319 = vmatprep.subr.mxu0 %v2131
    %2320 = vmatpush1.msra.mxu0 %v2130
    %2321 = vmatprep.subr.mxu0 %v2135
    %2322 = vmatpush1.msra.mxu0 %v2134
    %2323 = vmatprep.subr.mxu0 %v2139
    %2324 = vmatpush1.msra.mxu0 %v2138
    %2325 = vmatprep.subr.mxu0 %v2143
    %2326 = vmatpush1.msra.mxu0 %v2142
    %2327 = vmatprep.subr.mxu0 %v2147
    %2328 = vmatpush1.msra.mxu0 %v2146
    %2329 = vmatprep.subr.mxu0 %v2151
    %2330 = vmatpush1.msra.mxu0 %v2150
    %2331 = vmatprep.subr.mxu0 %v2155
    %2332 = vmatpush1.msra.mxu0 %v2154
    %2333 = vmatprep.subr.mxu0 %v2159
    %2334 = vmatpush1.msra.mxu0 %v2158
    %2335 = vmatprep.subr.mxu0 %v2163
    %2336 = vmatpush1.msra.mxu0 %v2162
    %2337 = vmatprep.subr.mxu0 %v2167
    %2338 = vmatpush1.msra.mxu0 %v2166
    %2339 = vmatprep.subr.mxu0 %v2171
    %2340 = vmatpush1.msra.mxu0 %v2170
    %2341 = vmatprep.subr.mxu0 %v2175
    %2342 = vmatpush1.msra.mxu0 %v2174
    %2343 = vmatprep.subr.mxu0 %v2179
    %2344 = vmatpush1.msra.mxu0 %v2178
    %2345 = vmatprep.subr.mxu0 %v2183
    %2346 = vmatpush1.msra.mxu0 %v2182
    %2347 = vmatprep.subr.mxu0 %v2187
    %2348 = vmatpush1.msra.mxu0 %v2186
    %2349 = vmatprep.subr.mxu0 %v2191
    %2350 = vmatpush1.msra.mxu0 %v2190
    %2351 = vmatprep.mubr.f32.mxu0 %v1937
    %2352 = vmatmul.mubr.f32.gmra.mrb[0].mxu0 %v1936
    %v2353 = vpop.f32.mrb[0].mxu0
    %v2354 = vadd.f32 %v2283, %v2353
    %v2355 = vpop.f32.mrb[0].mxu0
    %v2356 = vadd.f32 %v2285, %v2355
    %2357 = vdwg.mxu0
    %2358 = vmatprep.subr.mxu0 %v1941
    %2359 = vmatpush1.msra.mxu0 %v1940
    %2360 = vmatprep.subr.mxu0 %v1945
    %2361 = vmatpush1.msra.mxu0 %v1944
    %2362 = vmatprep.subr.mxu0 %v1949
    %2363 = vmatpush1.msra.mxu0 %v1948
    %2364 = vmatprep.subr.mxu0 %v1953
    %2365 = vmatpush1.msra.mxu0 %v1952
    %2366 = vmatprep.subr.mxu0 %v1957
    %2367 = vmatpush1.msra.mxu0 %v1956
    %2368 = vmatprep.subr.mxu0 %v1961
    %2369 = vmatpush1.msra.mxu0 %v1960
    %2370 = vmatprep.subr.mxu0 %v1965
    %2371 = vmatpush1.msra.mxu0 %v1964
    %2372 = vmatprep.subr.mxu0 %v1969
    %2373 = vmatpush1.msra.mxu0 %v1968
    %2374 = vmatprep.subr.mxu0 %v1973
    %2375 = vmatpush1.msra.mxu0 %v1972
    %2376 = vmatprep.subr.mxu0 %v1977
    %2377 = vmatpush1.msra.mxu0 %v1976
    %2378 = vmatprep.subr.mxu0 %v1981
    %2379 = vmatpush1.msra.mxu0 %v1980
    %2380 = vmatprep.subr.mxu0 %v1985
    %2381 = vmatpush1.msra.mxu0 %v1984
    %2382 = vmatprep.subr.mxu0 %v1989
    %2383 = vmatpush1.msra.mxu0 %v1988
    %2384 = vmatprep.subr.mxu0 %v1993
    %2385 = vmatpush1.msra.mxu0 %v1992
    %2386 = vmatprep.subr.mxu0 %v1997
    %2387 = vmatpush1.msra.mxu0 %v1996
    %2388 = vmatprep.subr.mxu0 %v2001
    %2389 = vmatpush1.msra.mxu0 %v2000
    %2390 = vmatprep.subr.mxu0 %v2005
    %2391 = vmatpush1.msra.mxu0 %v2004
    %2392 = vmatprep.subr.mxu0 %v2009
    %2393 = vmatpush1.msra.mxu0 %v2008
    %2394 = vmatprep.subr.mxu0 %v2013
    %2395 = vmatpush1.msra.mxu0 %v2012
    %2396 = vmatprep.subr.mxu0 %v2017
    %2397 = vmatpush1.msra.mxu0 %v2016
    %2398 = vmatprep.subr.mxu0 %v2021
    %2399 = vmatpush1.msra.mxu0 %v2020
    %2400 = vmatprep.subr.mxu0 %v2025
    %2401 = vmatpush1.msra.mxu0 %v2024
    %2402 = vmatprep.subr.mxu0 %v2029
    %2403 = vmatpush1.msra.mxu0 %v2028
    %2404 = vmatprep.subr.mxu0 %v2033
    %2405 = vmatpush1.msra.mxu0 %v2032
    %2406 = vmatprep.subr.mxu0 %v2037
    %2407 = vmatpush1.msra.mxu0 %v2036
    %2408 = vmatprep.subr.mxu0 %v2041
    %2409 = vmatpush1.msra.mxu0 %v2040
    %2410 = vmatprep.subr.mxu0 %v2045
    %2411 = vmatpush1.msra.mxu0 %v2044
    %2412 = vmatprep.subr.mxu0 %v2049
    %2413 = vmatpush1.msra.mxu0 %v2048
    %2414 = vmatprep.subr.mxu0 %v2053
    %2415 = vmatpush1.msra.mxu0 %v2052
    %2416 = vmatprep.subr.mxu0 %v2057
    %2417 = vmatpush1.msra.mxu0 %v2056
    %2418 = vmatprep.subr.mxu0 %v2061
    %2419 = vmatpush1.msra.mxu0 %v2060
    %2420 = vmatprep.subr.mxu0 %v2065
    %2421 = vmatpush1.msra.mxu0 %v2064
    %2422 = vmatprep.mubr.f32.mxu0 %v1935
    %2423 = vmatmul.mubr.f32.gmra.mrb[0].mxu0 %v1934
    %v2424 = vpop.f32.mrb[0].mxu0
    %v2425 = vadd.f32 %v2207, %v2424
    %v2426 = vpop.f32.mrb[0].mxu0
    %v2427 = vadd.f32 %v2211, %v2426
    %2428 = vdwg.mxu0
    %2429 = vmatprep.subr.mxu0 %v2069
    %2430 = vmatpush1.msra.mxu0 %v2068
    %2431 = vmatprep.subr.mxu0 %v2073
    %2432 = vmatpush1.msra.mxu0 %v2072
    %2433 = vmatprep.subr.mxu0 %v2077
    %2434 = vmatpush1.msra.mxu0 %v2076
    %2435 = vmatprep.subr.mxu0 %v2081
    %2436 = vmatpush1.msra.mxu0 %v2080
    %2437 = vmatprep.subr.mxu0 %v2085
    %2438 = vmatpush1.msra.mxu0 %v2084
    %2439 = vmatprep.subr.mxu0 %v2089
    %2440 = vmatpush1.msra.mxu0 %v2088
    %2441 = vmatprep.subr.mxu0 %v2093
    %2442 = vmatpush1.msra.mxu0 %v2092
    %2443 = vmatprep.subr.mxu0 %v2097
    %2444 = vmatpush1.msra.mxu0 %v2096
    %2445 = vmatprep.subr.mxu0 %v2101
    %2446 = vmatpush1.msra.mxu0 %v2100
    %2447 = vmatprep.subr.mxu0 %v2105
    %2448 = vmatpush1.msra.mxu0 %v2104
    %2449 = vmatprep.subr.mxu0 %v2109
    %2450 = vmatpush1.msra.mxu0 %v2108
    %2451 = vmatprep.subr.mxu0 %v2113
    %2452 = vmatpush1.msra.mxu0 %v2112
    %2453 = vmatprep.subr.mxu0 %v2117
    %2454 = vmatpush1.msra.mxu0 %v2116
    %2455 = vmatprep.subr.mxu0 %v2121
    %2456 = vmatpush1.msra.mxu0 %v2120
    %2457 = vmatprep.subr.mxu0 %v2125
    %2458 = vmatpush1.msra.mxu0 %v2124
    %2459 = vmatprep.subr.mxu0 %v2129
    %2460 = vmatpush1.msra.mxu0 %v2128
    %2461 = vmatprep.subr.mxu0 %v2133
    %2462 = vmatpush1.msra.mxu0 %v2132
    %2463 = vmatprep.subr.mxu0 %v2137
    %2464 = vmatpush1.msra.mxu0 %v2136
    %2465 = vmatprep.subr.mxu0 %v2141
    %2466 = vmatpush1.msra.mxu0 %v2140
    %2467 = vmatprep.subr.mxu0 %v2145
    %2468 = vmatpush1.msra.mxu0 %v2144
    %2469 = vmatprep.subr.mxu0 %v2149
    %2470 = vmatpush1.msra.mxu0 %v2148
    %2471 = vmatprep.subr.mxu0 %v2153
    %2472 = vmatpush1.msra.mxu0 %v2152
    %2473 = vmatprep.subr.mxu0 %v2157
    %2474 = vmatpush1.msra.mxu0 %v2156
    %2475 = vmatprep.subr.mxu0 %v2161
    %2476 = vmatpush1.msra.mxu0 %v2160
    %2477 = vmatprep.subr.mxu0 %v2165
    %2478 = vmatpush1.msra.mxu0 %v2164
    %2479 = vmatprep.subr.mxu0 %v2169
    %2480 = vmatpush1.msra.mxu0 %v2168
    %2481 = vmatprep.subr.mxu0 %v2173
    %2482 = vmatpush1.msra.mxu0 %v2172
    %2483 = vmatprep.subr.mxu0 %v2177
    %2484 = vmatpush1.msra.mxu0 %v2176
    %2485 = vmatprep.subr.mxu0 %v2181
    %2486 = vmatpush1.msra.mxu0 %v2180
    %2487 = vmatprep.subr.mxu0 %v2185
    %2488 = vmatpush1.msra.mxu0 %v2184
    %2489 = vmatprep.subr.mxu0 %v2189
    %2490 = vmatpush1.msra.mxu0 %v2188
    %2491 = vmatprep.subr.mxu0 %v2193
    %2492 = vmatpush1.msra.mxu0 %v2192
    %2493 = vmatprep.mubr.f32.mxu0 %v1937
    %2494 = vmatmul.mubr.f32.gmra.mrb[0].mxu0 %v1936
    %v2495 = vpop.f32.mrb[0].mxu0
    %v2496 = vadd.f32 %v2425, %v2495
    %v2497 = vpop.f32.mrb[0].mxu0
    %v2498 = vadd.f32 %v2427, %v2497
    %2499 = vdwg.mxu0
    %v2500 = vadd.f32 %v2354, %v1764
    %v2501 = vadd.f32 %v2356, %v1766
    %v2502 = vadd.f32 %v2496, %v1835
    %v2503 = vadd.f32 %v2498, %v1837
    %v2504 = vmul.f32 %v2500, 0.5
    %v2505 = vmul.f32 %v2501, 0.5
    %v2506 = vmul.f32 %v2502, 0.5
    %v2507 = vmul.f32 %v2503, 0.5
    %v2508 = vmul.f32 %v2500, 0.70710677
    %v2509 = vmul.f32 %v2501, 0.70710677
    %v2510 = vmul.f32 %v2502, 0.70710677
    %v2511 = vmul.f32 %v2503, 0.70710677
    %v2512 = verf.f32.pop %v2508
    %v2513 = verf.f32.pop %v2509
    %v2514 = verf.f32.pop %v2510
    %v2515 = verf.f32.pop %v2511
    %v2516 = vadd.f32 %v2512, 1.0
    %v2517 = vadd.f32 %v2513, 1.0
    %v2518 = vadd.f32 %v2514, 1.0
    %v2519 = vadd.f32 %v2515, 1.0
    %v2520 = vmul.f32 %v2504, %v2516
    %v2521 = vmul.f32 %v2505, %v2517
    %v2522 = vmul.f32 %v2506, %v2518
    %v2523 = vmul.f32 %v2507, %v2519
    %v2524 = vld [vmem:[#allocation31] sm:$0xff]
    %v2525 = vld [vmem:[#allocation31 + $0x8] sm:$0xff]
    %v2526 = vld [vmem:[#allocation31 + $0x10] sm:$0xff]
    %v2527 = vld [vmem:[#allocation31 + $0x18] sm:$0xff]
    %v2528 = vld [vmem:[#allocation31 + $0x20] sm:$0xff]
    %v2529 = vld [vmem:[#allocation31 + $0x28] sm:$0xff]
    %v2530 = vld [vmem:[#allocation31 + $0x30] sm:$0xff]
    %v2531 = vld [vmem:[#allocation31 + $0x38] sm:$0xff]
    %v2532 = vld [vmem:[#allocation31 + $0x40] sm:$0xff]
    %v2533 = vld [vmem:[#allocation31 + $0x48] sm:$0xff]
    %v2534 = vld [vmem:[#allocation31 + $0x50] sm:$0xff]
    %v2535 = vld [vmem:[#allocation31 + $0x58] sm:$0xff]
    %v2536 = vld [vmem:[#allocation31 + $0x60] sm:$0xff]
    %v2537 = vld [vmem:[#allocation31 + $0x68] sm:$0xff]
    %v2538 = vld [vmem:[#allocation31 + $0x70] sm:$0xff]
    %v2539 = vld [vmem:[#allocation31 + $0x78] sm:$0xff]
    %v2540 = vld [vmem:[#allocation31 + $0x80] sm:$0xff]
    %v2541 = vld [vmem:[#allocation31 + $0x88] sm:$0xff]
    %v2542 = vld [vmem:[#allocation31 + $0x90] sm:$0xff]
    %v2543 = vld [vmem:[#allocation31 + $0x98] sm:$0xff]
    %v2544 = vld [vmem:[#allocation31 + $0xa0] sm:$0xff]
    %v2545 = vld [vmem:[#allocation31 + $0xa8] sm:$0xff]
    %v2546 = vld [vmem:[#allocation31 + $0xb0] sm:$0xff]
    %v2547 = vld [vmem:[#allocation31 + $0xb8] sm:$0xff]
    %v2548 = vld [vmem:[#allocation31 + $0xc0] sm:$0xff]
    %v2549 = vld [vmem:[#allocation31 + $0xc8] sm:$0xff]
    %v2550 = vld [vmem:[#allocation31 + $0xd0] sm:$0xff]
    %v2551 = vld [vmem:[#allocation31 + $0xd8] sm:$0xff]
    %v2552 = vld [vmem:[#allocation31 + $0xe0] sm:$0xff]
    %v2553 = vld [vmem:[#allocation31 + $0xe8] sm:$0xff]
    %v2554 = vld [vmem:[#allocation31 + $0xf0] sm:$0xff]
    %v2555 = vld [vmem:[#allocation31 + $0xf8] sm:$0xff]
    %v2556 = vld [vmem:[#allocation31 + $0x100] sm:$0xff]
    %v2557 = vld [vmem:[#allocation31 + $0x108] sm:$0xff]
    %v2558 = vld [vmem:[#allocation31 + $0x110] sm:$0xff]
    %v2559 = vld [vmem:[#allocation31 + $0x118] sm:$0xff]
    %v2560 = vld [vmem:[#allocation31 + $0x120] sm:$0xff]
    %v2561 = vld [vmem:[#allocation31 + $0x128] sm:$0xff]
    %v2562 = vld [vmem:[#allocation31 + $0x130] sm:$0xff]
    %v2563 = vld [vmem:[#allocation31 + $0x138] sm:$0xff]
    %v2564 = vld [vmem:[#allocation31 + $0x140] sm:$0xff]
    %v2565 = vld [vmem:[#allocation31 + $0x148] sm:$0xff]
    %v2566 = vld [vmem:[#allocation31 + $0x150] sm:$0xff]
    %v2567 = vld [vmem:[#allocation31 + $0x158] sm:$0xff]
    %v2568 = vld [vmem:[#allocation31 + $0x160] sm:$0xff]
    %v2569 = vld [vmem:[#allocation31 + $0x168] sm:$0xff]
    %v2570 = vld [vmem:[#allocation31 + $0x170] sm:$0xff]
    %v2571 = vld [vmem:[#allocation31 + $0x178] sm:$0xff]
    %v2572 = vld [vmem:[#allocation31 + $0x180] sm:$0xff]
    %v2573 = vld [vmem:[#allocation31 + $0x188] sm:$0xff]
    %v2574 = vld [vmem:[#allocation31 + $0x190] sm:$0xff]
    %v2575 = vld [vmem:[#allocation31 + $0x198] sm:$0xff]
    %v2576 = vld [vmem:[#allocation31 + $0x1a0] sm:$0xff]
    %v2577 = vld [vmem:[#allocation31 + $0x1a8] sm:$0xff]
    %v2578 = vld [vmem:[#allocation31 + $0x1b0] sm:$0xff]
    %v2579 = vld [vmem:[#allocation31 + $0x1b8] sm:$0xff]
    %v2580 = vld [vmem:[#allocation31 + $0x1c0] sm:$0xff]
    %v2581 = vld [vmem:[#allocation31 + $0x1c8] sm:$0xff]
    %v2582 = vld [vmem:[#allocation31 + $0x1d0] sm:$0xff]
    %v2583 = vld [vmem:[#allocation31 + $0x1d8] sm:$0xff]
    %v2584 = vld [vmem:[#allocation31 + $0x1e0] sm:$0xff]
    %v2585 = vld [vmem:[#allocation31 + $0x1e8] sm:$0xff]
    %v2586 = vld [vmem:[#allocation31 + $0x1f0] sm:$0xff]
    %v2587 = vld [vmem:[#allocation31 + $0x1f8] sm:$0xff]
    %v2588 = vld [vmem:[#allocation31 + $0x200] sm:$0xff]
    %v2589 = vld [vmem:[#allocation31 + $0x208] sm:$0xff]
    %v2590 = vld [vmem:[#allocation31 + $0x210] sm:$0xff]
    %v2591 = vld [vmem:[#allocation31 + $0x218] sm:$0xff]
    %v2592 = vld [vmem:[#allocation31 + $0x220] sm:$0xff]
    %v2593 = vld [vmem:[#allocation31 + $0x228] sm:$0xff]
    %v2594 = vld [vmem:[#allocation31 + $0x230] sm:$0xff]
    %v2595 = vld [vmem:[#allocation31 + $0x238] sm:$0xff]
    %v2596 = vld [vmem:[#allocation31 + $0x240] sm:$0xff]
    %v2597 = vld [vmem:[#allocation31 + $0x248] sm:$0xff]
    %v2598 = vld [vmem:[#allocation31 + $0x250] sm:$0xff]
    %v2599 = vld [vmem:[#allocation31 + $0x258] sm:$0xff]
    %v2600 = vld [vmem:[#allocation31 + $0x260] sm:$0xff]
    %v2601 = vld [vmem:[#allocation31 + $0x268] sm:$0xff]
    %v2602 = vld [vmem:[#allocation31 + $0x270] sm:$0xff]
    %v2603 = vld [vmem:[#allocation31 + $0x278] sm:$0xff]
    %v2604 = vld [vmem:[#allocation31 + $0x280] sm:$0xff]
    %v2605 = vld [vmem:[#allocation31 + $0x288] sm:$0xff]
    %v2606 = vld [vmem:[#allocation31 + $0x290] sm:$0xff]
    %v2607 = vld [vmem:[#allocation31 + $0x298] sm:$0xff]
    %v2608 = vld [vmem:[#allocation31 + $0x2a0] sm:$0xff]
    %v2609 = vld [vmem:[#allocation31 + $0x2a8] sm:$0xff]
    %v2610 = vld [vmem:[#allocation31 + $0x2b0] sm:$0xff]
    %v2611 = vld [vmem:[#allocation31 + $0x2b8] sm:$0xff]
    %v2612 = vld [vmem:[#allocation31 + $0x2c0] sm:$0xff]
    %v2613 = vld [vmem:[#allocation31 + $0x2c8] sm:$0xff]
    %v2614 = vld [vmem:[#allocation31 + $0x2d0] sm:$0xff]
    %v2615 = vld [vmem:[#allocation31 + $0x2d8] sm:$0xff]
    %v2616 = vld [vmem:[#allocation31 + $0x2e0] sm:$0xff]
    %v2617 = vld [vmem:[#allocation31 + $0x2e8] sm:$0xff]
    %v2618 = vld [vmem:[#allocation31 + $0x2f0] sm:$0xff]
    %v2619 = vld [vmem:[#allocation31 + $0x2f8] sm:$0xff]
    %v2620 = vld [vmem:[#allocation31 + $0x300] sm:$0xff]
    %v2621 = vld [vmem:[#allocation31 + $0x308] sm:$0xff]
    %v2622 = vld [vmem:[#allocation31 + $0x310] sm:$0xff]
    %v2623 = vld [vmem:[#allocation31 + $0x318] sm:$0xff]
    %v2624 = vld [vmem:[#allocation31 + $0x320] sm:$0xff]
    %v2625 = vld [vmem:[#allocation31 + $0x328] sm:$0xff]
    %v2626 = vld [vmem:[#allocation31 + $0x330] sm:$0xff]
    %v2627 = vld [vmem:[#allocation31 + $0x338] sm:$0xff]
    %v2628 = vld [vmem:[#allocation31 + $0x340] sm:$0xff]
    %v2629 = vld [vmem:[#allocation31 + $0x348] sm:$0xff]
    %v2630 = vld [vmem:[#allocation31 + $0x350] sm:$0xff]
    %v2631 = vld [vmem:[#allocation31 + $0x358] sm:$0xff]
    %v2632 = vld [vmem:[#allocation31 + $0x360] sm:$0xff]
    %v2633 = vld [vmem:[#allocation31 + $0x368] sm:$0xff]
    %v2634 = vld [vmem:[#allocation31 + $0x370] sm:$0xff]
    %v2635 = vld [vmem:[#allocation31 + $0x378] sm:$0xff]
    %v2636 = vld [vmem:[#allocation31 + $0x380] sm:$0xff]
    %v2637 = vld [vmem:[#allocation31 + $0x388] sm:$0xff]
    %v2638 = vld [vmem:[#allocation31 + $0x390] sm:$0xff]
    %v2639 = vld [vmem:[#allocation31 + $0x398] sm:$0xff]
    %v2640 = vld [vmem:[#allocation31 + $0x3a0] sm:$0xff]
    %v2641 = vld [vmem:[#allocation31 + $0x3a8] sm:$0xff]
    %v2642 = vld [vmem:[#allocation31 + $0x3b0] sm:$0xff]
    %v2643 = vld [vmem:[#allocation31 + $0x3b8] sm:$0xff]
    %v2644 = vld [vmem:[#allocation31 + $0x3c0] sm:$0xff]
    %v2645 = vld [vmem:[#allocation31 + $0x3c8] sm:$0xff]
    %v2646 = vld [vmem:[#allocation31 + $0x3d0] sm:$0xff]
    %v2647 = vld [vmem:[#allocation31 + $0x3d8] sm:$0xff]
    %v2648 = vld [vmem:[#allocation31 + $0x3e0] sm:$0xff]
    %v2649 = vld [vmem:[#allocation31 + $0x3e8] sm:$0xff]
    %v2650 = vld [vmem:[#allocation31 + $0x3f0] sm:$0xff]
    %v2651 = vld [vmem:[#allocation31 + $0x3f8] sm:$0xff]
    %v2652 = vld [vmem:[#allocation31 + $0x400] sm:$0xff]
    %v2653 = vld [vmem:[#allocation31 + $0x408] sm:$0xff]
    %v2654 = vld [vmem:[#allocation31 + $0x410] sm:$0xff]
    %v2655 = vld [vmem:[#allocation31 + $0x418] sm:$0xff]
    %v2656 = vld [vmem:[#allocation31 + $0x420] sm:$0xff]
    %v2657 = vld [vmem:[#allocation31 + $0x428] sm:$0xff]
    %v2658 = vld [vmem:[#allocation31 + $0x430] sm:$0xff]
    %v2659 = vld [vmem:[#allocation31 + $0x438] sm:$0xff]
    %v2660 = vld [vmem:[#allocation31 + $0x440] sm:$0xff]
    %v2661 = vld [vmem:[#allocation31 + $0x448] sm:$0xff]
    %v2662 = vld [vmem:[#allocation31 + $0x450] sm:$0xff]
    %v2663 = vld [vmem:[#allocation31 + $0x458] sm:$0xff]
    %v2664 = vld [vmem:[#allocation31 + $0x460] sm:$0xff]
    %v2665 = vld [vmem:[#allocation31 + $0x468] sm:$0xff]
    %v2666 = vld [vmem:[#allocation31 + $0x470] sm:$0xff]
    %v2667 = vld [vmem:[#allocation31 + $0x478] sm:$0xff]
    %v2668 = vld [vmem:[#allocation31 + $0x480] sm:$0xff]
    %v2669 = vld [vmem:[#allocation31 + $0x488] sm:$0xff]
    %v2670 = vld [vmem:[#allocation31 + $0x490] sm:$0xff]
    %v2671 = vld [vmem:[#allocation31 + $0x498] sm:$0xff]
    %v2672 = vld [vmem:[#allocation31 + $0x4a0] sm:$0xff]
    %v2673 = vld [vmem:[#allocation31 + $0x4a8] sm:$0xff]
    %v2674 = vld [vmem:[#allocation31 + $0x4b0] sm:$0xff]
    %v2675 = vld [vmem:[#allocation31 + $0x4b8] sm:$0xff]
    %v2676 = vld [vmem:[#allocation31 + $0x4c0] sm:$0xff]
    %v2677 = vld [vmem:[#allocation31 + $0x4c8] sm:$0xff]
    %v2678 = vld [vmem:[#allocation31 + $0x4d0] sm:$0xff]
    %v2679 = vld [vmem:[#allocation31 + $0x4d8] sm:$0xff]
    %v2680 = vld [vmem:[#allocation31 + $0x4e0] sm:$0xff]
    %v2681 = vld [vmem:[#allocation31 + $0x4e8] sm:$0xff]
    %v2682 = vld [vmem:[#allocation31 + $0x4f0] sm:$0xff]
    %v2683 = vld [vmem:[#allocation31 + $0x4f8] sm:$0xff]
    %v2684 = vld [vmem:[#allocation31 + $0x500] sm:$0xff]
    %v2685 = vld [vmem:[#allocation31 + $0x508] sm:$0xff]
    %v2686 = vld [vmem:[#allocation31 + $0x510] sm:$0xff]
    %v2687 = vld [vmem:[#allocation31 + $0x518] sm:$0xff]
    %v2688 = vld [vmem:[#allocation31 + $0x520] sm:$0xff]
    %v2689 = vld [vmem:[#allocation31 + $0x528] sm:$0xff]
    %v2690 = vld [vmem:[#allocation31 + $0x530] sm:$0xff]
    %v2691 = vld [vmem:[#allocation31 + $0x538] sm:$0xff]
    %v2692 = vld [vmem:[#allocation31 + $0x540] sm:$0xff]
    %v2693 = vld [vmem:[#allocation31 + $0x548] sm:$0xff]
    %v2694 = vld [vmem:[#allocation31 + $0x550] sm:$0xff]
    %v2695 = vld [vmem:[#allocation31 + $0x558] sm:$0xff]
    %v2696 = vld [vmem:[#allocation31 + $0x560] sm:$0xff]
    %v2697 = vld [vmem:[#allocation31 + $0x568] sm:$0xff]
    %v2698 = vld [vmem:[#allocation31 + $0x570] sm:$0xff]
    %v2699 = vld [vmem:[#allocation31 + $0x578] sm:$0xff]
    %v2700 = vld [vmem:[#allocation31 + $0x580] sm:$0xff]
    %v2701 = vld [vmem:[#allocation31 + $0x588] sm:$0xff]
    %v2702 = vld [vmem:[#allocation31 + $0x590] sm:$0xff]
    %v2703 = vld [vmem:[#allocation31 + $0x598] sm:$0xff]
    %v2704 = vld [vmem:[#allocation31 + $0x5a0] sm:$0xff]
    %v2705 = vld [vmem:[#allocation31 + $0x5a8] sm:$0xff]
    %v2706 = vld [vmem:[#allocation31 + $0x5b0] sm:$0xff]
    %v2707 = vld [vmem:[#allocation31 + $0x5b8] sm:$0xff]
    %v2708 = vld [vmem:[#allocation31 + $0x5c0] sm:$0xff]
    %v2709 = vld [vmem:[#allocation31 + $0x5c8] sm:$0xff]
    %v2710 = vld [vmem:[#allocation31 + $0x5d0] sm:$0xff]
    %v2711 = vld [vmem:[#allocation31 + $0x5d8] sm:$0xff]
    %v2712 = vld [vmem:[#allocation31 + $0x5e0] sm:$0xff]
    %v2713 = vld [vmem:[#allocation31 + $0x5e8] sm:$0xff]
    %v2714 = vld [vmem:[#allocation31 + $0x5f0] sm:$0xff]
    %v2715 = vld [vmem:[#allocation31 + $0x5f8] sm:$0xff]
    %v2716 = vld [vmem:[#allocation31 + $0x600] sm:$0xff]
    %v2717 = vld [vmem:[#allocation31 + $0x608] sm:$0xff]
    %v2718 = vld [vmem:[#allocation31 + $0x610] sm:$0xff]
    %v2719 = vld [vmem:[#allocation31 + $0x618] sm:$0xff]
    %v2720 = vld [vmem:[#allocation31 + $0x620] sm:$0xff]
    %v2721 = vld [vmem:[#allocation31 + $0x628] sm:$0xff]
    %v2722 = vld [vmem:[#allocation31 + $0x630] sm:$0xff]
    %v2723 = vld [vmem:[#allocation31 + $0x638] sm:$0xff]
    %v2724 = vld [vmem:[#allocation31 + $0x640] sm:$0xff]
    %v2725 = vld [vmem:[#allocation31 + $0x648] sm:$0xff]
    %v2726 = vld [vmem:[#allocation31 + $0x650] sm:$0xff]
    %v2727 = vld [vmem:[#allocation31 + $0x658] sm:$0xff]
    %v2728 = vld [vmem:[#allocation31 + $0x660] sm:$0xff]
    %v2729 = vld [vmem:[#allocation31 + $0x668] sm:$0xff]
    %v2730 = vld [vmem:[#allocation31 + $0x670] sm:$0xff]
    %v2731 = vld [vmem:[#allocation31 + $0x678] sm:$0xff]
    %v2732 = vld [vmem:[#allocation31 + $0x680] sm:$0xff]
    %v2733 = vld [vmem:[#allocation31 + $0x688] sm:$0xff]
    %v2734 = vld [vmem:[#allocation31 + $0x690] sm:$0xff]
    %v2735 = vld [vmem:[#allocation31 + $0x698] sm:$0xff]
    %v2736 = vld [vmem:[#allocation31 + $0x6a0] sm:$0xff]
    %v2737 = vld [vmem:[#allocation31 + $0x6a8] sm:$0xff]
    %v2738 = vld [vmem:[#allocation31 + $0x6b0] sm:$0xff]
    %v2739 = vld [vmem:[#allocation31 + $0x6b8] sm:$0xff]
    %v2740 = vld [vmem:[#allocation31 + $0x6c0] sm:$0xff]
    %v2741 = vld [vmem:[#allocation31 + $0x6c8] sm:$0xff]
    %v2742 = vld [vmem:[#allocation31 + $0x6d0] sm:$0xff]
    %v2743 = vld [vmem:[#allocation31 + $0x6d8] sm:$0xff]
    %v2744 = vld [vmem:[#allocation31 + $0x6e0] sm:$0xff]
    %v2745 = vld [vmem:[#allocation31 + $0x6e8] sm:$0xff]
    %v2746 = vld [vmem:[#allocation31 + $0x6f0] sm:$0xff]
    %v2747 = vld [vmem:[#allocation31 + $0x6f8] sm:$0xff]
    %v2748 = vld [vmem:[#allocation31 + $0x700] sm:$0xff]
    %v2749 = vld [vmem:[#allocation31 + $0x708] sm:$0xff]
    %v2750 = vld [vmem:[#allocation31 + $0x710] sm:$0xff]
    %v2751 = vld [vmem:[#allocation31 + $0x718] sm:$0xff]
    %v2752 = vld [vmem:[#allocation31 + $0x720] sm:$0xff]
    %v2753 = vld [vmem:[#allocation31 + $0x728] sm:$0xff]
    %v2754 = vld [vmem:[#allocation31 + $0x730] sm:$0xff]
    %v2755 = vld [vmem:[#allocation31 + $0x738] sm:$0xff]
    %v2756 = vld [vmem:[#allocation31 + $0x740] sm:$0xff]
    %v2757 = vld [vmem:[#allocation31 + $0x748] sm:$0xff]
    %v2758 = vld [vmem:[#allocation31 + $0x750] sm:$0xff]
    %v2759 = vld [vmem:[#allocation31 + $0x758] sm:$0xff]
    %v2760 = vld [vmem:[#allocation31 + $0x760] sm:$0xff]
    %v2761 = vld [vmem:[#allocation31 + $0x768] sm:$0xff]
    %v2762 = vld [vmem:[#allocation31 + $0x770] sm:$0xff]
    %v2763 = vld [vmem:[#allocation31 + $0x778] sm:$0xff]
    %v2764 = vld [vmem:[#allocation31 + $0x780] sm:$0xff]
    %v2765 = vld [vmem:[#allocation31 + $0x788] sm:$0xff]
    %v2766 = vld [vmem:[#allocation31 + $0x790] sm:$0xff]
    %v2767 = vld [vmem:[#allocation31 + $0x798] sm:$0xff]
    %v2768 = vld [vmem:[#allocation31 + $0x7a0] sm:$0xff]
    %v2769 = vld [vmem:[#allocation31 + $0x7a8] sm:$0xff]
    %v2770 = vld [vmem:[#allocation31 + $0x7b0] sm:$0xff]
    %v2771 = vld [vmem:[#allocation31 + $0x7b8] sm:$0xff]
    %v2772 = vld [vmem:[#allocation31 + $0x7c0] sm:$0xff]
    %v2773 = vld [vmem:[#allocation31 + $0x7c8] sm:$0xff]
    %v2774 = vld [vmem:[#allocation31 + $0x7d0] sm:$0xff]
    %v2775 = vld [vmem:[#allocation31 + $0x7d8] sm:$0xff]
    %v2776 = vld [vmem:[#allocation31 + $0x7e0] sm:$0xff]
    %v2777 = vld [vmem:[#allocation31 + $0x7e8] sm:$0xff]
    %v2778 = vld [vmem:[#allocation31 + $0x7f0] sm:$0xff]
    %v2779 = vld [vmem:[#allocation31 + $0x7f8] sm:$0xff]
    %v2780 = vld [vmem:[#allocation33] sm:$0xf]
    %v2782 = vlaneseq
    %v2783 = vshrl.u32 %v2782, 7
    %v2784 = vsub.s32 0, %v2783
    %v2785 = vrot.slane %v2780, %v2784
    %v2786 = vlaneseq
    %v2787 = vshrl.u32 %v2786, 7
    %v2788 = vsub.s32 1, %v2787
    %v2789 = vrot.slane %v2780, %v2788
    %v2790 = vlaneseq
    %v2791 = vshrl.u32 %v2790, 7
    %v2792 = vsub.s32 2, %v2791
    %v2793 = vrot.slane %v2780, %v2792
    %v2794 = vlaneseq
    %v2795 = vshrl.u32 %v2794, 7
    %v2796 = vsub.s32 3, %v2795
    %v2797 = vrot.slane %v2780, %v2796
    %2802 = vmatprep.subr.mxu0 %v2525
    %2803 = vmatpush1.msra.mxu0 %v2524
    %2804 = vmatprep.subr.mxu0 %v2529
    %2805 = vmatpush1.msra.mxu0 %v2528
    %2806 = vmatprep.subr.mxu0 %v2533
    %2807 = vmatpush1.msra.mxu0 %v2532
    %2808 = vmatprep.subr.mxu0 %v2537
    %2809 = vmatpush1.msra.mxu0 %v2536
    %2810 = vmatprep.subr.mxu0 %v2541
    %2811 = vmatpush1.msra.mxu0 %v2540
    %2812 = vmatprep.subr.mxu0 %v2545
    %2813 = vmatpush1.msra.mxu0 %v2544
    %2814 = vmatprep.subr.mxu0 %v2549
    %2815 = vmatpush1.msra.mxu0 %v2548
    %2816 = vmatprep.subr.mxu0 %v2553
    %2817 = vmatpush1.msra.mxu0 %v2552
    %2818 = vmatprep.subr.mxu0 %v2557
    %2819 = vmatpush1.msra.mxu0 %v2556
    %2820 = vmatprep.subr.mxu0 %v2561
    %2821 = vmatpush1.msra.mxu0 %v2560
    %2822 = vmatprep.subr.mxu0 %v2565
    %2823 = vmatpush1.msra.mxu0 %v2564
    %2824 = vmatprep.subr.mxu0 %v2569
    %2825 = vmatpush1.msra.mxu0 %v2568
    %2826 = vmatprep.subr.mxu0 %v2573
    %2827 = vmatpush1.msra.mxu0 %v2572
    %2828 = vmatprep.subr.mxu0 %v2577
    %2829 = vmatpush1.msra.mxu0 %v2576
    %2830 = vmatprep.subr.mxu0 %v2581
    %2831 = vmatpush1.msra.mxu0 %v2580
    %2832 = vmatprep.subr.mxu0 %v2585
    %2833 = vmatpush1.msra.mxu0 %v2584
    %2834 = vmatprep.subr.mxu0 %v2589
    %2835 = vmatpush1.msra.mxu0 %v2588
    %2836 = vmatprep.subr.mxu0 %v2593
    %2837 = vmatpush1.msra.mxu0 %v2592
    %2838 = vmatprep.subr.mxu0 %v2597
    %2839 = vmatpush1.msra.mxu0 %v2596
    %2840 = vmatprep.subr.mxu0 %v2601
    %2841 = vmatpush1.msra.mxu0 %v2600
    %2842 = vmatprep.subr.mxu0 %v2605
    %2843 = vmatpush1.msra.mxu0 %v2604
    %2844 = vmatprep.subr.mxu0 %v2609
    %2845 = vmatpush1.msra.mxu0 %v2608
    %2846 = vmatprep.subr.mxu0 %v2613
    %2847 = vmatpush1.msra.mxu0 %v2612
    %2848 = vmatprep.subr.mxu0 %v2617
    %2849 = vmatpush1.msra.mxu0 %v2616
    %2850 = vmatprep.subr.mxu0 %v2621
    %2851 = vmatpush1.msra.mxu0 %v2620
    %2852 = vmatprep.subr.mxu0 %v2625
    %2853 = vmatpush1.msra.mxu0 %v2624
    %2854 = vmatprep.subr.mxu0 %v2629
    %2855 = vmatpush1.msra.mxu0 %v2628
    %2856 = vmatprep.subr.mxu0 %v2633
    %2857 = vmatpush1.msra.mxu0 %v2632
    %2858 = vmatprep.subr.mxu0 %v2637
    %2859 = vmatpush1.msra.mxu0 %v2636
    %2860 = vmatprep.subr.mxu0 %v2641
    %2861 = vmatpush1.msra.mxu0 %v2640
    %2862 = vmatprep.subr.mxu0 %v2645
    %2863 = vmatpush1.msra.mxu0 %v2644
    %2864 = vmatprep.subr.mxu0 %v2649
    %2865 = vmatpush1.msra.mxu0 %v2648
    %2866 = vmatprep.mubr.f32.mxu0 %v2521
    %2867 = vmatmul.mubr.f32.gmra.mrb[0].mxu0 %v2520
    %v2868 = vpop.f32.mrb[0].mxu0
    %v2869 = vadd.f32 %v2785, %v2868
    %v2870 = vpop.f32.mrb[0].mxu0
    %v2871 = vadd.f32 %v2789, %v2870
    %2872 = vdwg.mxu0
    %2873 = vmatprep.subr.mxu0 %v2653
    %2874 = vmatpush1.msra.mxu0 %v2652
    %2875 = vmatprep.subr.mxu0 %v2657
    %2876 = vmatpush1.msra.mxu0 %v2656
    %2877 = vmatprep.subr.mxu0 %v2661
    %2878 = vmatpush1.msra.mxu0 %v2660
    %2879 = vmatprep.subr.mxu0 %v2665
    %2880 = vmatpush1.msra.mxu0 %v2664
    %2881 = vmatprep.subr.mxu0 %v2669
    %2882 = vmatpush1.msra.mxu0 %v2668
    %2883 = vmatprep.subr.mxu0 %v2673
    %2884 = vmatpush1.msra.mxu0 %v2672
    %2885 = vmatprep.subr.mxu0 %v2677
    %2886 = vmatpush1.msra.mxu0 %v2676
    %2887 = vmatprep.subr.mxu0 %v2681
    %2888 = vmatpush1.msra.mxu0 %v2680
    %2889 = vmatprep.subr.mxu0 %v2685
    %2890 = vmatpush1.msra.mxu0 %v2684
    %2891 = vmatprep.subr.mxu0 %v2689
    %2892 = vmatpush1.msra.mxu0 %v2688
    %2893 = vmatprep.subr.mxu0 %v2693
    %2894 = vmatpush1.msra.mxu0 %v2692
    %2895 = vmatprep.subr.mxu0 %v2697
    %2896 = vmatpush1.msra.mxu0 %v2696
    %2897 = vmatprep.subr.mxu0 %v2701
    %2898 = vmatpush1.msra.mxu0 %v2700
    %2899 = vmatprep.subr.mxu0 %v2705
    %2900 = vmatpush1.msra.mxu0 %v2704
    %2901 = vmatprep.subr.mxu0 %v2709
    %2902 = vmatpush1.msra.mxu0 %v2708
    %2903 = vmatprep.subr.mxu0 %v2713
    %2904 = vmatpush1.msra.mxu0 %v2712
    %2905 = vmatprep.subr.mxu0 %v2717
    %2906 = vmatpush1.msra.mxu0 %v2716
    %2907 = vmatprep.subr.mxu0 %v2721
    %2908 = vmatpush1.msra.mxu0 %v2720
    %2909 = vmatprep.subr.mxu0 %v2725
    %2910 = vmatpush1.msra.mxu0 %v2724
    %2911 = vmatprep.subr.mxu0 %v2729
    %2912 = vmatpush1.msra.mxu0 %v2728
    %2913 = vmatprep.subr.mxu0 %v2733
    %2914 = vmatpush1.msra.mxu0 %v2732
    %2915 = vmatprep.subr.mxu0 %v2737
    %2916 = vmatpush1.msra.mxu0 %v2736
    %2917 = vmatprep.subr.mxu0 %v2741
    %2918 = vmatpush1.msra.mxu0 %v2740
    %2919 = vmatprep.subr.mxu0 %v2745
    %2920 = vmatpush1.msra.mxu0 %v2744
    %2921 = vmatprep.subr.mxu0 %v2749
    %2922 = vmatpush1.msra.mxu0 %v2748
    %2923 = vmatprep.subr.mxu0 %v2753
    %2924 = vmatpush1.msra.mxu0 %v2752
    %2925 = vmatprep.subr.mxu0 %v2757
    %2926 = vmatpush1.msra.mxu0 %v2756
    %2927 = vmatprep.subr.mxu0 %v2761
    %2928 = vmatpush1.msra.mxu0 %v2760
    %2929 = vmatprep.subr.mxu0 %v2765
    %2930 = vmatpush1.msra.mxu0 %v2764
    %2931 = vmatprep.subr.mxu0 %v2769
    %2932 = vmatpush1.msra.mxu0 %v2768
    %2933 = vmatprep.subr.mxu0 %v2773
    %2934 = vmatpush1.msra.mxu0 %v2772
    %2935 = vmatprep.subr.mxu0 %v2777
    %2936 = vmatpush1.msra.mxu0 %v2776
    %2937 = vmatprep.mubr.f32.mxu0 %v2523
    %2938 = vmatmul.mubr.f32.gmra.mrb[0].mxu0 %v2522
    %v2939 = vpop.f32.mrb[0].mxu0
    %v2940 = vadd.f32 %v2869, %v2939
    %v2941 = vpop.f32.mrb[0].mxu0
    %v2942 = vadd.f32 %v2871, %v2941
    %2943 = vdwg.mxu0
    %2944 = vmatprep.subr.mxu0 %v2527
    %2945 = vmatpush1.msra.mxu0 %v2526
    %2946 = vmatprep.subr.mxu0 %v2531
    %2947 = vmatpush1.msra.mxu0 %v2530
    %2948 = vmatprep.subr.mxu0 %v2535
    %2949 = vmatpush1.msra.mxu0 %v2534
    %2950 = vmatprep.subr.mxu0 %v2539
    %2951 = vmatpush1.msra.mxu0 %v2538
    %2952 = vmatprep.subr.mxu0 %v2543
    %2953 = vmatpush1.msra.mxu0 %v2542
    %2954 = vmatprep.subr.mxu0 %v2547
    %2955 = vmatpush1.msra.mxu0 %v2546
    %2956 = vmatprep.subr.mxu0 %v2551
    %2957 = vmatpush1.msra.mxu0 %v2550
    %2958 = vmatprep.subr.mxu0 %v2555
    %2959 = vmatpush1.msra.mxu0 %v2554
    %2960 = vmatprep.subr.mxu0 %v2559
    %2961 = vmatpush1.msra.mxu0 %v2558
    %2962 = vmatprep.subr.mxu0 %v2563
    %2963 = vmatpush1.msra.mxu0 %v2562
    %2964 = vmatprep.subr.mxu0 %v2567
    %2965 = vmatpush1.msra.mxu0 %v2566
    %2966 = vmatprep.subr.mxu0 %v2571
    %2967 = vmatpush1.msra.mxu0 %v2570
    %2968 = vmatprep.subr.mxu0 %v2575
    %2969 = vmatpush1.msra.mxu0 %v2574
    %2970 = vmatprep.subr.mxu0 %v2579
    %2971 = vmatpush1.msra.mxu0 %v2578
    %2972 = vmatprep.subr.mxu0 %v2583
    %2973 = vmatpush1.msra.mxu0 %v2582
    %2974 = vmatprep.subr.mxu0 %v2587
    %2975 = vmatpush1.msra.mxu0 %v2586
    %2976 = vmatprep.subr.mxu0 %v2591
    %2977 = vmatpush1.msra.mxu0 %v2590
    %2978 = vmatprep.subr.mxu0 %v2595
    %2979 = vmatpush1.msra.mxu0 %v2594
    %2980 = vmatprep.subr.mxu0 %v2599
    %2981 = vmatpush1.msra.mxu0 %v2598
    %2982 = vmatprep.subr.mxu0 %v2603
    %2983 = vmatpush1.msra.mxu0 %v2602
    %2984 = vmatprep.subr.mxu0 %v2607
    %2985 = vmatpush1.msra.mxu0 %v2606
    %2986 = vmatprep.subr.mxu0 %v2611
    %2987 = vmatpush1.msra.mxu0 %v2610
    %2988 = vmatprep.subr.mxu0 %v2615
    %2989 = vmatpush1.msra.mxu0 %v2614
    %2990 = vmatprep.subr.mxu0 %v2619
    %2991 = vmatpush1.msra.mxu0 %v2618
    %2992 = vmatprep.subr.mxu0 %v2623
    %2993 = vmatpush1.msra.mxu0 %v2622
    %2994 = vmatprep.subr.mxu0 %v2627
    %2995 = vmatpush1.msra.mxu0 %v2626
    %2996 = vmatprep.subr.mxu0 %v2631
    %2997 = vmatpush1.msra.mxu0 %v2630
    %2998 = vmatprep.subr.mxu0 %v2635
    %2999 = vmatpush1.msra.mxu0 %v2634
    %3000 = vmatprep.subr.mxu0 %v2639
    %3001 = vmatpush1.msra.mxu0 %v2638
    %3002 = vmatprep.subr.mxu0 %v2643
    %3003 = vmatpush1.msra.mxu0 %v2642
    %3004 = vmatprep.subr.mxu0 %v2647
    %3005 = vmatpush1.msra.mxu0 %v2646
    %3006 = vmatprep.subr.mxu0 %v2651
    %3007 = vmatpush1.msra.mxu0 %v2650
    %3008 = vmatprep.mubr.f32.mxu0 %v2521
    %3009 = vmatmul.mubr.f32.gmra.mrb[0].mxu0 %v2520
    %v3010 = vpop.f32.mrb[0].mxu0
    %v3011 = vadd.f32 %v2793, %v3010
    %v3012 = vpop.f32.mrb[0].mxu0
    %v3013 = vadd.f32 %v2797, %v3012
    %3014 = vdwg.mxu0
    %3015 = vmatprep.subr.mxu0 %v2655
    %3016 = vmatpush1.msra.mxu0 %v2654
    %3017 = vmatprep.subr.mxu0 %v2659
    %3018 = vmatpush1.msra.mxu0 %v2658
    %3019 = vmatprep.subr.mxu0 %v2663
    %3020 = vmatpush1.msra.mxu0 %v2662
    %3021 = vmatprep.subr.mxu0 %v2667
    %3022 = vmatpush1.msra.mxu0 %v2666
    %3023 = vmatprep.subr.mxu0 %v2671
    %3024 = vmatpush1.msra.mxu0 %v2670
    %3025 = vmatprep.subr.mxu0 %v2675
    %3026 = vmatpush1.msra.mxu0 %v2674
    %3027 = vmatprep.subr.mxu0 %v2679
    %3028 = vmatpush1.msra.mxu0 %v2678
    %3029 = vmatprep.subr.mxu0 %v2683
    %3030 = vmatpush1.msra.mxu0 %v2682
    %3031 = vmatprep.subr.mxu0 %v2687
    %3032 = vmatpush1.msra.mxu0 %v2686
    %3033 = vmatprep.subr.mxu0 %v2691
    %3034 = vmatpush1.msra.mxu0 %v2690
    %3035 = vmatprep.subr.mxu0 %v2695
    %3036 = vmatpush1.msra.mxu0 %v2694
    %3037 = vmatprep.subr.mxu0 %v2699
    %3038 = vmatpush1.msra.mxu0 %v2698
    %3039 = vmatprep.subr.mxu0 %v2703
    %3040 = vmatpush1.msra.mxu0 %v2702
    %3041 = vmatprep.subr.mxu0 %v2707
    %3042 = vmatpush1.msra.mxu0 %v2706
    %3043 = vmatprep.subr.mxu0 %v2711
    %3044 = vmatpush1.msra.mxu0 %v2710
    %3045 = vmatprep.subr.mxu0 %v2715
    %3046 = vmatpush1.msra.mxu0 %v2714
    %3047 = vmatprep.subr.mxu0 %v2719
    %3048 = vmatpush1.msra.mxu0 %v2718
    %3049 = vmatprep.subr.mxu0 %v2723
    %3050 = vmatpush1.msra.mxu0 %v2722
    %3051 = vmatprep.subr.mxu0 %v2727
    %3052 = vmatpush1.msra.mxu0 %v2726
    %3053 = vmatprep.subr.mxu0 %v2731
    %3054 = vmatpush1.msra.mxu0 %v2730
    %3055 = vmatprep.subr.mxu0 %v2735
    %3056 = vmatpush1.msra.mxu0 %v2734
    %3057 = vmatprep.subr.mxu0 %v2739
    %3058 = vmatpush1.msra.mxu0 %v2738
    %3059 = vmatprep.subr.mxu0 %v2743
    %3060 = vmatpush1.msra.mxu0 %v2742
    %3061 = vmatprep.subr.mxu0 %v2747
    %3062 = vmatpush1.msra.mxu0 %v2746
    %3063 = vmatprep.subr.mxu0 %v2751
    %3064 = vmatpush1.msra.mxu0 %v2750
    %3065 = vmatprep.subr.mxu0 %v2755
    %3066 = vmatpush1.msra.mxu0 %v2754
    %3067 = vmatprep.subr.mxu0 %v2759
    %3068 = vmatpush1.msra.mxu0 %v2758
    %3069 = vmatprep.subr.mxu0 %v2763
    %3070 = vmatpush1.msra.mxu0 %v2762
    %3071 = vmatprep.subr.mxu0 %v2767
    %3072 = vmatpush1.msra.mxu0 %v2766
    %3073 = vmatprep.subr.mxu0 %v2771
    %3074 = vmatpush1.msra.mxu0 %v2770
    %3075 = vmatprep.subr.mxu0 %v2775
    %3076 = vmatpush1.msra.mxu0 %v2774
    %3077 = vmatprep.subr.mxu0 %v2779
    %3078 = vmatpush1.msra.mxu0 %v2778
    %3079 = vmatprep.mubr.f32.mxu0 %v2523
    %3080 = vmatmul.mubr.f32.gmra.mrb[0].mxu0 %v2522
    %v3081 = vpop.f32.mrb[0].mxu0
    %v3082 = vadd.f32 %v3011, %v3081
    %v3083 = vpop.f32.mrb[0].mxu0
    %v3084 = vadd.f32 %v3013, %v3083
    %3085 = vdwg.mxu0
    %v3086 = vadd.f32 %v2940, %v2942
    %3087 = vadd.xlane.f32.xlu0 %v3086
    %v3088 = vpop.xlane.xlu0 %3087
    %v3089 = vmul.f32 %v3088, %v1046
    %v3090 = vsub.f32 %v2940, %v3089
    %v3091 = vsub.f32 %v2942, %v3089
    %v3092 = vmul.f32 %v3090, %v3090
    %v3093 = vmul.f32 %v3091, %v3091
    %v3094 = vadd.f32 %v3092, %v3093
    %3095 = vadd.xlane.f32.xlu0 %v3094
    %v3096 = vpop.xlane.xlu0 %3095
    %v3097 = vmul.f32 %v3096, %v1046
    %v3098 = vadd.f32 %v3097, 1e-05
    %v3099 = vrsqrt.pop %v3098
    %v3100 = vmul.f32 %v3090, %v3099
    %v3101 = vmul.f32 %v3091, %v3099
    %v3102 = vld [vmem:[#allocation34] sm:$0x3]
    %v3104 = vlaneseq
    %v3105 = vshrl.u32 %v3104, 7
    %v3106 = vsub.s32 0, %v3105
    %v3107 = vrot.slane %v3102, %v3106
    %v3108 = vlaneseq
    %v3109 = vshrl.u32 %v3108, 7
    %v3110 = vsub.s32 1, %v3109
    %v3111 = vrot.slane %v3102, %v3110
    %v3114 = vmul.f32 %v3100, %v3107
    %v3115 = vmul.f32 %v3101, %v3111
    %v3116 = vld [vmem:[#allocation36] sm:$0x3]
    %v3118 = vlaneseq
    %v3119 = vshrl.u32 %v3118, 7
    %v3120 = vsub.s32 0, %v3119
    %v3121 = vrot.slane %v3116, %v3120
    %v3122 = vlaneseq
    %v3123 = vshrl.u32 %v3122, 7
    %v3124 = vsub.s32 1, %v3123
    %v3125 = vrot.slane %v3116, %v3124
    %v3128 = vadd.f32 %v3114, %v3121
    %v3129 = vadd.f32 %v3115, %v3125
    %v3130 = vmul.f32 %v3128, 0.5
    %v3131 = vmul.f32 %v3129, 0.5
    %v3132 = vmul.f32 %v3128, 0.70710677
    %v3133 = vmul.f32 %v3129, 0.70710677
    %v3134 = verf.f32.pop %v3132
    %v3135 = verf.f32.pop %v3133
    %v3136 = vadd.f32 %v3134, 1.0
    %v3137 = vadd.f32 %v3135, 1.0
    %v3138 = vmul.f32 %v3130, %v3136
    %v3139 = vmul.f32 %v3131, %v3137
    %v3140 = vld [vmem:[#allocation37] sm:$0xff]
    %v3141 = vld [vmem:[#allocation37 + $0x8] sm:$0xff]
    %v3142 = vld [vmem:[#allocation37 + $0x10] sm:$0xff]
    %v3143 = vld [vmem:[#allocation37 + $0x18] sm:$0xff]
    %v3144 = vld [vmem:[#allocation37 + $0x20] sm:$0xff]
    %v3145 = vld [vmem:[#allocation37 + $0x28] sm:$0xff]
    %v3146 = vld [vmem:[#allocation37 + $0x30] sm:$0xff]
    %v3147 = vld [vmem:[#allocation37 + $0x38] sm:$0xff]
    %v3148 = vld [vmem:[#allocation37 + $0x40] sm:$0xff]
    %v3149 = vld [vmem:[#allocation37 + $0x48] sm:$0xff]
    %v3150 = vld [vmem:[#allocation37 + $0x50] sm:$0xff]
    %v3151 = vld [vmem:[#allocation37 + $0x58] sm:$0xff]
    %v3152 = vld [vmem:[#allocation37 + $0x60] sm:$0xff]
    %v3153 = vld [vmem:[#allocation37 + $0x68] sm:$0xff]
    %v3154 = vld [vmem:[#allocation37 + $0x70] sm:$0xff]
    %v3155 = vld [vmem:[#allocation37 + $0x78] sm:$0xff]
    %v3156 = vld [vmem:[#allocation37 + $0x80] sm:$0xff]
    %v3157 = vld [vmem:[#allocation37 + $0x88] sm:$0xff]
    %v3158 = vld [vmem:[#allocation37 + $0x90] sm:$0xff]
    %v3159 = vld [vmem:[#allocation37 + $0x98] sm:$0xff]
    %v3160 = vld [vmem:[#allocation37 + $0xa0] sm:$0xff]
    %v3161 = vld [vmem:[#allocation37 + $0xa8] sm:$0xff]
    %v3162 = vld [vmem:[#allocation37 + $0xb0] sm:$0xff]
    %v3163 = vld [vmem:[#allocation37 + $0xb8] sm:$0xff]
    %v3164 = vld [vmem:[#allocation37 + $0xc0] sm:$0xff]
    %v3165 = vld [vmem:[#allocation37 + $0xc8] sm:$0xff]
    %v3166 = vld [vmem:[#allocation37 + $0xd0] sm:$0xff]
    %v3167 = vld [vmem:[#allocation37 + $0xd8] sm:$0xff]
    %v3168 = vld [vmem:[#allocation37 + $0xe0] sm:$0xff]
    %v3169 = vld [vmem:[#allocation37 + $0xe8] sm:$0xff]
    %v3170 = vld [vmem:[#allocation37 + $0xf0] sm:$0xff]
    %v3171 = vld [vmem:[#allocation37 + $0xf8] sm:$0xff]
    %v3172 = vld [vmem:[#allocation37 + $0x100] sm:$0xff]
    %v3173 = vld [vmem:[#allocation37 + $0x108] sm:$0xff]
    %v3174 = vld [vmem:[#allocation37 + $0x110] sm:$0xff]
    %v3175 = vld [vmem:[#allocation37 + $0x118] sm:$0xff]
    %v3176 = vld [vmem:[#allocation37 + $0x120] sm:$0xff]
    %v3177 = vld [vmem:[#allocation37 + $0x128] sm:$0xff]
    %v3178 = vld [vmem:[#allocation37 + $0x130] sm:$0xff]
    %v3179 = vld [vmem:[#allocation37 + $0x138] sm:$0xff]
    %v3180 = vld [vmem:[#allocation37 + $0x140] sm:$0xff]
    %v3181 = vld [vmem:[#allocation37 + $0x148] sm:$0xff]
    %v3182 = vld [vmem:[#allocation37 + $0x150] sm:$0xff]
    %v3183 = vld [vmem:[#allocation37 + $0x158] sm:$0xff]
    %v3184 = vld [vmem:[#allocation37 + $0x160] sm:$0xff]
    %v3185 = vld [vmem:[#allocation37 + $0x168] sm:$0xff]
    %v3186 = vld [vmem:[#allocation37 + $0x170] sm:$0xff]
    %v3187 = vld [vmem:[#allocation37 + $0x178] sm:$0xff]
    %v3188 = vld [vmem:[#allocation37 + $0x180] sm:$0xff]
    %v3189 = vld [vmem:[#allocation37 + $0x188] sm:$0xff]
    %v3190 = vld [vmem:[#allocation37 + $0x190] sm:$0xff]
    %v3191 = vld [vmem:[#allocation37 + $0x198] sm:$0xff]
    %v3192 = vld [vmem:[#allocation37 + $0x1a0] sm:$0xff]
    %v3193 = vld [vmem:[#allocation37 + $0x1a8] sm:$0xff]
    %v3194 = vld [vmem:[#allocation37 + $0x1b0] sm:$0xff]
    %v3195 = vld [vmem:[#allocation37 + $0x1b8] sm:$0xff]
    %v3196 = vld [vmem:[#allocation37 + $0x1c0] sm:$0xff]
    %v3197 = vld [vmem:[#allocation37 + $0x1c8] sm:$0xff]
    %v3198 = vld [vmem:[#allocation37 + $0x1d0] sm:$0xff]
    %v3199 = vld [vmem:[#allocation37 + $0x1d8] sm:$0xff]
    %v3200 = vld [vmem:[#allocation37 + $0x1e0] sm:$0xff]
    %v3201 = vld [vmem:[#allocation37 + $0x1e8] sm:$0xff]
    %v3202 = vld [vmem:[#allocation37 + $0x1f0] sm:$0xff]
    %v3203 = vld [vmem:[#allocation37 + $0x1f8] sm:$0xff]
    %v3204 = vld [vmem:[#allocation39] sm:$0x3]
    %v3206 = vlaneseq
    %v3207 = vshrl.u32 %v3206, 7
    %v3208 = vsub.s32 0, %v3207
    %v3209 = vrot.slane %v3204, %v3208
    %v3210 = vlaneseq
    %v3211 = vshrl.u32 %v3210, 7
    %v3212 = vsub.s32 1, %v3211
    %v3213 = vrot.slane %v3204, %v3212
    %3216 = vmatprep.subr.mxu0 %v3141
    %3217 = vmatpush1.msra.mxu0 %v3140
    %3218 = vmatprep.subr.mxu0 %v3143
    %3219 = vmatpush1.msra.mxu0 %v3142
    %3220 = vmatprep.subr.mxu0 %v3145
    %3221 = vmatpush1.msra.mxu0 %v3144
    %3222 = vmatprep.subr.mxu0 %v3147
    %3223 = vmatpush1.msra.mxu0 %v3146
    %3224 = vmatprep.subr.mxu0 %v3149
    %3225 = vmatpush1.msra.mxu0 %v3148
    %3226 = vmatprep.subr.mxu0 %v3151
    %3227 = vmatpush1.msra.mxu0 %v3150
    %3228 = vmatprep.subr.mxu0 %v3153
    %3229 = vmatpush1.msra.mxu0 %v3152
    %3230 = vmatprep.subr.mxu0 %v3155
    %3231 = vmatpush1.msra.mxu0 %v3154
    %3232 = vmatprep.subr.mxu0 %v3157
    %3233 = vmatpush1.msra.mxu0 %v3156
    %3234 = vmatprep.subr.mxu0 %v3159
    %3235 = vmatpush1.msra.mxu0 %v3158
    %3236 = vmatprep.subr.mxu0 %v3161
    %3237 = vmatpush1.msra.mxu0 %v3160
    %3238 = vmatprep.subr.mxu0 %v3163
    %3239 = vmatpush1.msra.mxu0 %v3162
    %3240 = vmatprep.subr.mxu0 %v3165
    %3241 = vmatpush1.msra.mxu0 %v3164
    %3242 = vmatprep.subr.mxu0 %v3167
    %3243 = vmatpush1.msra.mxu0 %v3166
    %3244 = vmatprep.subr.mxu0 %v3169
    %3245 = vmatpush1.msra.mxu0 %v3168
    %3246 = vmatprep.subr.mxu0 %v3171
    %3247 = vmatpush1.msra.mxu0 %v3170
    %3248 = vmatprep.subr.mxu0 %v3173
    %3249 = vmatpush1.msra.mxu0 %v3172
    %3250 = vmatprep.subr.mxu0 %v3175
    %3251 = vmatpush1.msra.mxu0 %v3174
    %3252 = vmatprep.subr.mxu0 %v3177
    %3253 = vmatpush1.msra.mxu0 %v3176
    %3254 = vmatprep.subr.mxu0 %v3179
    %3255 = vmatpush1.msra.mxu0 %v3178
    %3256 = vmatprep.subr.mxu0 %v3181
    %3257 = vmatpush1.msra.mxu0 %v3180
    %3258 = vmatprep.subr.mxu0 %v3183
    %3259 = vmatpush1.msra.mxu0 %v3182
    %3260 = vmatprep.subr.mxu0 %v3185
    %3261 = vmatpush1.msra.mxu0 %v3184
    %3262 = vmatprep.subr.mxu0 %v3187
    %3263 = vmatpush1.msra.mxu0 %v3186
    %3264 = vmatprep.subr.mxu0 %v3189
    %3265 = vmatpush1.msra.mxu0 %v3188
    %3266 = vmatprep.subr.mxu0 %v3191
    %3267 = vmatpush1.msra.mxu0 %v3190
    %3268 = vmatprep.subr.mxu0 %v3193
    %3269 = vmatpush1.msra.mxu0 %v3192
    %3270 = vmatprep.subr.mxu0 %v3195
    %3271 = vmatpush1.msra.mxu0 %v3194
    %3272 = vmatprep.subr.mxu0 %v3197
    %3273 = vmatpush1.msra.mxu0 %v3196
    %3274 = vmatprep.subr.mxu0 %v3199
    %3275 = vmatpush1.msra.mxu0 %v3198
    %3276 = vmatprep.subr.mxu0 %v3201
    %3277 = vmatpush1.msra.mxu0 %v3200
    %3278 = vmatprep.subr.mxu0 %v3203
    %3279 = vmatpush1.msra.mxu0 %v3202
    %3280 = vmatprep.mubr.f32.mxu0 %v3139
    %3281 = vmatmul.mubr.f32.gmra.mrb[0].mxu0 %v3138
    %v3282 = vpop.f32.mrb[0].mxu0
    %v3283 = vadd.f32 %v3209, %v3282
    %v3284 = vpop.f32.mrb[0].mxu0
    %v3285 = vadd.f32 %v3213, %v3284
    %3286 = vdwg.mxu0
    %v3287 = vadd.f32 %v3283, %v3082
    %v3288 = vadd.f32 %v3285, %v3084
    %v3289 = vmul.f32 %v3287, 0.5
    %v3290 = vmul.f32 %v3288, 0.5
    %v3291 = vmul.f32 %v3287, 0.70710677
    %v3292 = vmul.f32 %v3288, 0.70710677
    %v3293 = verf.f32.pop %v3291
    %v3294 = verf.f32.pop %v3292
    %v3295 = vadd.f32 %v3293, 1.0
    %v3296 = vadd.f32 %v3294, 1.0
    %v3297 = vmul.f32 %v3289, %v3295
    %v3298 = vmul.f32 %v3290, %v3296
    %v3299 = vld [vmem:[#allocation40] sm:$0xff]
    %v3300 = vld [vmem:[#allocation40 + $0x8] sm:$0xff]
    %v3301 = vld [vmem:[#allocation40 + $0x10] sm:$0xff]
    %v3302 = vld [vmem:[#allocation40 + $0x18] sm:$0xff]
    %v3303 = vld [vmem:[#allocation40 + $0x20] sm:$0xff]
    %v3304 = vld [vmem:[#allocation40 + $0x28] sm:$0xff]
    %v3305 = vld [vmem:[#allocation40 + $0x30] sm:$0xff]
    %v3306 = vld [vmem:[#allocation40 + $0x38] sm:$0xff]
    %v3307 = vld [vmem:[#allocation40 + $0x40] sm:$0xff]
    %v3308 = vld [vmem:[#allocation40 + $0x48] sm:$0xff]
    %v3309 = vld [vmem:[#allocation40 + $0x50] sm:$0xff]
    %v3310 = vld [vmem:[#allocation40 + $0x58] sm:$0xff]
    %v3311 = vld [vmem:[#allocation40 + $0x60] sm:$0xff]
    %v3312 = vld [vmem:[#allocation40 + $0x68] sm:$0xff]
    %v3313 = vld [vmem:[#allocation40 + $0x70] sm:$0xff]
    %v3314 = vld [vmem:[#allocation40 + $0x78] sm:$0xff]
    %v3315 = vld [vmem:[#allocation40 + $0x80] sm:$0xff]
    %v3316 = vld [vmem:[#allocation40 + $0x88] sm:$0xff]
    %v3317 = vld [vmem:[#allocation40 + $0x90] sm:$0xff]
    %v3318 = vld [vmem:[#allocation40 + $0x98] sm:$0xff]
    %v3319 = vld [vmem:[#allocation40 + $0xa0] sm:$0xff]
    %v3320 = vld [vmem:[#allocation40 + $0xa8] sm:$0xff]
    %v3321 = vld [vmem:[#allocation40 + $0xb0] sm:$0xff]
    %v3322 = vld [vmem:[#allocation40 + $0xb8] sm:$0xff]
    %v3323 = vld [vmem:[#allocation40 + $0xc0] sm:$0xff]
    %v3324 = vld [vmem:[#allocation40 + $0xc8] sm:$0xff]
    %v3325 = vld [vmem:[#allocation40 + $0xd0] sm:$0xff]
    %v3326 = vld [vmem:[#allocation40 + $0xd8] sm:$0xff]
    %v3327 = vld [vmem:[#allocation40 + $0xe0] sm:$0xff]
    %v3328 = vld [vmem:[#allocation40 + $0xe8] sm:$0xff]
    %v3329 = vld [vmem:[#allocation40 + $0xf0] sm:$0xff]
    %v3330 = vld [vmem:[#allocation40 + $0xf8] sm:$0xff]
    %v3331 = vld [vmem:[#allocation40 + $0x100] sm:$0xff]
    %v3332 = vld [vmem:[#allocation40 + $0x108] sm:$0xff]
    %v3333 = vld [vmem:[#allocation40 + $0x110] sm:$0xff]
    %v3334 = vld [vmem:[#allocation40 + $0x118] sm:$0xff]
    %v3335 = vld [vmem:[#allocation40 + $0x120] sm:$0xff]
    %v3336 = vld [vmem:[#allocation40 + $0x128] sm:$0xff]
    %v3337 = vld [vmem:[#allocation40 + $0x130] sm:$0xff]
    %v3338 = vld [vmem:[#allocation40 + $0x138] sm:$0xff]
    %v3339 = vld [vmem:[#allocation40 + $0x140] sm:$0xff]
    %v3340 = vld [vmem:[#allocation40 + $0x148] sm:$0xff]
    %v3341 = vld [vmem:[#allocation40 + $0x150] sm:$0xff]
    %v3342 = vld [vmem:[#allocation40 + $0x158] sm:$0xff]
    %v3343 = vld [vmem:[#allocation40 + $0x160] sm:$0xff]
    %v3344 = vld [vmem:[#allocation40 + $0x168] sm:$0xff]
    %v3345 = vld [vmem:[#allocation40 + $0x170] sm:$0xff]
    %v3346 = vld [vmem:[#allocation40 + $0x178] sm:$0xff]
    %v3347 = vld [vmem:[#allocation40 + $0x180] sm:$0xff]
    %v3348 = vld [vmem:[#allocation40 + $0x188] sm:$0xff]
    %v3349 = vld [vmem:[#allocation40 + $0x190] sm:$0xff]
    %v3350 = vld [vmem:[#allocation40 + $0x198] sm:$0xff]
    %v3351 = vld [vmem:[#allocation40 + $0x1a0] sm:$0xff]
    %v3352 = vld [vmem:[#allocation40 + $0x1a8] sm:$0xff]
    %v3353 = vld [vmem:[#allocation40 + $0x1b0] sm:$0xff]
    %v3354 = vld [vmem:[#allocation40 + $0x1b8] sm:$0xff]
    %v3355 = vld [vmem:[#allocation40 + $0x1c0] sm:$0xff]
    %v3356 = vld [vmem:[#allocation40 + $0x1c8] sm:$0xff]
    %v3357 = vld [vmem:[#allocation40 + $0x1d0] sm:$0xff]
    %v3358 = vld [vmem:[#allocation40 + $0x1d8] sm:$0xff]
    %v3359 = vld [vmem:[#allocation40 + $0x1e0] sm:$0xff]
    %v3360 = vld [vmem:[#allocation40 + $0x1e8] sm:$0xff]
    %v3361 = vld [vmem:[#allocation40 + $0x1f0] sm:$0xff]
    %v3362 = vld [vmem:[#allocation40 + $0x1f8] sm:$0xff]
    %v3363 = vld [vmem:[#allocation42] sm:$0x3]
    %v3365 = vlaneseq
    %v3366 = vshrl.u32 %v3365, 7
    %v3367 = vsub.s32 0, %v3366
    %v3368 = vrot.slane %v3363, %v3367
    %v3369 = vlaneseq
    %v3370 = vshrl.u32 %v3369, 7
    %v3371 = vsub.s32 1, %v3370
    %v3372 = vrot.slane %v3363, %v3371
    %3375 = vmatprep.subr.mxu0 %v3300
    %3376 = vmatpush1.msra.mxu0 %v3299
    %3377 = vmatprep.subr.mxu0 %v3302
    %3378 = vmatpush1.msra.mxu0 %v3301
    %3379 = vmatprep.subr.mxu0 %v3304
    %3380 = vmatpush1.msra.mxu0 %v3303
    %3381 = vmatprep.subr.mxu0 %v3306
    %3382 = vmatpush1.msra.mxu0 %v3305
    %3383 = vmatprep.subr.mxu0 %v3308
    %3384 = vmatpush1.msra.mxu0 %v3307
    %3385 = vmatprep.subr.mxu0 %v3310
    %3386 = vmatpush1.msra.mxu0 %v3309
    %3387 = vmatprep.subr.mxu0 %v3312
    %3388 = vmatpush1.msra.mxu0 %v3311
    %3389 = vmatprep.subr.mxu0 %v3314
    %3390 = vmatpush1.msra.mxu0 %v3313
    %3391 = vmatprep.subr.mxu0 %v3316
    %3392 = vmatpush1.msra.mxu0 %v3315
    %3393 = vmatprep.subr.mxu0 %v3318
    %3394 = vmatpush1.msra.mxu0 %v3317
    %3395 = vmatprep.subr.mxu0 %v3320
    %3396 = vmatpush1.msra.mxu0 %v3319
    %3397 = vmatprep.subr.mxu0 %v3322
    %3398 = vmatpush1.msra.mxu0 %v3321
    %3399 = vmatprep.subr.mxu0 %v3324
    %3400 = vmatpush1.msra.mxu0 %v3323
    %3401 = vmatprep.subr.mxu0 %v3326
    %3402 = vmatpush1.msra.mxu0 %v3325
    %3403 = vmatprep.subr.mxu0 %v3328
    %3404 = vmatpush1.msra.mxu0 %v3327
    %3405 = vmatprep.subr.mxu0 %v3330
    %3406 = vmatpush1.msra.mxu0 %v3329
    %3407 = vmatprep.subr.mxu0 %v3332
    %3408 = vmatpush1.msra.mxu0 %v3331
    %3409 = vmatprep.subr.mxu0 %v3334
    %3410 = vmatpush1.msra.mxu0 %v3333
    %3411 = vmatprep.subr.mxu0 %v3336
    %3412 = vmatpush1.msra.mxu0 %v3335
    %3413 = vmatprep.subr.mxu0 %v3338
    %3414 = vmatpush1.msra.mxu0 %v3337
    %3415 = vmatprep.subr.mxu0 %v3340
    %3416 = vmatpush1.msra.mxu0 %v3339
    %3417 = vmatprep.subr.mxu0 %v3342
    %3418 = vmatpush1.msra.mxu0 %v3341
    %3419 = vmatprep.subr.mxu0 %v3344
    %3420 = vmatpush1.msra.mxu0 %v3343
    %3421 = vmatprep.subr.mxu0 %v3346
    %3422 = vmatpush1.msra.mxu0 %v3345
    %3423 = vmatprep.subr.mxu0 %v3348
    %3424 = vmatpush1.msra.mxu0 %v3347
    %3425 = vmatprep.subr.mxu0 %v3350
    %3426 = vmatpush1.msra.mxu0 %v3349
    %3427 = vmatprep.subr.mxu0 %v3352
    %3428 = vmatpush1.msra.mxu0 %v3351
    %3429 = vmatprep.subr.mxu0 %v3354
    %3430 = vmatpush1.msra.mxu0 %v3353
    %3431 = vmatprep.subr.mxu0 %v3356
    %3432 = vmatpush1.msra.mxu0 %v3355
    %3433 = vmatprep.subr.mxu0 %v3358
    %3434 = vmatpush1.msra.mxu0 %v3357
    %3435 = vmatprep.subr.mxu0 %v3360
    %3436 = vmatpush1.msra.mxu0 %v3359
    %3437 = vmatprep.subr.mxu0 %v3362
    %3438 = vmatpush1.msra.mxu0 %v3361
    %3439 = vmatprep.mubr.f32.mxu0 %v3298
    %3440 = vmatmul.mubr.f32.gmra.mrb[0].mxu0 %v3297
    %v3441 = vpop.f32.mrb[0].mxu0
    %v3442 = vadd.f32 %v3368, %v3441
    %v3443 = vpop.f32.mrb[0].mxu0
    %v3444 = vadd.f32 %v3372, %v3443
    %3445 = vdwg.mxu0
    %3446 = vadd.xlane.f32.xlu0 %v3442
    %v3447 = vpop.xlane.xlu0 %3446
    %v3448 = vmul.f32 %v3447, %v685
    %v3449 = vsub.f32 %v3442, %v3448
    %v3450 = vmul.f32 %v3449, %v3449
    %3451 = vadd.xlane.f32.xlu0 %v3450
    %v3452 = vpop.xlane.xlu0 %3451
    %v3453 = vmul.f32 %v3452, %v685
    %v3454 = vadd.f32 %v3453, 1e-05
    %v3455 = vrsqrt.pop %v3454
    %v3456 = vmul.f32 %v3449, %v3455
    %v3457 = vld [vmem:[#allocation43] sm:$0x1]
    %v3459 = vlaneseq
    %v3460 = vshrl.u32 %v3459, 7
    %v3461 = vsub.s32 0, %v3460
    %v3462 = vrot.slane %v3457, %v3461
    %v3464 = vmul.f32 %v3456, %v3462
    %v3465 = vld [vmem:[#allocation45] sm:$0x1]
    %v3467 = vlaneseq
    %v3468 = vshrl.u32 %v3467, 7
    %v3469 = vsub.s32 0, %v3468
    %v3470 = vrot.slane %v3465, %v3469
    %v3472 = vadd.f32 %v3464, %v3470
    %v3473 = vmul.f32 %v3472, 0.5
    %v3474 = vmul.f32 %v3472, 0.70710677
    %v3475 = verf.f32.pop %v3474
    %v3476 = vadd.f32 %v3475, 1.0
    %v3477 = vmul.f32 %v3473, %v3476
    %v3478 = vld [vmem:[#allocation46] sm:$0xff]
    %v3479 = vld [vmem:[#allocation46 + $0x8] sm:$0xff]
    %v3480 = vld [vmem:[#allocation46 + $0x10] sm:$0xff]
    %v3481 = vld [vmem:[#allocation46 + $0x18] sm:$0xff]
    %v3482 = vld [vmem:[#allocation46 + $0x20] sm:$0xff]
    %v3483 = vld [vmem:[#allocation46 + $0x28] sm:$0xff]
    %v3484 = vld [vmem:[#allocation46 + $0x30] sm:$0xff]
    %v3485 = vld [vmem:[#allocation46 + $0x38] sm:$0xff]
    %v3486 = vld [vmem:[#allocation46 + $0x40] sm:$0xff]
    %v3487 = vld [vmem:[#allocation46 + $0x48] sm:$0xff]
    %v3488 = vld [vmem:[#allocation46 + $0x50] sm:$0xff]
    %v3489 = vld [vmem:[#allocation46 + $0x58] sm:$0xff]
    %v3490 = vld [vmem:[#allocation46 + $0x60] sm:$0xff]
    %v3491 = vld [vmem:[#allocation46 + $0x68] sm:$0xff]
    %v3492 = vld [vmem:[#allocation46 + $0x70] sm:$0xff]
    %v3493 = vld [vmem:[#allocation46 + $0x78] sm:$0xff]
    %v3494 = vld [vmem:[#allocation48] sm:$0x1]
    %v3496 = vlaneseq
    %v3497 = vshrl.u32 %v3496, 7
    %v3498 = vsub.s32 0, %v3497
    %v3499 = vrot.slane %v3494, %v3498
    %3501 = vmatprep.subr.mxu0 0.0
    %3502 = vmatpush1.msra.mxu0 %v3478
    %3503 = vmatprep.subr.mxu0 0.0
    %3504 = vmatpush1.msra.mxu0 %v3479
    %3505 = vmatprep.subr.mxu0 0.0
    %3506 = vmatpush1.msra.mxu0 %v3480
    %3507 = vmatprep.subr.mxu0 0.0
    %3508 = vmatpush1.msra.mxu0 %v3481
    %3509 = vmatprep.subr.mxu0 0.0
    %3510 = vmatpush1.msra.mxu0 %v3482
    %3511 = vmatprep.subr.mxu0 0.0
    %3512 = vmatpush1.msra.mxu0 %v3483
    %3513 = vmatprep.subr.mxu0 0.0
    %3514 = vmatpush1.msra.mxu0 %v3484
    %3515 = vmatprep.subr.mxu0 0.0
    %3516 = vmatpush1.msra.mxu0 %v3485
    %3517 = vmatprep.subr.mxu0 0.0
    %3518 = vmatpush1.msra.mxu0 %v3486
    %3519 = vmatprep.subr.mxu0 0.0
    %3520 = vmatpush1.msra.mxu0 %v3487
    %3521 = vmatprep.subr.mxu0 0.0
    %3522 = vmatpush1.msra.mxu0 %v3488
    %3523 = vmatprep.subr.mxu0 0.0
    %3524 = vmatpush1.msra.mxu0 %v3489
    %3525 = vmatprep.subr.mxu0 0.0
    %3526 = vmatpush1.msra.mxu0 %v3490
    %3527 = vmatprep.subr.mxu0 0.0
    %3528 = vmatpush1.msra.mxu0 %v3491
    %3529 = vmatprep.subr.mxu0 0.0
    %3530 = vmatpush1.msra.mxu0 %v3492
    %3531 = vmatprep.subr.mxu0 0.0
    %3532 = vmatpush1.msra.mxu0 %v3493
    %3533 = vmatprep.subr.mxu0 0.0
    %3534 = vmatpush1.msra.mxu0 0.0
    %3535 = vmatprep.subr.mxu0 0.0
    %3536 = vmatpush1.msra.mxu0 0.0
    %3537 = vmatprep.subr.mxu0 0.0
    %3538 = vmatpush1.msra.mxu0 0.0
    %3539 = vmatprep.subr.mxu0 0.0
    %3540 = vmatpush1.msra.mxu0 0.0
    %3541 = vmatprep.subr.mxu0 0.0
    %3542 = vmatpush1.msra.mxu0 0.0
    %3543 = vmatprep.subr.mxu0 0.0
    %3544 = vmatpush1.msra.mxu0 0.0
    %3545 = vmatprep.subr.mxu0 0.0
    %3546 = vmatpush1.msra.mxu0 0.0
    %3547 = vmatprep.subr.mxu0 0.0
    %3548 = vmatpush1.msra.mxu0 0.0
    %3549 = vmatprep.subr.mxu0 0.0
    %3550 = vmatpush1.msra.mxu0 0.0
    %3551 = vmatprep.subr.mxu0 0.0
    %3552 = vmatpush1.msra.mxu0 0.0
    %3553 = vmatprep.subr.mxu0 0.0
    %3554 = vmatpush1.msra.mxu0 0.0
    %3555 = vmatprep.subr.mxu0 0.0
    %3556 = vmatpush1.msra.mxu0 0.0
    %3557 = vmatprep.subr.mxu0 0.0
    %3558 = vmatpush1.msra.mxu0 0.0
    %3559 = vmatprep.subr.mxu0 0.0
    %3560 = vmatpush1.msra.mxu0 0.0
    %3561 = vmatprep.subr.mxu0 0.0
    %3562 = vmatpush1.msra.mxu0 0.0
    %3563 = vmatprep.subr.mxu0 0.0
    %3564 = vmatpush1.msra.mxu0 0.0
    %3565 = vmatprep.mubr.f32.mxu0 0.0
    %3566 = vmatmul.mubr.f32.gmra.mrb[0].mxu0 %v3477
    %v3567 = vpop.f32.mrb[0].mxu0
    %v3568 = vadd.f32 %v3499, %v3567
    %v3569 = vpop.f32.mrb[0].mxu0
    %3570 = vdwg.mxu0
    %v3571 = vadd.f32 %v3568, %v3444
    %v3572 = vmul.f32 %v3571, 0.5
    %v3573 = vmul.f32 %v3571, 0.70710677
    %v3574 = verf.f32.pop %v3573
    %v3575 = vadd.f32 %v3574, 1.0
    %v3576 = vmul.f32 %v3572, %v3575
    %v3577 = vld [vmem:[#allocation49] sm:$0xff]
    %v3578 = vld [vmem:[#allocation49 + $0x8] sm:$0xff]
    %v3579 = vld [vmem:[#allocation49 + $0x10] sm:$0xff]
    %v3580 = vld [vmem:[#allocation49 + $0x18] sm:$0xff]
    %v3581 = vld [vmem:[#allocation49 + $0x20] sm:$0xff]
    %v3582 = vld [vmem:[#allocation49 + $0x28] sm:$0xff]
    %v3583 = vld [vmem:[#allocation49 + $0x30] sm:$0xff]
    %v3584 = vld [vmem:[#allocation49 + $0x38] sm:$0xff]
    %v3585 = vld [vmem:[#allocation49 + $0x40] sm:$0xff]
    %v3586 = vld [vmem:[#allocation49 + $0x48] sm:$0xff]
    %v3587 = vld [vmem:[#allocation49 + $0x50] sm:$0xff]
    %v3588 = vld [vmem:[#allocation49 + $0x58] sm:$0xff]
    %v3589 = vld [vmem:[#allocation49 + $0x60] sm:$0xff]
    %v3590 = vld [vmem:[#allocation49 + $0x68] sm:$0xff]
    %v3591 = vld [vmem:[#allocation49 + $0x70] sm:$0xff]
    %v3592 = vld [vmem:[#allocation49 + $0x78] sm:$0xff]
    %v3593 = vld [vmem:[#allocation51] sm:$0x1]
    %v3595 = vlaneseq
    %v3596 = vshrl.u32 %v3595, 7
    %v3597 = vsub.s32 0, %v3596
    %v3598 = vrot.slane %v3593, %v3597
    %3600 = vmatprep.subr.mxu0 0.0
    %3601 = vmatpush1.msra.mxu0 %v3577
    %3602 = vmatprep.subr.mxu0 0.0
    %3603 = vmatpush1.msra.mxu0 %v3578
    %3604 = vmatprep.subr.mxu0 0.0
    %3605 = vmatpush1.msra.mxu0 %v3579
    %3606 = vmatprep.subr.mxu0 0.0
    %3607 = vmatpush1.msra.mxu0 %v3580
    %3608 = vmatprep.subr.mxu0 0.0
    %3609 = vmatpush1.msra.mxu0 %v3581
    %3610 = vmatprep.subr.mxu0 0.0
    %3611 = vmatpush1.msra.mxu0 %v3582
    %3612 = vmatprep.subr.mxu0 0.0
    %3613 = vmatpush1.msra.mxu0 %v3583
    %3614 = vmatprep.subr.mxu0 0.0
    %3615 = vmatpush1.msra.mxu0 %v3584
    %3616 = vmatprep.subr.mxu0 0.0
    %3617 = vmatpush1.msra.mxu0 %v3585
    %3618 = vmatprep.subr.mxu0 0.0
    %3619 = vmatpush1.msra.mxu0 %v3586
    %3620 = vmatprep.subr.mxu0 0.0
    %3621 = vmatpush1.msra.mxu0 %v3587
    %3622 = vmatprep.subr.mxu0 0.0
    %3623 = vmatpush1.msra.mxu0 %v3588
    %3624 = vmatprep.subr.mxu0 0.0
    %3625 = vmatpush1.msra.mxu0 %v3589
    %3626 = vmatprep.subr.mxu0 0.0
    %3627 = vmatpush1.msra.mxu0 %v3590
    %3628 = vmatprep.subr.mxu0 0.0
    %3629 = vmatpush1.msra.mxu0 %v3591
    %3630 = vmatprep.subr.mxu0 0.0
    %3631 = vmatpush1.msra.mxu0 %v3592
    %3632 = vmatprep.subr.mxu0 0.0
    %3633 = vmatpush1.msra.mxu0 0.0
    %3634 = vmatprep.subr.mxu0 0.0
    %3635 = vmatpush1.msra.mxu0 0.0
    %3636 = vmatprep.subr.mxu0 0.0
    %3637 = vmatpush1.msra.mxu0 0.0
    %3638 = vmatprep.subr.mxu0 0.0
    %3639 = vmatpush1.msra.mxu0 0.0
    %3640 = vmatprep.subr.mxu0 0.0
    %3641 = vmatpush1.msra.mxu0 0.0
    %3642 = vmatprep.subr.mxu0 0.0
    %3643 = vmatpush1.msra.mxu0 0.0
    %3644 = vmatprep.subr.mxu0 0.0
    %3645 = vmatpush1.msra.mxu0 0.0
    %3646 = vmatprep.subr.mxu0 0.0
    %3647 = vmatpush1.msra.mxu0 0.0
    %3648 = vmatprep.subr.mxu0 0.0
    %3649 = vmatpush1.msra.mxu0 0.0
    %3650 = vmatprep.subr.mxu0 0.0
    %3651 = vmatpush1.msra.mxu0 0.0
    %3652 = vmatprep.subr.mxu0 0.0
    %3653 = vmatpush1.msra.mxu0 0.0
    %3654 = vmatprep.subr.mxu0 0.0
    %3655 = vmatpush1.msra.mxu0 0.0
    %3656 = vmatprep.subr.mxu0 0.0
    %3657 = vmatpush1.msra.mxu0 0.0
    %3658 = vmatprep.subr.mxu0 0.0
    %3659 = vmatpush1.msra.mxu0 0.0
    %3660 = vmatprep.subr.mxu0 0.0
    %3661 = vmatpush1.msra.mxu0 0.0
    %3662 = vmatprep.subr.mxu0 0.0
    %3663 = vmatpush1.msra.mxu0 0.0
    %3664 = vmatprep.mubr.f32.mxu0 0.0
    %3665 = vmatmul.mubr.f32.gmra.mrb[0].mxu0 %v3576
    %v3666 = vpop.f32.mrb[0].mxu0
    %v3667 = vadd.f32 %v3598, %v3666
    %v3668 = vpop.f32.mrb[0].mxu0
    %3669 = vdwg.mxu0
    %vm3670 = vcmask 523264
    %v3671 = vsel %vm3670, %v3667, 0.0
    %3672 = vadd.xlane.f32.xlu0 %v3671
    %v3673 = vpop.xlane.xlu0 %3672
    %v3674 = vrcp.pop 64.0
    %v3675 = vmul.f32 %v3673, %v3674
    %v3676 = vsub.f32 %v3667, %v3675
    %v3677 = vmul.f32 %v3676, %v3676
    %v3678 = vsel %vm3670, %v3677, 0.0
    %3679 = vadd.xlane.f32.xlu0 %v3678
    %v3680 = vpop.xlane.xlu0 %3679
    %v3681 = vmul.f32 %v3680, %v3674
    %v3682 = vadd.f32 %v3681, 1e-05
    %v3683 = vrsqrt.pop %v3682
    %v3684 = vmul.f32 %v3676, %v3683
    %v3685 = vld [vmem:[#allocation52] sm:$0x1]
    %v3687 = vlaneseq
    %v3688 = vshrl.u32 %v3687, 7
    %v3689 = vsub.s32 0, %v3688
    %v3690 = vrot.slane %v3685, %v3689
    %v3692 = vmul.f32 %v3684, %v3690
    %v3693 = vld [vmem:[#allocation54] sm:$0x1]
    %v3695 = vlaneseq
    %v3696 = vshrl.u32 %v3695, 7
    %v3697 = vsub.s32 0, %v3696
    %v3698 = vrot.slane %v3693, %v3697
    %v3700 = vadd.f32 %v3692, %v3698
    %v3701 = vmul.f32 %v3700, 0.5
    %v3702 = vmul.f32 %v3700, 0.70710677
    %v3703 = verf.f32.pop %v3702
    %v3704 = vadd.f32 %v3703, 1.0
    %v3705 = vmul.f32 %v3701, %v3704
    %v3706 = vld [vmem:[%s71] sm:$0xff]
    %v3707 = vld [vmem:[%s71 + $0x8] sm:$0xff]
    %v3708 = vld [vmem:[%s71 + $0x10] sm:$0xff]
    %v3709 = vld [vmem:[%s71 + $0x18] sm:$0xff]
    %v3710 = vld [vmem:[%s71 + $0x20] sm:$0xff]
    %v3711 = vld [vmem:[%s71 + $0x28] sm:$0xff]
    %v3712 = vld [vmem:[%s71 + $0x30] sm:$0xff]
    %v3713 = vld [vmem:[%s71 + $0x38] sm:$0xff]
    %v3714 = vld [vmem:[%s73] sm:$0x1]
    %v3716 = vlaneseq
    %v3717 = vshrl.u32 %v3716, 7
    %v3718 = vsub.s32 0, %v3717
    %v3719 = vrot.slane %v3714, %v3718
    %v3722 = vsel %vm3670, %v3705, 0
    %3724 = vmatprep.subr.mxu0 0.0
    %3725 = vmatpush1.msra.mxu0 %v3706
    %3726 = vmatprep.subr.mxu0 0.0
    %3727 = vmatpush1.msra.mxu0 %v3707
    %3728 = vmatprep.subr.mxu0 0.0
    %3729 = vmatpush1.msra.mxu0 %v3708
    %3730 = vmatprep.subr.mxu0 0.0
    %3731 = vmatpush1.msra.mxu0 %v3709
    %3732 = vmatprep.subr.mxu0 0.0
    %3733 = vmatpush1.msra.mxu0 %v3710
    %3734 = vmatprep.subr.mxu0 0.0
    %3735 = vmatpush1.msra.mxu0 %v3711
    %3736 = vmatprep.subr.mxu0 0.0
    %3737 = vmatpush1.msra.mxu0 %v3712
    %3738 = vmatprep.subr.mxu0 0.0
    %3739 = vmatpush1.msra.mxu0 %v3713
    %3740 = vmatprep.subr.mxu0 0.0
    %3741 = vmatpush1.msra.mxu0 0.0
    %3742 = vmatprep.subr.mxu0 0.0
    %3743 = vmatpush1.msra.mxu0 0.0
    %3744 = vmatprep.subr.mxu0 0.0
    %3745 = vmatpush1.msra.mxu0 0.0
    %3746 = vmatprep.subr.mxu0 0.0
    %3747 = vmatpush1.msra.mxu0 0.0
    %3748 = vmatprep.subr.mxu0 0.0
    %3749 = vmatpush1.msra.mxu0 0.0
    %3750 = vmatprep.subr.mxu0 0.0
    %3751 = vmatpush1.msra.mxu0 0.0
    %3752 = vmatprep.subr.mxu0 0.0
    %3753 = vmatpush1.msra.mxu0 0.0
    %3754 = vmatprep.subr.mxu0 0.0
    %3755 = vmatpush1.msra.mxu0 0.0
    %3756 = vmatprep.subr.mxu0 0.0
    %3757 = vmatpush1.msra.mxu0 0.0
    %3758 = vmatprep.subr.mxu0 0.0
    %3759 = vmatpush1.msra.mxu0 0.0
    %3760 = vmatprep.subr.mxu0 0.0
    %3761 = vmatpush1.msra.mxu0 0.0
    %3762 = vmatprep.subr.mxu0 0.0
    %3763 = vmatpush1.msra.mxu0 0.0
    %3764 = vmatprep.subr.mxu0 0.0
    %3765 = vmatpush1.msra.mxu0 0.0
    %3766 = vmatprep.subr.mxu0 0.0
    %3767 = vmatpush1.msra.mxu0 0.0
    %3768 = vmatprep.subr.mxu0 0.0
    %3769 = vmatpush1.msra.mxu0 0.0
    %3770 = vmatprep.subr.mxu0 0.0
    %3771 = vmatpush1.msra.mxu0 0.0
    %3772 = vmatprep.subr.mxu0 0.0
    %3773 = vmatpush1.msra.mxu0 0.0
    %3774 = vmatprep.subr.mxu0 0.0
    %3775 = vmatpush1.msra.mxu0 0.0
    %3776 = vmatprep.subr.mxu0 0.0
    %3777 = vmatpush1.msra.mxu0 0.0
    %3778 = vmatprep.subr.mxu0 0.0
    %3779 = vmatpush1.msra.mxu0 0.0
    %3780 = vmatprep.subr.mxu0 0.0
    %3781 = vmatpush1.msra.mxu0 0.0
    %3782 = vmatprep.subr.mxu0 0.0
    %3783 = vmatpush1.msra.mxu0 0.0
    %3784 = vmatprep.subr.mxu0 0.0
    %3785 = vmatpush1.msra.mxu0 0.0
    %3786 = vmatprep.subr.mxu0 0.0
    %3787 = vmatpush1.msra.mxu0 0.0
    %3788 = vmatprep.mubr.f32.mxu0 0.0
    %3789 = vmatmul.mubr.f32.gmra.mrb[0].mxu0 %v3722
    %v3790 = vpop.f32.mrb[0].mxu0
    %v3791 = vadd.f32 %v3719, %v3790
    %v3792 = vpop.f32.mrb[0].mxu0
    %3793 = vdwg.mxu0
    %3795 = vrot.lane.b32.xlu0 %v3667, 64
    %v3796 = vpop.permute.xlu0 %3795
    %v3798 = vadd.f32 %v3791, %v3796
    %v3799 = vmul.f32 %v3798, 0.5
    %v3800 = vmul.f32 %v3798, 0.70710677
    %v3801 = verf.f32.pop %v3800
    %v3802 = vadd.f32 %v3801, 1.0
    %v3803 = vmul.f32 %v3799, %v3802
    %v3804 = vld [vmem:[%s75] sm:$0xff]
    %v3805 = vld [vmem:[%s75 + $0x8] sm:$0xff]
    %v3806 = vld [vmem:[%s75 + $0x10] sm:$0xff]
    %v3807 = vld [vmem:[%s75 + $0x18] sm:$0xff]
    %v3808 = vld [vmem:[%s75 + $0x20] sm:$0xff]
    %v3809 = vld [vmem:[%s75 + $0x28] sm:$0xff]
    %v3810 = vld [vmem:[%s75 + $0x30] sm:$0xff]
    %v3811 = vld [vmem:[%s75 + $0x38] sm:$0xff]
    %v3812 = vld [vmem:[%s77] sm:$0x1]
    %v3814 = vlaneseq
    %v3815 = vshrl.u32 %v3814, 7
    %v3816 = vsub.s32 0, %v3815
    %v3817 = vrot.slane %v3812, %v3816
    %v3820 = vsel %vm3670, %v3803, 0
    %3822 = vmatprep.subr.mxu0 0.0
    %3823 = vmatpush1.msra.mxu0 %v3804
    %3824 = vmatprep.subr.mxu0 0.0
    %3825 = vmatpush1.msra.mxu0 %v3805
    %3826 = vmatprep.subr.mxu0 0.0
    %3827 = vmatpush1.msra.mxu0 %v3806
    %3828 = vmatprep.subr.mxu0 0.0
    %3829 = vmatpush1.msra.mxu0 %v3807
    %3830 = vmatprep.subr.mxu0 0.0
    %3831 = vmatpush1.msra.mxu0 %v3808
    %3832 = vmatprep.subr.mxu0 0.0
    %3833 = vmatpush1.msra.mxu0 %v3809
    %3834 = vmatprep.subr.mxu0 0.0
    %3835 = vmatpush1.msra.mxu0 %v3810
    %3836 = vmatprep.subr.mxu0 0.0
    %3837 = vmatpush1.msra.mxu0 %v3811
    %3838 = vmatprep.subr.mxu0 0.0
    %3839 = vmatpush1.msra.mxu0 0.0
    %3840 = vmatprep.subr.mxu0 0.0
    %3841 = vmatpush1.msra.mxu0 0.0
    %3842 = vmatprep.subr.mxu0 0.0
    %3843 = vmatpush1.msra.mxu0 0.0
    %3844 = vmatprep.subr.mxu0 0.0
    %3845 = vmatpush1.msra.mxu0 0.0
    %3846 = vmatprep.subr.mxu0 0.0
    %3847 = vmatpush1.msra.mxu0 0.0
    %3848 = vmatprep.subr.mxu0 0.0
    %3849 = vmatpush1.msra.mxu0 0.0
    %3850 = vmatprep.subr.mxu0 0.0
    %3851 = vmatpush1.msra.mxu0 0.0
    %3852 = vmatprep.subr.mxu0 0.0
    %3853 = vmatpush1.msra.mxu0 0.0
    %3854 = vmatprep.subr.mxu0 0.0
    %3855 = vmatpush1.msra.mxu0 0.0
    %3856 = vmatprep.subr.mxu0 0.0
    %3857 = vmatpush1.msra.mxu0 0.0
    %3858 = vmatprep.subr.mxu0 0.0
    %3859 = vmatpush1.msra.mxu0 0.0
    %3860 = vmatprep.subr.mxu0 0.0
    %3861 = vmatpush1.msra.mxu0 0.0
    %3862 = vmatprep.subr.mxu0 0.0
    %3863 = vmatpush1.msra.mxu0 0.0
    %3864 = vmatprep.subr.mxu0 0.0
    %3865 = vmatpush1.msra.mxu0 0.0
    %3866 = vmatprep.subr.mxu0 0.0
    %3867 = vmatpush1.msra.mxu0 0.0
    %3868 = vmatprep.subr.mxu0 0.0
    %3869 = vmatpush1.msra.mxu0 0.0
    %3870 = vmatprep.subr.mxu0 0.0
    %3871 = vmatpush1.msra.mxu0 0.0
    %3872 = vmatprep.subr.mxu0 0.0
    %3873 = vmatpush1.msra.mxu0 0.0
    %3874 = vmatprep.subr.mxu0 0.0
    %3875 = vmatpush1.msra.mxu0 0.0
    %3876 = vmatprep.subr.mxu0 0.0
    %3877 = vmatpush1.msra.mxu0 0.0
    %3878 = vmatprep.subr.mxu0 0.0
    %3879 = vmatpush1.msra.mxu0 0.0
    %3880 = vmatprep.subr.mxu0 0.0
    %3881 = vmatpush1.msra.mxu0 0.0
    %3882 = vmatprep.subr.mxu0 0.0
    %3883 = vmatpush1.msra.mxu0 0.0
    %3884 = vmatprep.subr.mxu0 0.0
    %3885 = vmatpush1.msra.mxu0 0.0
    %3886 = vmatprep.mubr.f32.mxu0 0.0
    %3887 = vmatmul.mubr.f32.gmra.mrb[0].mxu0 %v3820
    %v3888 = vpop.f32.mrb[0].mxu0
    %v3889 = vadd.f32 %v3817, %v3888
    %v3890 = vpop.f32.mrb[0].mxu0
    %3891 = vdwg.mxu0
    %3892 = vst [vmem:[%s79] sm:$0xff] %v3889
    // Predicated region
    $region298: #{neural_network_forward.1} parent=1 // pred_check
      _
    $region299: #{neural_network_forward.1} parent=1 // pred_check_branch
      %3894 = sbr.rel (0) target = $region301
    $region300: #{neural_network_forward.1} parent=1 // pred_region
      _
    $region301: #{neural_network_forward.1} parent=1 // pred_fallthru
      _
    // Predicated region
    $region302: #{neural_network_forward.1} parent=1 // pred_check
      _
    $region303: #{neural_network_forward.1} parent=1 // pred_check_branch
      %3896 = sbr.rel (0) target = $region305
    $region304: #{neural_network_forward.1} parent=1 // pred_region
      _
    $region305: #{neural_network_forward.1} parent=1 // pred_fallthru
      _
    %3897 = vsyncpa [#allocation3], 1
    %3898 = vsyncpa [#allocation5], 1
    %3899 = vsyncpa [#allocation8], 1
    %3900 = vsyncpa [#allocation11], 1
    %3901 = vsyncpa [#allocation14], 1
    %3902 = vsyncpa [#allocation17], 1
    %3903 = vsyncpa [#allocation20], 1
    %3904 = vsyncpa [#allocation23], 1
    %3905 = vsyncpa [#allocation26], 1
    %3906 = vsyncpa [#allocation29], 1
    %3907 = vsyncpa [#allocation32], 1
    %3908 = vsyncpa [#allocation35], 1
    %3909 = vsyncpa [#allocation38], 1
    %3910 = vsyncpa [#allocation41], 1
    %3911 = vsyncpa [#allocation44], 1
    %3912 = vsyncpa [#allocation47], 1
    %3913 = vsyncpa [#allocation50], 1
    %3914 = vsyncpa [#allocation53], 1

</llo_original>
